<compile_context>
chip_gen: v7x
topology: tpu7x:2x2x1
jax: 0.10.0
libtpu: 0.0.40
codegen_flags: <defaults>
</compile_context>

<pallas_src>
import jax
import jax.numpy as jnp
import numpy as np
from jax import lax
from jax.experimental import pallas as pl
from jax.experimental.pallas import tpu as pltpu  # noqa: F401  (TPU backend assumed)


# ----------------------------------------------------------------------------
# Pallas kernels
# ----------------------------------------------------------------------------
def _proj_first_kernel(x_ref, w_ref, b_ref, of_ref, ob_ref):
    """Layer-0 input projection for both directions. x: (S*B, E), w: (2, E, H), b: (2, 1, H)."""
    x = x_ref[...]
    of_ref[...] = (jnp.dot(x, w_ref[0], preferred_element_type=jnp.float32) + b_ref[0]
                   ).astype(of_ref.dtype)
    ob_ref[...] = (jnp.dot(x, w_ref[1], preferred_element_type=jnp.float32) + b_ref[1]
                   ).astype(ob_ref.dtype)


def _proj_hidden_kernel(xf_ref, xb_ref, w_ref, b_ref, of_ref, ob_ref):
    """Layer-l>0 input projection without materializing concat(out_f, out_b).

    xf, xb: (S*B, H); w: (4, H, H) = [fwd<-outf, fwd<-outb, bwd<-outf, bwd<-outb]; b: (2, 1, H).
    """
    xf = xf_ref[...]
    xb = xb_ref[...]
    of_ref[...] = (jnp.dot(xf, w_ref[0], preferred_element_type=jnp.float32)
                   + jnp.dot(xb, w_ref[1], preferred_element_type=jnp.float32)
                   + b_ref[0]).astype(of_ref.dtype)
    ob_ref[...] = (jnp.dot(xf, w_ref[2], preferred_element_type=jnp.float32)
                   + jnp.dot(xb, w_ref[3], preferred_element_type=jnp.float32)
                   + b_ref[1]).astype(ob_ref.dtype)


def _birnn_seq_kernel(xpf_ref, xpb_ref, whh_ref, outf_ref, outb_ref):
    """Both directions of one RNN layer in a single call (time loop unrolled in-kernel).

    xpf/xpb: (S, B, H) precomputed x@W_ih+b per direction; whh: (2, H, H).
    Backward direction is iterated in reverse time order inside the kernel.
    """
    S = xpf_ref.shape[0]
    whh_f = whh_ref[0]
    whh_b = whh_ref[1]
    # t == 0 step: h_prev == 0, so tanh(xp) exactly (skips two zero matmuls).
    hf = jnp.tanh(xpf_ref[0])
    hb = jnp.tanh(xpb_ref[S - 1])
    outf_ref[0] = hf
    outb_ref[S - 1] = hb
    for t in range(1, S):                      # static, fully unrolled at trace time
        tb = S - 1 - t
        hf = jnp.tanh(xpf_ref[t] + jnp.dot(hf, whh_f, preferred_element_type=jnp.float32))
        hb = jnp.tanh(xpb_ref[tb] + jnp.dot(hb, whh_b, preferred_element_type=jnp.float32))
        outf_ref[t] = hf
        outb_ref[tb] = hb


def _birnn_head_kernel(xpf_ref, xpb_ref, whh_ref, wlin_ref, blin_ref, out_ref):
    """Last layer: recurrence for both directions + fused Linear head on the final states.

    Only the final hidden states are needed (PyTorch uses hidden[-2], hidden[-1]), so the
    per-timestep outputs of the last layer are never stored.
    wlin: (2, H, O); blin: (1, O); out: (B, O).
    """
    S = xpf_ref.shape[0]
    whh_f = whh_ref[0]
    whh_b = whh_ref[1]
    hf = jnp.tanh(xpf_ref[0])
    hb = jnp.tanh(xpb_ref[S - 1])
    for t in range(1, S):
        tb = S - 1 - t
        hf = jnp.tanh(xpf_ref[t] + jnp.dot(hf, whh_f, preferred_element_type=jnp.float32))
        hb = jnp.tanh(xpb_ref[tb] + jnp.dot(hb, whh_b, preferred_element_type=jnp.float32))
    out_ref[...] = (jnp.dot(hf, wlin_ref[0], preferred_element_type=jnp.float32)
                    + jnp.dot(hb, wlin_ref[1], preferred_element_type=jnp.float32)
                    + blin_ref[...]).astype(out_ref.dtype)


# ----------------------------------------------------------------------------
# Wrappers (no grid: every array is a single VMEM-resident block)
# ----------------------------------------------------------------------------
def proj_first(x2, w, b):
    sb = x2.shape[0]
    hidden = w.shape[2]
    return pl.pallas_call(
        _proj_first_kernel,
        out_shape=(jax.ShapeDtypeStruct((sb, hidden), jnp.float32),
                   jax.ShapeDtypeStruct((sb, hidden), jnp.float32)),
    )(x2, w, b)


def proj_hidden(xf2, xb2, w, b):
    sb = xf2.shape[0]
    hidden = w.shape[-1]
    w4 = w.reshape(4, hidden, hidden)          # free leading-dim reshape
    return pl.pallas_call(
        _proj_hidden_kernel,
        out_shape=(jax.ShapeDtypeStruct((sb, hidden), jnp.float32),
                   jax.ShapeDtypeStruct((sb, hidden), jnp.float32)),
    )(xf2, xb2, w4, b)


def birnn_seq(xpf, xpb, whh):
    S, B, H = xpf.shape
    return pl.pallas_call(
        _birnn_seq_kernel,
        out_shape=(jax.ShapeDtypeStruct((S, B, H), jnp.float32),
                   jax.ShapeDtypeStruct((S, B, H), jnp.float32)),
    )(xpf, xpb, whh)


def birnn_head(xpf, xpb, whh, wlin, blin):
    _, B, _ = xpf.shape
    out_dim = wlin.shape[2]
    return pl.pallas_call(
        _birnn_head_kernel,
        out_shape=jax.ShapeDtypeStruct((B, out_dim), jnp.float32),
    )(xpf, xpb, whh, wlin, blin)


# ----------------------------------------------------------------------------
# Model (forward pass of the PyTorch RNN module, eval mode)
# ----------------------------------------------------------------------------
def init_params(key, input_dim, embedding_dim, hidden_dim, output_dim, n_layers):
    ks = iter(jax.random.split(key, 3 + 4 * n_layers))
    scale = 1.0 / np.sqrt(hidden_dim)

    def uni(k, shape):
        return jax.random.uniform(k, shape, jnp.float32, -scale, scale)

    params = {"embedding": jax.random.normal(next(ks), (input_dim, embedding_dim), jnp.float32)}
    layers = []
    for layer in range(n_layers):
        if layer == 0:
            w_ih = uni(next(ks), (2, embedding_dim, hidden_dim))          # (dir, E, H)
        else:
            # (dir, part, H, H): part 0 multiplies out_f of the previous layer, part 1 out_b.
            w_ih = uni(next(ks), (2, 2, hidden_dim, hidden_dim))
        w_hh = uni(next(ks), (2, hidden_dim, hidden_dim))                 # (dir, H, H)
        b_ih = uni(next(ks), (2, 1, hidden_dim))
        b_hh = uni(next(ks), (2, 1, hidden_dim))
        layers.append({"w_ih": w_ih, "w_hh": w_hh, "b": b_ih + b_hh})     # combined bias: exact
    params["layers"] = layers
    params["head_w"] = uni(next(ks), (2, hidden_dim, output_dim))         # (dir, H, O)
    params["head_b"] = uni(next(ks), (1, output_dim))
    return params


@jax.jit
def rnn_forward(params, text):
    S, B = text.shape
    emb = jnp.take(params["embedding"], text, axis=0)                     # (S, B, E) gather (glue)
    E = emb.shape[-1]
    # TODO(synk): dropout is treated as eval-mode identity (no stochastic masking in-kernel).
    layers = params["layers"]
    n_layers = len(layers)
    H = layers[0]["w_hh"].shape[-1]

    logits = None
    xf2 = xb2 = None
    for li, layer in enumerate(layers):
        # Hoisted input projection: one big matmul over all seq*batch rows per direction.
        if li == 0:
            pf2, pb2 = proj_first(emb.reshape(S * B, E), layer["w_ih"], layer["b"])
        else:
            pf2, pb2 = proj_hidden(xf2, xb2, layer["w_ih"], layer["b"])
        xpf = pf2.reshape(S, B, H)
        xpb = pb2.reshape(S, B, H)

        if li == n_layers - 1:
            # Recurrence + fused linear head; last-layer sequence outputs are never stored.
            logits = birnn_head(xpf, xpb, layer["w_hh"], params["head_w"], params["head_b"])
        else:
            out_f, out_b = birnn_seq(xpf, xpb, layer["w_hh"])
            xf2 = out_f.reshape(S * B, H)
            xb2 = out_b.reshape(S * B, H)
    return logits


# Pure-JAX reference for a sanity check
def rnn_forward_ref(params, text):
    x = jnp.take(params["embedding"], text, axis=0)

    def run_dir(x, w_ih, w_hh, b):
        def step(h, x_t):
            h = jnp.tanh(x_t @ w_ih + h @ w_hh + b)
            return h, h
        h0 = jnp.zeros((x.shape[1], w_hh.shape[0]), jnp.float32)
        h_last, outs = lax.scan(step, h0, x)
        return outs, h_last

    h_f = h_b = None
    for li, layer in enumerate(params["layers"]):
        if li == 0:
            wih_f, wih_b = layer["w_ih"][0], layer["w_ih"][1]
        else:
            wih_f = jnp.concatenate([layer["w_ih"][0, 0], layer["w_ih"][0, 1]], axis=0)
            wih_b = jnp.concatenate([layer["w_ih"][1, 0], layer["w_ih"][1, 1]], axis=0)
        whh_f, whh_b = layer["w_hh"][0], layer["w_hh"][1]
        b_f, b_b = layer["b"][0], layer["b"][1]
        out_f, h_f = run_dir(x, wih_f, whh_f, b_f)
        out_b_rev, h_b = run_dir(x[::-1], wih_b, whh_b, b_b)
        x = jnp.concatenate([out_f, out_b_rev[::-1]], axis=-1)
    hidden_cat = jnp.concatenate([h_f, h_b], axis=1)
    lin_w = jnp.concatenate([params["head_w"][0], params["head_w"][1]], axis=0)
    return hidden_cat @ lin_w + params["head_b"]


# ----------------------------------------------------------------------------
if __name__ == "__main__":
    # vocab=50, emb=16, hidden=32, out=4, layers=2, bidirectional, seq=8, batch=2
    input_dim, embedding_dim, hidden_dim, output_dim, n_layers = 50, 16, 32, 4, 2
    seq_len, batch = 8, 2

    key = jax.random.PRNGKey(0)
    k_param, k_text = jax.random.split(key)
    params = init_params(k_param, input_dim, embedding_dim, hidden_dim, output_dim, n_layers)
    text = jax.random.randint(k_text, (seq_len, batch), 0, input_dim, dtype=jnp.int32)

    out = rnn_forward(params, text)
    jax.block_until_ready(out)

    ref = rnn_forward_ref(params, text)
    np.testing.assert_allclose(np.asarray(out), np.asarray(ref), rtol=1e-4, atol=1e-4)

    print("KERNEL_OK")
</pallas_src>

<mosaic_0001>
module attributes {stable_mosaic.version = 11 : i64} {
  func.func @_proj_first_kernel(%arg0: memref<16x16xf32, #tpu.memory_space<vmem>>, %arg1: memref<2x16x32xf32, #tpu.memory_space<vmem>>, %arg2: memref<2x1x32xf32, #tpu.memory_space<vmem>>, %arg3: memref<16x32xf32, #tpu.memory_space<vmem>>, %arg4: memref<16x32xf32, #tpu.memory_space<vmem>>) attributes {dimension_semantics = [], scalar_prefetch = 0 : i64, scratch_operands = 0 : i64, tpu.core_type = #tpu.core_type<tc>} {
    %c0 = arith.constant 0 : index
    %c0_0 = arith.constant 0 : index
    %0 = vector.load %arg0[%c0, %c0_0] : memref<16x16xf32, #tpu.memory_space<vmem>>, vector<16x16xf32>
    %c0_1 = arith.constant 0 : index
    %c0_2 = arith.constant 0 : index
    %c0_3 = arith.constant 0 : index
    %1 = vector.load %arg1[%c0_1, %c0_2, %c0_3] : memref<2x16x32xf32, #tpu.memory_space<vmem>>, vector<1x16x32xf32>
    %2 = vector.shape_cast %1 : vector<1x16x32xf32> to vector<16x32xf32>
    %cst = arith.constant dense<0.000000e+00> : vector<16x32xf32>
    %3 = tpu.matmul %0, %2, %cst {dimension_numbers = #tpu.dot_dimension_numbers<[1], [0], [0], [1], [0, 0, 1, 1], [], []>} : vector<16x16xf32>, vector<16x32xf32>, vector<16x32xf32> -> vector<16x32xf32>
    %c0_4 = arith.constant 0 : index
    %c0_5 = arith.constant 0 : index
    %c0_6 = arith.constant 0 : index
    %4 = vector.load %arg2[%c0_4, %c0_5, %c0_6] : memref<2x1x32xf32, #tpu.memory_space<vmem>>, vector<1x1x32xf32>
    %5 = vector.shape_cast %4 : vector<1x1x32xf32> to vector<1x32xf32>
    %6 = vector.broadcast %5 : vector<1x32xf32> to vector<16x32xf32>
    %7 = arith.addf %3, %6 : vector<16x32xf32>
    %c0_7 = arith.constant 0 : index
    %c0_8 = arith.constant 0 : index
    %8 = vector.load %arg3[%c0_7, %c0_8] : memref<16x32xf32, #tpu.memory_space<vmem>>, vector<16x32xf32>
    tpu.vector_store %arg3[%c0_7, %c0_8], %7 {strides = array<i32>} : memref<16x32xf32, #tpu.memory_space<vmem>>, vector<16x32xf32>,
    %c1 = arith.constant 1 : index
    %c0_9 = arith.constant 0 : index
    %c0_10 = arith.constant 0 : index
    %9 = vector.load %arg1[%c1, %c0_9, %c0_10] : memref<2x16x32xf32, #tpu.memory_space<vmem>>, vector<1x16x32xf32>
    %10 = vector.shape_cast %9 : vector<1x16x32xf32> to vector<16x32xf32>
    %cst_11 = arith.constant dense<0.000000e+00> : vector<16x32xf32>
    %11 = tpu.matmul %0, %10, %cst_11 {dimension_numbers = #tpu.dot_dimension_numbers<[1], [0], [0], [1], [0, 0, 1, 1], [], []>} : vector<16x16xf32>, vector<16x32xf32>, vector<16x32xf32> -> vector<16x32xf32>
    %c1_12 = arith.constant 1 : index
    %c0_13 = arith.constant 0 : index
    %c0_14 = arith.constant 0 : index
    %12 = vector.load %arg2[%c1_12, %c0_13, %c0_14] : memref<2x1x32xf32, #tpu.memory_space<vmem>>, vector<1x1x32xf32>
    %13 = vector.shape_cast %12 : vector<1x1x32xf32> to vector<1x32xf32>
    %14 = vector.broadcast %13 : vector<1x32xf32> to vector<16x32xf32>
    %15 = arith.addf %11, %14 : vector<16x32xf32>
    %c0_15 = arith.constant 0 : index
    %c0_16 = arith.constant 0 : index
    %16 = vector.load %arg4[%c0_15, %c0_16] : memref<16x32xf32, #tpu.memory_space<vmem>>, vector<16x32xf32>
    tpu.vector_store %arg4[%c0_15, %c0_16], %15 {strides = array<i32>} : memref<16x32xf32, #tpu.memory_space<vmem>>, vector<16x32xf32>,
    return
  }
}

module attributes {stable_mosaic.version = 11 : i64} {
  func.func @_birnn_seq_kernel(%arg0: memref<8x2x32xf32, #tpu.memory_space<vmem>>, %arg1: memref<8x2x32xf32, #tpu.memory_space<vmem>>, %arg2: memref<2x32x32xf32, #tpu.memory_space<vmem>>, %arg3: memref<8x2x32xf32, #tpu.memory_space<vmem>>, %arg4: memref<8x2x32xf32, #tpu.memory_space<vmem>>) attributes {dimension_semantics = [], scalar_prefetch = 0 : i64, scratch_operands = 0 : i64, tpu.core_type = #tpu.core_type<tc>} {
    %c0 = arith.constant 0 : index
    %c0_0 = arith.constant 0 : index
    %c0_1 = arith.constant 0 : index
    %0 = vector.load %arg2[%c0, %c0_0, %c0_1] : memref<2x32x32xf32, #tpu.memory_space<vmem>>, vector<1x32x32xf32>
    %1 = vector.shape_cast %0 : vector<1x32x32xf32> to vector<32x32xf32>
    %c1 = arith.constant 1 : index
    %c0_2 = arith.constant 0 : index
    %c0_3 = arith.constant 0 : index
    %2 = vector.load %arg2[%c1, %c0_2, %c0_3] : memref<2x32x32xf32, #tpu.memory_space<vmem>>, vector<1x32x32xf32>
    %3 = vector.shape_cast %2 : vector<1x32x32xf32> to vector<32x32xf32>
    %c0_4 = arith.constant 0 : index
    %c0_5 = arith.constant 0 : index
    %c0_6 = arith.constant 0 : index
    %4 = vector.load %arg0[%c0_4, %c0_5, %c0_6] : memref<8x2x32xf32, #tpu.memory_space<vmem>>, vector<1x2x32xf32>
    %5 = vector.shape_cast %4 : vector<1x2x32xf32> to vector<2x32xf32>
    %6 = math.tanh %5 : vector<2x32xf32>
    %c7 = arith.constant 7 : index
    %c0_7 = arith.constant 0 : index
    %c0_8 = arith.constant 0 : index
    %7 = vector.load %arg1[%c7, %c0_7, %c0_8] : memref<8x2x32xf32, #tpu.memory_space<vmem>>, vector<1x2x32xf32>
    %8 = vector.shape_cast %7 : vector<1x2x32xf32> to vector<2x32xf32>
    %9 = math.tanh %8 : vector<2x32xf32>
    %c0_9 = arith.constant 0 : index
    %c0_10 = arith.constant 0 : index
    %c0_11 = arith.constant 0 : index
    %10 = vector.load %arg3[%c0_9, %c0_10, %c0_11] : memref<8x2x32xf32, #tpu.memory_space<vmem>>, vector<1x2x32xf32>
    %11 = vector.shape_cast %10 : vector<1x2x32xf32> to vector<2x32xf32>
    %12 = vector.shape_cast %6 : vector<2x32xf32> to vector<1x2x32xf32>
    tpu.vector_store %arg3[%c0_9, %c0_10, %c0_11], %12 {strides = array<i32>} : memref<8x2x32xf32, #tpu.memory_space<vmem>>, vector<1x2x32xf32>,
    %c7_12 = arith.constant 7 : index
    %c0_13 = arith.constant 0 : index
    %c0_14 = arith.constant 0 : index
    %13 = vector.load %arg4[%c7_12, %c0_13, %c0_14] : memref<8x2x32xf32, #tpu.memory_space<vmem>>, vector<1x2x32xf32>
    %14 = vector.shape_cast %13 : vector<1x2x32xf32> to vector<2x32xf32>
    %15 = vector.shape_cast %9 : vector<2x32xf32> to vector<1x2x32xf32>
    tpu.vector_store %arg4[%c7_12, %c0_13, %c0_14], %15 {strides = array<i32>} : memref<8x2x32xf32, #tpu.memory_space<vmem>>, vector<1x2x32xf32>,
    %c1_15 = arith.constant 1 : index
    %c0_16 = arith.constant 0 : index
    %c0_17 = arith.constant 0 : index
    %16 = vector.load %arg0[%c1_15, %c0_16, %c0_17] : memref<8x2x32xf32, #tpu.memory_space<vmem>>, vector<1x2x32xf32>
    %17 = vector.shape_cast %16 : vector<1x2x32xf32> to vector<2x32xf32>
    %cst = arith.constant dense<0.000000e+00> : vector<2x32xf32>
    %18 = tpu.matmul %6, %1, %cst {dimension_numbers = #tpu.dot_dimension_numbers<[1], [0], [0], [1], [0, 0, 1, 1], [], []>} : vector<2x32xf32>, vector<32x32xf32>, vector<2x32xf32> -> vector<2x32xf32>
    %19 = arith.addf %17, %18 : vector<2x32xf32>
    %20 = math.tanh %19 : vector<2x32xf32>
    %c6 = arith.constant 6 : index
    %c0_18 = arith.constant 0 : index
    %c0_19 = arith.constant 0 : index
    %21 = vector.load %arg1[%c6, %c0_18, %c0_19] : memref<8x2x32xf32, #tpu.memory_space<vmem>>, vector<1x2x32xf32>
    %22 = vector.shape_cast %21 : vector<1x2x32xf32> to vector<2x32xf32>
    %cst_20 = arith.constant dense<0.000000e+00> : vector<2x32xf32>
    %23 = tpu.matmul %9, %3, %cst_20 {dimension_numbers = #tpu.dot_dimension_numbers<[1], [0], [0], [1], [0, 0, 1, 1], [], []>} : vector<2x32xf32>, vector<32x32xf32>, vector<2x32xf32> -> vector<2x32xf32>
    %24 = arith.addf %22, %23 : vector<2x32xf32>
    %25 = math.tanh %24 : vector<2x32xf32>
    %c1_21 = arith.constant 1 : index
    %c0_22 = arith.constant 0 : index
    %c0_23 = arith.constant 0 : index
    %26 = vector.load %arg3[%c1_21, %c0_22, %c0_23] : memref<8x2x32xf32, #tpu.memory_space<vmem>>, vector<1x2x32xf32>
    %27 = vector.shape_cast %26 : vector<1x2x32xf32> to vector<2x32xf32>
    %28 = vector.shape_cast %20 : vector<2x32xf32> to vector<1x2x32xf32>
    tpu.vector_store %arg3[%c1_21, %c0_22, %c0_23], %28 {strides = array<i32>} : memref<8x2x32xf32, #tpu.memory_space<vmem>>, vector<1x2x32xf32>,
    %c6_24 = arith.constant 6 : index
    %c0_25 = arith.constant 0 : index
    %c0_26 = arith.constant 0 : index
    %29 = vector.load %arg4[%c6_24, %c0_25, %c0_26] : memref<8x2x32xf32, #tpu.memory_space<vmem>>, vector<1x2x32xf32>
    %30 = vector.shape_cast %29 : vector<1x2x32xf32> to vector<2x32xf32>
    %31 = vector.shape_cast %25 : vector<2x32xf32> to vector<1x2x32xf32>
    tpu.vector_store %arg4[%c6_24, %c0_25, %c0_26], %31 {strides = array<i32>} : memref<8x2x32xf32, #tpu.memory_space<vmem>>, vector<1x2x32xf32>,
    %c2 = arith.constant 2 : index
    %c0_27 = arith.constant 0 : index
    %c0_28 = arith.constant 0 : index
    %32 = vector.load %arg0[%c2, %c0_27, %c0_28] : memref<8x2x32xf32, #tpu.memory_space<vmem>>, vector<1x2x32xf32>
    %33 = vector.shape_cast %32 : vector<1x2x32xf32> to vector<2x32xf32>
    %cst_29 = arith.constant dense<0.000000e+00> : vector<2x32xf32>
    %34 = tpu.matmul %20, %1, %cst_29 {dimension_numbers = #tpu.dot_dimension_numbers<[1], [0], [0], [1], [0, 0, 1, 1], [], []>} : vector<2x32xf32>, vector<32x32xf32>, vector<2x32xf32> -> vector<2x32xf32>
    %35 = arith.addf %33, %34 : vector<2x32xf32>
    %36 = math.tanh %35 : vector<2x32xf32>
    %c5 = arith.constant 5 : index
    %c0_30 = arith.constant 0 : index
    %c0_31 = arith.constant 0 : index
    %37 = vector.load %arg1[%c5, %c0_30, %c0_31] : memref<8x2x32xf32, #tpu.memory_space<vmem>>, vector<1x2x32xf32>
    %38 = vector.shape_cast %37 : vector<1x2x32xf32> to vector<2x32xf32>
    %cst_32 = arith.constant dense<0.000000e+00> : vector<2x32xf32>
    %39 = tpu.matmul %25, %3, %cst_32 {dimension_numbers = #tpu.dot_dimension_numbers<[1], [0], [0], [1], [0, 0, 1, 1], [], []>} : vector<2x32xf32>, vector<32x32xf32>, vector<2x32xf32> -> vector<2x32xf32>
    %40 = arith.addf %38, %39 : vector<2x32xf32>
    %41 = math.tanh %40 : vector<2x32xf32>
    %c2_33 = arith.constant 2 : index
    %c0_34 = arith.constant 0 : index
    %c0_35 = arith.constant 0 : index
    %42 = vector.load %arg3[%c2_33, %c0_34, %c0_35] : memref<8x2x32xf32, #tpu.memory_space<vmem>>, vector<1x2x32xf32>
    %43 = vector.shape_cast %42 : vector<1x2x32xf32> to vector<2x32xf32>
    %44 = vector.shape_cast %36 : vector<2x32xf32> to vector<1x2x32xf32>
    tpu.vector_store %arg3[%c2_33, %c0_34, %c0_35], %44 {strides = array<i32>} : memref<8x2x32xf32, #tpu.memory_space<vmem>>, vector<1x2x32xf32>,
    %c5_36 = arith.constant 5 : index
    %c0_37 = arith.constant 0 : index
    %c0_38 = arith.constant 0 : index
    %45 = vector.load %arg4[%c5_36, %c0_37, %c0_38] : memref<8x2x32xf32, #tpu.memory_space<vmem>>, vector<1x2x32xf32>
    %46 = vector.shape_cast %45 : vector<1x2x32xf32> to vector<2x32xf32>
    %47 = vector.shape_cast %41 : vector<2x32xf32> to vector<1x2x32xf32>
    tpu.vector_store %arg4[%c5_36, %c0_37, %c0_38], %47 {strides = array<i32>} : memref<8x2x32xf32, #tpu.memory_space<vmem>>, vector<1x2x32xf32>,
    %c3 = arith.constant 3 : index
    %c0_39 = arith.constant 0 : index
    %c0_40 = arith.constant 0 : index
    %48 = vector.load %arg0[%c3, %c0_39, %c0_40] : memref<8x2x32xf32, #tpu.memory_space<vmem>>, vector<1x2x32xf32>
    %49 = vector.shape_cast %48 : vector<1x2x32xf32> to vector<2x32xf32>
    %cst_41 = arith.constant dense<0.000000e+00> : vector<2x32xf32>
    %50 = tpu.matmul %36, %1, %cst_41 {dimension_numbers = #tpu.dot_dimension_numbers<[1], [0], [0], [1], [0, 0, 1, 1], [], []>} : vector<2x32xf32>, vector<32x32xf32>, vector<2x32xf32> -> vector<2x32xf32>
    %51 = arith.addf %49, %50 : vector<2x32xf32>
    %52 = math.tanh %51 : vector<2x32xf32>
    %c4 = arith.constant 4 : index
    %c0_42 = arith.constant 0 : index
    %c0_43 = arith.constant 0 : index
    %53 = vector.load %arg1[%c4, %c0_42, %c0_43] : memref<8x2x32xf32, #tpu.memory_space<vmem>>, vector<1x2x32xf32>
    %54 = vector.shape_cast %53 : vector<1x2x32xf32> to vector<2x32xf32>
    %cst_44 = arith.constant dense<0.000000e+00> : vector<2x32xf32>
    %55 = tpu.matmul %41, %3, %cst_44 {dimension_numbers = #tpu.dot_dimension_numbers<[1], [0], [0], [1], [0, 0, 1, 1], [], []>} : vector<2x32xf32>, vector<32x32xf32>, vector<2x32xf32> -> vector<2x32xf32>
    %56 = arith.addf %54, %55 : vector<2x32xf32>
    %57 = math.tanh %56 : vector<2x32xf32>
    %c3_45 = arith.constant 3 : index
    %c0_46 = arith.constant 0 : index
    %c0_47 = arith.constant 0 : index
    %58 = vector.load %arg3[%c3_45, %c0_46, %c0_47] : memref<8x2x32xf32, #tpu.memory_space<vmem>>, vector<1x2x32xf32>
    %59 = vector.shape_cast %58 : vector<1x2x32xf32> to vector<2x32xf32>
    %60 = vector.shape_cast %52 : vector<2x32xf32> to vector<1x2x32xf32>
    tpu.vector_store %arg3[%c3_45, %c0_46, %c0_47], %60 {strides = array<i32>} : memref<8x2x32xf32, #tpu.memory_space<vmem>>, vector<1x2x32xf32>,
    %c4_48 = arith.constant 4 : index
    %c0_49 = arith.constant 0 : index
    %c0_50 = arith.constant 0 : index
    %61 = vector.load %arg4[%c4_48, %c0_49, %c0_50] : memref<8x2x32xf32, #tpu.memory_space<vmem>>, vector<1x2x32xf32>
    %62 = vector.shape_cast %61 : vector<1x2x32xf32> to vector<2x32xf32>
    %63 = vector.shape_cast %57 : vector<2x32xf32> to vector<1x2x32xf32>
    tpu.vector_store %arg4[%c4_48, %c0_49, %c0_50], %63 {strides = array<i32>} : memref<8x2x32xf32, #tpu.memory_space<vmem>>, vector<1x2x32xf32>,
    %c4_51 = arith.constant 4 : index
    %c0_52 = arith.constant 0 : index
    %c0_53 = arith.constant 0 : index
    %64 = vector.load %arg0[%c4_51, %c0_52, %c0_53] : memref<8x2x32xf32, #tpu.memory_space<vmem>>, vector<1x2x32xf32>
    %65 = vector.shape_cast %64 : vector<1x2x32xf32> to vector<2x32xf32>
    %cst_54 = arith.constant dense<0.000000e+00> : vector<2x32xf32>
    %66 = tpu.matmul %52, %1, %cst_54 {dimension_numbers = #tpu.dot_dimension_numbers<[1], [0], [0], [1], [0, 0, 1, 1], [], []>} : vector<2x32xf32>, vector<32x32xf32>, vector<2x32xf32> -> vector<2x32xf32>
    %67 = arith.addf %65, %66 : vector<2x32xf32>
    %68 = math.tanh %67 : vector<2x32xf32>
    %c3_55 = arith.constant 3 : index
    %c0_56 = arith.constant 0 : index
    %c0_57 = arith.constant 0 : index
    %69 = vector.load %arg1[%c3_55, %c0_56, %c0_57] : memref<8x2x32xf32, #tpu.memory_space<vmem>>, vector<1x2x32xf32>
    %70 = vector.shape_cast %69 : vector<1x2x32xf32> to vector<2x32xf32>
    %cst_58 = arith.constant dense<0.000000e+00> : vector<2x32xf32>
    %71 = tpu.matmul %57, %3, %cst_58 {dimension_numbers = #tpu.dot_dimension_numbers<[1], [0], [0], [1], [0, 0, 1, 1], [], []>} : vector<2x32xf32>, vector<32x32xf32>, vector<2x32xf32> -> vector<2x32xf32>
    %72 = arith.addf %70, %71 : vector<2x32xf32>
    %73 = math.tanh %72 : vector<2x32xf32>
    %c4_59 = arith.constant 4 : index
    %c0_60 = arith.constant 0 : index
    %c0_61 = arith.constant 0 : index
    %74 = vector.load %arg3[%c4_59, %c0_60, %c0_61] : memref<8x2x32xf32, #tpu.memory_space<vmem>>, vector<1x2x32xf32>
    %75 = vector.shape_cast %74 : vector<1x2x32xf32> to vector<2x32xf32>
    %76 = vector.shape_cast %68 : vector<2x32xf32> to vector<1x2x32xf32>
    tpu.vector_store %arg3[%c4_59, %c0_60, %c0_61], %76 {strides = array<i32>} : memref<8x2x32xf32, #tpu.memory_space<vmem>>, vector<1x2x32xf32>,
    %c3_62 = arith.constant 3 : index
    %c0_63 = arith.constant 0 : index
    %c0_64 = arith.constant 0 : index
    %77 = vector.load %arg4[%c3_62, %c0_63, %c0_64] : memref<8x2x32xf32, #tpu.memory_space<vmem>>, vector<1x2x32xf32>
    %78 = vector.shape_cast %77 : vector<1x2x32xf32> to vector<2x32xf32>
    %79 = vector.shape_cast %73 : vector<2x32xf32> to vector<1x2x32xf32>
    tpu.vector_store %arg4[%c3_62, %c0_63, %c0_64], %79 {strides = array<i32>} : memref<8x2x32xf32, #tpu.memory_space<vmem>>, vector<1x2x32xf32>,
    %c5_65 = arith.constant 5 : index
    %c0_66 = arith.constant 0 : index
    %c0_67 = arith.constant 0 : index
    %80 = vector.load %arg0[%c5_65, %c0_66, %c0_67] : memref<8x2x32xf32, #tpu.memory_space<vmem>>, vector<1x2x32xf32>
    %81 = vector.shape_cast %80 : vector<1x2x32xf32> to vector<2x32xf32>
    %cst_68 = arith.constant dense<0.000000e+00> : vector<2x32xf32>
    %82 = tpu.matmul %68, %1, %cst_68 {dimension_numbers = #tpu.dot_dimension_numbers<[1], [0], [0], [1], [0, 0, 1, 1], [], []>} : vector<2x32xf32>, vector<32x32xf32>, vector<2x32xf32> -> vector<2x32xf32>
    %83 = arith.addf %81, %82 : vector<2x32xf32>
    %84 = math.tanh %83 : vector<2x32xf32>
    %c2_69 = arith.constant 2 : index
    %c0_70 = arith.constant 0 : index
    %c0_71 = arith.constant 0 : index
    %85 = vector.load %arg1[%c2_69, %c0_70, %c0_71] : memref<8x2x32xf32, #tpu.memory_space<vmem>>, vector<1x2x32xf32>
    %86 = vector.shape_cast %85 : vector<1x2x32xf32> to vector<2x32xf32>
    %cst_72 = arith.constant dense<0.000000e+00> : vector<2x32xf32>
    %87 = tpu.matmul %73, %3, %cst_72 {dimension_numbers = #tpu.dot_dimension_numbers<[1], [0], [0], [1], [0, 0, 1, 1], [], []>} : vector<2x32xf32>, vector<32x32xf32>, vector<2x32xf32> -> vector<2x32xf32>
    %88 = arith.addf %86, %87 : vector<2x32xf32>
    %89 = math.tanh %88 : vector<2x32xf32>
    %c5_73 = arith.constant 5 : index
    %c0_74 = arith.constant 0 : index
    %c0_75 = arith.constant 0 : index
    %90 = vector.load %arg3[%c5_73, %c0_74, %c0_75] : memref<8x2x32xf32, #tpu.memory_space<vmem>>, vector<1x2x32xf32>
    %91 = vector.shape_cast %90 : vector<1x2x32xf32> to vector<2x32xf32>
    %92 = vector.shape_cast %84 : vector<2x32xf32> to vector<1x2x32xf32>
    tpu.vector_store %arg3[%c5_73, %c0_74, %c0_75], %92 {strides = array<i32>} : memref<8x2x32xf32, #tpu.memory_space<vmem>>, vector<1x2x32xf32>,
    %c2_76 = arith.constant 2 : index
    %c0_77 = arith.constant 0 : index
    %c0_78 = arith.constant 0 : index
    %93 = vector.load %arg4[%c2_76, %c0_77, %c0_78] : memref<8x2x32xf32, #tpu.memory_space<vmem>>, vector<1x2x32xf32>
    %94 = vector.shape_cast %93 : vector<1x2x32xf32> to vector<2x32xf32>
    %95 = vector.shape_cast %89 : vector<2x32xf32> to vector<1x2x32xf32>
    tpu.vector_store %arg4[%c2_76, %c0_77, %c0_78], %95 {strides = array<i32>} : memref<8x2x32xf32, #tpu.memory_space<vmem>>, vector<1x2x32xf32>,
    %c6_79 = arith.constant 6 : index
    %c0_80 = arith.constant 0 : index
    %c0_81 = arith.constant 0 : index
    %96 = vector.load %arg0[%c6_79, %c0_80, %c0_81] : memref<8x2x32xf32, #tpu.memory_space<vmem>>, vector<1x2x32xf32>
    %97 = vector.shape_cast %96 : vector<1x2x32xf32> to vector<2x32xf32>
    %cst_82 = arith.constant dense<0.000000e+00> : vector<2x32xf32>
    %98 = tpu.matmul %84, %1, %cst_82 {dimension_numbers = #tpu.dot_dimension_numbers<[1], [0], [0], [1], [0, 0, 1, 1], [], []>} : vector<2x32xf32>, vector<32x32xf32>, vector<2x32xf32> -> vector<2x32xf32>
    %99 = arith.addf %97, %98 : vector<2x32xf32>
    %100 = math.tanh %99 : vector<2x32xf32>
    %c1_83 = arith.constant 1 : index
    %c0_84 = arith.constant 0 : index
    %c0_85 = arith.constant 0 : index
    %101 = vector.load %arg1[%c1_83, %c0_84, %c0_85] : memref<8x2x32xf32, #tpu.memory_space<vmem>>, vector<1x2x32xf32>
    %102 = vector.shape_cast %101 : vector<1x2x32xf32> to vector<2x32xf32>
    %cst_86 = arith.constant dense<0.000000e+00> : vector<2x32xf32>
    %103 = tpu.matmul %89, %3, %cst_86 {dimension_numbers = #tpu.dot_dimension_numbers<[1], [0], [0], [1], [0, 0, 1, 1], [], []>} : vector<2x32xf32>, vector<32x32xf32>, vector<2x32xf32> -> vector<2x32xf32>
    %104 = arith.addf %102, %103 : vector<2x32xf32>
    %105 = math.tanh %104 : vector<2x32xf32>
    %c6_87 = arith.constant 6 : index
    %c0_88 = arith.constant 0 : index
    %c0_89 = arith.constant 0 : index
    %106 = vector.load %arg3[%c6_87, %c0_88, %c0_89] : memref<8x2x32xf32, #tpu.memory_space<vmem>>, vector<1x2x32xf32>
    %107 = vector.shape_cast %106 : vector<1x2x32xf32> to vector<2x32xf32>
    %108 = vector.shape_cast %100 : vector<2x32xf32> to vector<1x2x32xf32>
    tpu.vector_store %arg3[%c6_87, %c0_88, %c0_89], %108 {strides = array<i32>} : memref<8x2x32xf32, #tpu.memory_space<vmem>>, vector<1x2x32xf32>,
    %c1_90 = arith.constant 1 : index
    %c0_91 = arith.constant 0 : index
    %c0_92 = arith.constant 0 : index
    %109 = vector.load %arg4[%c1_90, %c0_91, %c0_92] : memref<8x2x32xf32, #tpu.memory_space<vmem>>, vector<1x2x32xf32>
    %110 = vector.shape_cast %109 : vector<1x2x32xf32> to vector<2x32xf32>
    %111 = vector.shape_cast %105 : vector<2x32xf32> to vector<1x2x32xf32>
    tpu.vector_store %arg4[%c1_90, %c0_91, %c0_92], %111 {strides = array<i32>} : memref<8x2x32xf32, #tpu.memory_space<vmem>>, vector<1x2x32xf32>,
    %c7_93 = arith.constant 7 : index
    %c0_94 = arith.constant 0 : index
    %c0_95 = arith.constant 0 : index
    %112 = vector.load %arg0[%c7_93, %c0_94, %c0_95] : memref<8x2x32xf32, #tpu.memory_space<vmem>>, vector<1x2x32xf32>
    %113 = vector.shape_cast %112 : vector<1x2x32xf32> to vector<2x32xf32>
    %cst_96 = arith.constant dense<0.000000e+00> : vector<2x32xf32>
    %114 = tpu.matmul %100, %1, %cst_96 {dimension_numbers = #tpu.dot_dimension_numbers<[1], [0], [0], [1], [0, 0, 1, 1], [], []>} : vector<2x32xf32>, vector<32x32xf32>, vector<2x32xf32> -> vector<2x32xf32>
    %115 = arith.addf %113, %114 : vector<2x32xf32>
    %116 = math.tanh %115 : vector<2x32xf32>
    %c0_97 = arith.constant 0 : index
    %c0_98 = arith.constant 0 : index
    %c0_99 = arith.constant 0 : index
    %117 = vector.load %arg1[%c0_97, %c0_98, %c0_99] : memref<8x2x32xf32, #tpu.memory_space<vmem>>, vector<1x2x32xf32>
    %118 = vector.shape_cast %117 : vector<1x2x32xf32> to vector<2x32xf32>
    %cst_100 = arith.constant dense<0.000000e+00> : vector<2x32xf32>
    %119 = tpu.matmul %105, %3, %cst_100 {dimension_numbers = #tpu.dot_dimension_numbers<[1], [0], [0], [1], [0, 0, 1, 1], [], []>} : vector<2x32xf32>, vector<32x32xf32>, vector<2x32xf32> -> vector<2x32xf32>
    %120 = arith.addf %118, %119 : vector<2x32xf32>
    %121 = math.tanh %120 : vector<2x32xf32>
    %c7_101 = arith.constant 7 : index
    %c0_102 = arith.constant 0 : index
    %c0_103 = arith.constant 0 : index
    %122 = vector.load %arg3[%c7_101, %c0_102, %c0_103] : memref<8x2x32xf32, #tpu.memory_space<vmem>>, vector<1x2x32xf32>
    %123 = vector.shape_cast %122 : vector<1x2x32xf32> to vector<2x32xf32>
    %124 = vector.shape_cast %116 : vector<2x32xf32> to vector<1x2x32xf32>
    tpu.vector_store %arg3[%c7_101, %c0_102, %c0_103], %124 {strides = array<i32>} : memref<8x2x32xf32, #tpu.memory_space<vmem>>, vector<1x2x32xf32>,
    %c0_104 = arith.constant 0 : index
    %c0_105 = arith.constant 0 : index
    %c0_106 = arith.constant 0 : index
    %125 = vector.load %arg4[%c0_104, %c0_105, %c0_106] : memref<8x2x32xf32, #tpu.memory_space<vmem>>, vector<1x2x32xf32>
    %126 = vector.shape_cast %125 : vector<1x2x32xf32> to vector<2x32xf32>
    %127 = vector.shape_cast %121 : vector<2x32xf32> to vector<1x2x32xf32>
    tpu.vector_store %arg4[%c0_104, %c0_105, %c0_106], %127 {strides = array<i32>} : memref<8x2x32xf32, #tpu.memory_space<vmem>>, vector<1x2x32xf32>,
    return
  }
}

module attributes {stable_mosaic.version = 11 : i64} {
  func.func @_proj_hidden_kernel(%arg0: memref<16x32xf32, #tpu.memory_space<vmem>>, %arg1: memref<16x32xf32, #tpu.memory_space<vmem>>, %arg2: memref<4x32x32xf32, #tpu.memory_space<vmem>>, %arg3: memref<2x1x32xf32, #tpu.memory_space<vmem>>, %arg4: memref<16x32xf32, #tpu.memory_space<vmem>>, %arg5: memref<16x32xf32, #tpu.memory_space<vmem>>) attributes {dimension_semantics = [], scalar_prefetch = 0 : i64, scratch_operands = 0 : i64, tpu.core_type = #tpu.core_type<tc>} {
    %c0 = arith.constant 0 : index
    %c0_0 = arith.constant 0 : index
    %0 = vector.load %arg0[%c0, %c0_0] : memref<16x32xf32, #tpu.memory_space<vmem>>, vector<16x32xf32>
    %c0_1 = arith.constant 0 : index
    %c0_2 = arith.constant 0 : index
    %1 = vector.load %arg1[%c0_1, %c0_2] : memref<16x32xf32, #tpu.memory_space<vmem>>, vector<16x32xf32>
    %c0_3 = arith.constant 0 : index
    %c0_4 = arith.constant 0 : index
    %c0_5 = arith.constant 0 : index
    %2 = vector.load %arg2[%c0_3, %c0_4, %c0_5] : memref<4x32x32xf32, #tpu.memory_space<vmem>>, vector<1x32x32xf32>
    %3 = vector.shape_cast %2 : vector<1x32x32xf32> to vector<32x32xf32>
    %cst = arith.constant dense<0.000000e+00> : vector<16x32xf32>
    %4 = tpu.matmul %0, %3, %cst {dimension_numbers = #tpu.dot_dimension_numbers<[1], [0], [0], [1], [0, 0, 1, 1], [], []>} : vector<16x32xf32>, vector<32x32xf32>, vector<16x32xf32> -> vector<16x32xf32>
    %c1 = arith.constant 1 : index
    %c0_6 = arith.constant 0 : index
    %c0_7 = arith.constant 0 : index
    %5 = vector.load %arg2[%c1, %c0_6, %c0_7] : memref<4x32x32xf32, #tpu.memory_space<vmem>>, vector<1x32x32xf32>
    %6 = vector.shape_cast %5 : vector<1x32x32xf32> to vector<32x32xf32>
    %cst_8 = arith.constant dense<0.000000e+00> : vector<16x32xf32>
    %7 = tpu.matmul %1, %6, %cst_8 {dimension_numbers = #tpu.dot_dimension_numbers<[1], [0], [0], [1], [0, 0, 1, 1], [], []>} : vector<16x32xf32>, vector<32x32xf32>, vector<16x32xf32> -> vector<16x32xf32>
    %8 = arith.addf %4, %7 : vector<16x32xf32>
    %c0_9 = arith.constant 0 : index
    %c0_10 = arith.constant 0 : index
    %c0_11 = arith.constant 0 : index
    %9 = vector.load %arg3[%c0_9, %c0_10, %c0_11] : memref<2x1x32xf32, #tpu.memory_space<vmem>>, vector<1x1x32xf32>
    %10 = vector.shape_cast %9 : vector<1x1x32xf32> to vector<1x32xf32>
    %11 = vector.broadcast %10 : vector<1x32xf32> to vector<16x32xf32>
    %12 = arith.addf %8, %11 : vector<16x32xf32>
    %c0_12 = arith.constant 0 : index
    %c0_13 = arith.constant 0 : index
    %13 = vector.load %arg4[%c0_12, %c0_13] : memref<16x32xf32, #tpu.memory_space<vmem>>, vector<16x32xf32>
    tpu.vector_store %arg4[%c0_12, %c0_13], %12 {strides = array<i32>} : memref<16x32xf32, #tpu.memory_space<vmem>>, vector<16x32xf32>,
    %c2 = arith.constant 2 : index
    %c0_14 = arith.constant 0 : index
    %c0_15 = arith.constant 0 : index
    %14 = vector.load %arg2[%c2, %c0_14, %c0_15] : memref<4x32x32xf32, #tpu.memory_space<vmem>>, vector<1x32x32xf32>
    %15 = vector.shape_cast %14 : vector<1x32x32xf32> to vector<32x32xf32>
    %cst_16 = arith.constant dense<0.000000e+00> : vector<16x32xf32>
    %16 = tpu.matmul %0, %15, %cst_16 {dimension_numbers = #tpu.dot_dimension_numbers<[1], [0], [0], [1], [0, 0, 1, 1], [], []>} : vector<16x32xf32>, vector<32x32xf32>, vector<16x32xf32> -> vector<16x32xf32>
    %c3 = arith.constant 3 : index
    %c0_17 = arith.constant 0 : index
    %c0_18 = arith.constant 0 : index
    %17 = vector.load %arg2[%c3, %c0_17, %c0_18] : memref<4x32x32xf32, #tpu.memory_space<vmem>>, vector<1x32x32xf32>
    %18 = vector.shape_cast %17 : vector<1x32x32xf32> to vector<32x32xf32>
    %cst_19 = arith.constant dense<0.000000e+00> : vector<16x32xf32>
    %19 = tpu.matmul %1, %18, %cst_19 {dimension_numbers = #tpu.dot_dimension_numbers<[1], [0], [0], [1], [0, 0, 1, 1], [], []>} : vector<16x32xf32>, vector<32x32xf32>, vector<16x32xf32> -> vector<16x32xf32>
    %20 = arith.addf %16, %19 : vector<16x32xf32>
    %c1_20 = arith.constant 1 : index
    %c0_21 = arith.constant 0 : index
    %c0_22 = arith.constant 0 : index
    %21 = vector.load %arg3[%c1_20, %c0_21, %c0_22] : memref<2x1x32xf32, #tpu.memory_space<vmem>>, vector<1x1x32xf32>
    %22 = vector.shape_cast %21 : vector<1x1x32xf32> to vector<1x32xf32>
    %23 = vector.broadcast %22 : vector<1x32xf32> to vector<16x32xf32>
    %24 = arith.addf %20, %23 : vector<16x32xf32>
    %c0_23 = arith.constant 0 : index
    %c0_24 = arith.constant 0 : index
    %25 = vector.load %arg5[%c0_23, %c0_24] : memref<16x32xf32, #tpu.memory_space<vmem>>, vector<16x32xf32>
    tpu.vector_store %arg5[%c0_23, %c0_24], %24 {strides = array<i32>} : memref<16x32xf32, #tpu.memory_space<vmem>>, vector<16x32xf32>,
    return
  }
}

module attributes {stable_mosaic.version = 11 : i64} {
  func.func @_birnn_head_kernel(%arg0: memref<8x2x32xf32, #tpu.memory_space<vmem>>, %arg1: memref<8x2x32xf32, #tpu.memory_space<vmem>>, %arg2: memref<2x32x32xf32, #tpu.memory_space<vmem>>, %arg3: memref<2x32x4xf32, #tpu.memory_space<vmem>>, %arg4: memref<1x4xf32, #tpu.memory_space<vmem>>, %arg5: memref<2x4xf32, #tpu.memory_space<vmem>>) attributes {dimension_semantics = [], scalar_prefetch = 0 : i64, scratch_operands = 0 : i64, tpu.core_type = #tpu.core_type<tc>} {
    %c0 = arith.constant 0 : index
    %c0_0 = arith.constant 0 : index
    %c0_1 = arith.constant 0 : index
    %0 = vector.load %arg2[%c0, %c0_0, %c0_1] : memref<2x32x32xf32, #tpu.memory_space<vmem>>, vector<1x32x32xf32>
    %1 = vector.shape_cast %0 : vector<1x32x32xf32> to vector<32x32xf32>
    %c1 = arith.constant 1 : index
    %c0_2 = arith.constant 0 : index
    %c0_3 = arith.constant 0 : index
    %2 = vector.load %arg2[%c1, %c0_2, %c0_3] : memref<2x32x32xf32, #tpu.memory_space<vmem>>, vector<1x32x32xf32>
    %3 = vector.shape_cast %2 : vector<1x32x32xf32> to vector<32x32xf32>
    %c0_4 = arith.constant 0 : index
    %c0_5 = arith.constant 0 : index
    %c0_6 = arith.constant 0 : index
    %4 = vector.load %arg0[%c0_4, %c0_5, %c0_6] : memref<8x2x32xf32, #tpu.memory_space<vmem>>, vector<1x2x32xf32>
    %5 = vector.shape_cast %4 : vector<1x2x32xf32> to vector<2x32xf32>
    %6 = math.tanh %5 : vector<2x32xf32>
    %c7 = arith.constant 7 : index
    %c0_7 = arith.constant 0 : index
    %c0_8 = arith.constant 0 : index
    %7 = vector.load %arg1[%c7, %c0_7, %c0_8] : memref<8x2x32xf32, #tpu.memory_space<vmem>>, vector<1x2x32xf32>
    %8 = vector.shape_cast %7 : vector<1x2x32xf32> to vector<2x32xf32>
    %9 = math.tanh %8 : vector<2x32xf32>
    %c1_9 = arith.constant 1 : index
    %c0_10 = arith.constant 0 : index
    %c0_11 = arith.constant 0 : index
    %10 = vector.load %arg0[%c1_9, %c0_10, %c0_11] : memref<8x2x32xf32, #tpu.memory_space<vmem>>, vector<1x2x32xf32>
    %11 = vector.shape_cast %10 : vector<1x2x32xf32> to vector<2x32xf32>
    %cst = arith.constant dense<0.000000e+00> : vector<2x32xf32>
    %12 = tpu.matmul %6, %1, %cst {dimension_numbers = #tpu.dot_dimension_numbers<[1], [0], [0], [1], [0, 0, 1, 1], [], []>} : vector<2x32xf32>, vector<32x32xf32>, vector<2x32xf32> -> vector<2x32xf32>
    %13 = arith.addf %11, %12 : vector<2x32xf32>
    %14 = math.tanh %13 : vector<2x32xf32>
    %c6 = arith.constant 6 : index
    %c0_12 = arith.constant 0 : index
    %c0_13 = arith.constant 0 : index
    %15 = vector.load %arg1[%c6, %c0_12, %c0_13] : memref<8x2x32xf32, #tpu.memory_space<vmem>>, vector<1x2x32xf32>
    %16 = vector.shape_cast %15 : vector<1x2x32xf32> to vector<2x32xf32>
    %cst_14 = arith.constant dense<0.000000e+00> : vector<2x32xf32>
    %17 = tpu.matmul %9, %3, %cst_14 {dimension_numbers = #tpu.dot_dimension_numbers<[1], [0], [0], [1], [0, 0, 1, 1], [], []>} : vector<2x32xf32>, vector<32x32xf32>, vector<2x32xf32> -> vector<2x32xf32>
    %18 = arith.addf %16, %17 : vector<2x32xf32>
    %19 = math.tanh %18 : vector<2x32xf32>
    %c2 = arith.constant 2 : index
    %c0_15 = arith.constant 0 : index
    %c0_16 = arith.constant 0 : index
    %20 = vector.load %arg0[%c2, %c0_15, %c0_16] : memref<8x2x32xf32, #tpu.memory_space<vmem>>, vector<1x2x32xf32>
    %21 = vector.shape_cast %20 : vector<1x2x32xf32> to vector<2x32xf32>
    %cst_17 = arith.constant dense<0.000000e+00> : vector<2x32xf32>
    %22 = tpu.matmul %14, %1, %cst_17 {dimension_numbers = #tpu.dot_dimension_numbers<[1], [0], [0], [1], [0, 0, 1, 1], [], []>} : vector<2x32xf32>, vector<32x32xf32>, vector<2x32xf32> -> vector<2x32xf32>
    %23 = arith.addf %21, %22 : vector<2x32xf32>
    %24 = math.tanh %23 : vector<2x32xf32>
    %c5 = arith.constant 5 : index
    %c0_18 = arith.constant 0 : index
    %c0_19 = arith.constant 0 : index
    %25 = vector.load %arg1[%c5, %c0_18, %c0_19] : memref<8x2x32xf32, #tpu.memory_space<vmem>>, vector<1x2x32xf32>
    %26 = vector.shape_cast %25 : vector<1x2x32xf32> to vector<2x32xf32>
    %cst_20 = arith.constant dense<0.000000e+00> : vector<2x32xf32>
    %27 = tpu.matmul %19, %3, %cst_20 {dimension_numbers = #tpu.dot_dimension_numbers<[1], [0], [0], [1], [0, 0, 1, 1], [], []>} : vector<2x32xf32>, vector<32x32xf32>, vector<2x32xf32> -> vector<2x32xf32>
    %28 = arith.addf %26, %27 : vector<2x32xf32>
    %29 = math.tanh %28 : vector<2x32xf32>
    %c3 = arith.constant 3 : index
    %c0_21 = arith.constant 0 : index
    %c0_22 = arith.constant 0 : index
    %30 = vector.load %arg0[%c3, %c0_21, %c0_22] : memref<8x2x32xf32, #tpu.memory_space<vmem>>, vector<1x2x32xf32>
    %31 = vector.shape_cast %30 : vector<1x2x32xf32> to vector<2x32xf32>
    %cst_23 = arith.constant dense<0.000000e+00> : vector<2x32xf32>
    %32 = tpu.matmul %24, %1, %cst_23 {dimension_numbers = #tpu.dot_dimension_numbers<[1], [0], [0], [1], [0, 0, 1, 1], [], []>} : vector<2x32xf32>, vector<32x32xf32>, vector<2x32xf32> -> vector<2x32xf32>
    %33 = arith.addf %31, %32 : vector<2x32xf32>
    %34 = math.tanh %33 : vector<2x32xf32>
    %c4 = arith.constant 4 : index
    %c0_24 = arith.constant 0 : index
    %c0_25 = arith.constant 0 : index
    %35 = vector.load %arg1[%c4, %c0_24, %c0_25] : memref<8x2x32xf32, #tpu.memory_space<vmem>>, vector<1x2x32xf32>
    %36 = vector.shape_cast %35 : vector<1x2x32xf32> to vector<2x32xf32>
    %cst_26 = arith.constant dense<0.000000e+00> : vector<2x32xf32>
    %37 = tpu.matmul %29, %3, %cst_26 {dimension_numbers = #tpu.dot_dimension_numbers<[1], [0], [0], [1], [0, 0, 1, 1], [], []>} : vector<2x32xf32>, vector<32x32xf32>, vector<2x32xf32> -> vector<2x32xf32>
    %38 = arith.addf %36, %37 : vector<2x32xf32>
    %39 = math.tanh %38 : vector<2x32xf32>
    %c4_27 = arith.constant 4 : index
    %c0_28 = arith.constant 0 : index
    %c0_29 = arith.constant 0 : index
    %40 = vector.load %arg0[%c4_27, %c0_28, %c0_29] : memref<8x2x32xf32, #tpu.memory_space<vmem>>, vector<1x2x32xf32>
    %41 = vector.shape_cast %40 : vector<1x2x32xf32> to vector<2x32xf32>
    %cst_30 = arith.constant dense<0.000000e+00> : vector<2x32xf32>
    %42 = tpu.matmul %34, %1, %cst_30 {dimension_numbers = #tpu.dot_dimension_numbers<[1], [0], [0], [1], [0, 0, 1, 1], [], []>} : vector<2x32xf32>, vector<32x32xf32>, vector<2x32xf32> -> vector<2x32xf32>
    %43 = arith.addf %41, %42 : vector<2x32xf32>
    %44 = math.tanh %43 : vector<2x32xf32>
    %c3_31 = arith.constant 3 : index
    %c0_32 = arith.constant 0 : index
    %c0_33 = arith.constant 0 : index
    %45 = vector.load %arg1[%c3_31, %c0_32, %c0_33] : memref<8x2x32xf32, #tpu.memory_space<vmem>>, vector<1x2x32xf32>
    %46 = vector.shape_cast %45 : vector<1x2x32xf32> to vector<2x32xf32>
    %cst_34 = arith.constant dense<0.000000e+00> : vector<2x32xf32>
    %47 = tpu.matmul %39, %3, %cst_34 {dimension_numbers = #tpu.dot_dimension_numbers<[1], [0], [0], [1], [0, 0, 1, 1], [], []>} : vector<2x32xf32>, vector<32x32xf32>, vector<2x32xf32> -> vector<2x32xf32>
    %48 = arith.addf %46, %47 : vector<2x32xf32>
    %49 = math.tanh %48 : vector<2x32xf32>
    %c5_35 = arith.constant 5 : index
    %c0_36 = arith.constant 0 : index
    %c0_37 = arith.constant 0 : index
    %50 = vector.load %arg0[%c5_35, %c0_36, %c0_37] : memref<8x2x32xf32, #tpu.memory_space<vmem>>, vector<1x2x32xf32>
    %51 = vector.shape_cast %50 : vector<1x2x32xf32> to vector<2x32xf32>
    %cst_38 = arith.constant dense<0.000000e+00> : vector<2x32xf32>
    %52 = tpu.matmul %44, %1, %cst_38 {dimension_numbers = #tpu.dot_dimension_numbers<[1], [0], [0], [1], [0, 0, 1, 1], [], []>} : vector<2x32xf32>, vector<32x32xf32>, vector<2x32xf32> -> vector<2x32xf32>
    %53 = arith.addf %51, %52 : vector<2x32xf32>
    %54 = math.tanh %53 : vector<2x32xf32>
    %c2_39 = arith.constant 2 : index
    %c0_40 = arith.constant 0 : index
    %c0_41 = arith.constant 0 : index
    %55 = vector.load %arg1[%c2_39, %c0_40, %c0_41] : memref<8x2x32xf32, #tpu.memory_space<vmem>>, vector<1x2x32xf32>
    %56 = vector.shape_cast %55 : vector<1x2x32xf32> to vector<2x32xf32>
    %cst_42 = arith.constant dense<0.000000e+00> : vector<2x32xf32>
    %57 = tpu.matmul %49, %3, %cst_42 {dimension_numbers = #tpu.dot_dimension_numbers<[1], [0], [0], [1], [0, 0, 1, 1], [], []>} : vector<2x32xf32>, vector<32x32xf32>, vector<2x32xf32> -> vector<2x32xf32>
    %58 = arith.addf %56, %57 : vector<2x32xf32>
    %59 = math.tanh %58 : vector<2x32xf32>
    %c6_43 = arith.constant 6 : index
    %c0_44 = arith.constant 0 : index
    %c0_45 = arith.constant 0 : index
    %60 = vector.load %arg0[%c6_43, %c0_44, %c0_45] : memref<8x2x32xf32, #tpu.memory_space<vmem>>, vector<1x2x32xf32>
    %61 = vector.shape_cast %60 : vector<1x2x32xf32> to vector<2x32xf32>
    %cst_46 = arith.constant dense<0.000000e+00> : vector<2x32xf32>
    %62 = tpu.matmul %54, %1, %cst_46 {dimension_numbers = #tpu.dot_dimension_numbers<[1], [0], [0], [1], [0, 0, 1, 1], [], []>} : vector<2x32xf32>, vector<32x32xf32>, vector<2x32xf32> -> vector<2x32xf32>
    %63 = arith.addf %61, %62 : vector<2x32xf32>
    %64 = math.tanh %63 : vector<2x32xf32>
    %c1_47 = arith.constant 1 : index
    %c0_48 = arith.constant 0 : index
    %c0_49 = arith.constant 0 : index
    %65 = vector.load %arg1[%c1_47, %c0_48, %c0_49] : memref<8x2x32xf32, #tpu.memory_space<vmem>>, vector<1x2x32xf32>
    %66 = vector.shape_cast %65 : vector<1x2x32xf32> to vector<2x32xf32>
    %cst_50 = arith.constant dense<0.000000e+00> : vector<2x32xf32>
    %67 = tpu.matmul %59, %3, %cst_50 {dimension_numbers = #tpu.dot_dimension_numbers<[1], [0], [0], [1], [0, 0, 1, 1], [], []>} : vector<2x32xf32>, vector<32x32xf32>, vector<2x32xf32> -> vector<2x32xf32>
    %68 = arith.addf %66, %67 : vector<2x32xf32>
    %69 = math.tanh %68 : vector<2x32xf32>
    %c7_51 = arith.constant 7 : index
    %c0_52 = arith.constant 0 : index
    %c0_53 = arith.constant 0 : index
    %70 = vector.load %arg0[%c7_51, %c0_52, %c0_53] : memref<8x2x32xf32, #tpu.memory_space<vmem>>, vector<1x2x32xf32>
    %71 = vector.shape_cast %70 : vector<1x2x32xf32> to vector<2x32xf32>
    %cst_54 = arith.constant dense<0.000000e+00> : vector<2x32xf32>
    %72 = tpu.matmul %64, %1, %cst_54 {dimension_numbers = #tpu.dot_dimension_numbers<[1], [0], [0], [1], [0, 0, 1, 1], [], []>} : vector<2x32xf32>, vector<32x32xf32>, vector<2x32xf32> -> vector<2x32xf32>
    %73 = arith.addf %71, %72 : vector<2x32xf32>
    %74 = math.tanh %73 : vector<2x32xf32>
    %c0_55 = arith.constant 0 : index
    %c0_56 = arith.constant 0 : index
    %c0_57 = arith.constant 0 : index
    %75 = vector.load %arg1[%c0_55, %c0_56, %c0_57] : memref<8x2x32xf32, #tpu.memory_space<vmem>>, vector<1x2x32xf32>
    %76 = vector.shape_cast %75 : vector<1x2x32xf32> to vector<2x32xf32>
    %cst_58 = arith.constant dense<0.000000e+00> : vector<2x32xf32>
    %77 = tpu.matmul %69, %3, %cst_58 {dimension_numbers = #tpu.dot_dimension_numbers<[1], [0], [0], [1], [0, 0, 1, 1], [], []>} : vector<2x32xf32>, vector<32x32xf32>, vector<2x32xf32> -> vector<2x32xf32>
    %78 = arith.addf %76, %77 : vector<2x32xf32>
    %79 = math.tanh %78 : vector<2x32xf32>
    %c0_59 = arith.constant 0 : index
    %c0_60 = arith.constant 0 : index
    %c0_61 = arith.constant 0 : index
    %80 = vector.load %arg3[%c0_59, %c0_60, %c0_61] : memref<2x32x4xf32, #tpu.memory_space<vmem>>, vector<1x32x4xf32>
    %81 = vector.shape_cast %80 : vector<1x32x4xf32> to vector<32x4xf32>
    %cst_62 = arith.constant dense<0.000000e+00> : vector<2x4xf32>
    %82 = tpu.matmul %74, %81, %cst_62 {dimension_numbers = #tpu.dot_dimension_numbers<[1], [0], [0], [1], [0, 0, 1, 1], [], []>} : vector<2x32xf32>, vector<32x4xf32>, vector<2x4xf32> -> vector<2x4xf32>
    %c1_63 = arith.constant 1 : index
    %c0_64 = arith.constant 0 : index
    %c0_65 = arith.constant 0 : index
    %83 = vector.load %arg3[%c1_63, %c0_64, %c0_65] : memref<2x32x4xf32, #tpu.memory_space<vmem>>, vector<1x32x4xf32>
    %84 = vector.shape_cast %83 : vector<1x32x4xf32> to vector<32x4xf32>
    %cst_66 = arith.constant dense<0.000000e+00> : vector<2x4xf32>
    %85 = tpu.matmul %79, %84, %cst_66 {dimension_numbers = #tpu.dot_dimension_numbers<[1], [0], [0], [1], [0, 0, 1, 1], [], []>} : vector<2x32xf32>, vector<32x4xf32>, vector<2x4xf32> -> vector<2x4xf32>
    %86 = arith.addf %82, %85 : vector<2x4xf32>
    %c0_67 = arith.constant 0 : index
    %c0_68 = arith.constant 0 : index
    %87 = vector.load %arg4[%c0_67, %c0_68] : memref<1x4xf32, #tpu.memory_space<vmem>>, vector<1x4xf32>
    %88 = vector.broadcast %87 : vector<1x4xf32> to vector<2x4xf32>
    %89 = arith.addf %86, %88 : vector<2x4xf32>
    %c0_69 = arith.constant 0 : index
    %c0_70 = arith.constant 0 : index
    %90 = vector.load %arg5[%c0_69, %c0_70] : memref<2x4xf32, #tpu.memory_space<vmem>>, vector<2x4xf32>
    tpu.vector_store %arg5[%c0_69, %c0_70], %89 {strides = array<i32>} : memref<2x4xf32, #tpu.memory_space<vmem>>, vector<2x4xf32>,
    return
  }
}

</mosaic_0001>

<llo_original>
// kernel: rnn_forward.4
$region0: #{rnn_forward.4}
  #allocation0 [shape = 'u32[]', space=smem, size = 0x4, offset = 0x4, fixed_abs, tag = 'smem constant byte address 0x4 - core index']
  #allocation1 [shape = 'u32[144,128]{1,0:T(1,128)}', space=vmem, size = 0x12000, scoped, tag = 'internal scratch']
  %s0 = inlined_call_operand.vmem [shape: f32[16,16], index: 0, kind: input, shape index: {}]
  %s1 = inlined_call_operand.vmem [shape: f32[2,16,32], index: 1, kind: input, shape index: {}]
  %s2 = inlined_call_operand.vmem [shape: f32[2,1,32], index: 2, kind: input, shape index: {}]
  %s3 = inlined_call_operand.vmem [shape: f32[16,32], index: 3, kind: output, shape index: {0}]
  %s4 = inlined_call_operand.vmem [shape: f32[16,32], index: 4, kind: output, shape index: {1}]
  %5 = xla_tuple %s3, %s4
  %s6 = sld [smem:[#allocation0]]
  $region30: #{rnn_forward.4} parent=0
    _
  %s8 = ssub.s32 1, %s6
  %s9 = scalar_select 0, %s8, %s6
  // Predicated region
  $region2: #{rnn_forward.4} parent=0 // pred_check
    _
  $region3: #{rnn_forward.4} parent=0 // pred_check_branch
    %11 = sbr.rel (0) target = $region5
  $region4: #{rnn_forward.4} parent=0 // pred_region
    _
  $region5: #{rnn_forward.4} parent=0 // pred_fallthru
    _
  // Predicated region
  $region6: #{rnn_forward.4} parent=0 // pred_check
    _
  $region7: #{rnn_forward.4} parent=0 // pred_check_branch
    %13 = sbr.rel (0) target = $region9
  $region8: #{rnn_forward.4} parent=0 // pred_region
    _
  $region9: #{rnn_forward.4} parent=0 // pred_fallthru
    _
  // Predicated region
  $region10: #{rnn_forward.4} parent=0 // pred_check
    _
  $region11: #{rnn_forward.4} parent=0 // pred_check_branch
    %15 = sbr.rel (0) target = $region13
  $region12: #{rnn_forward.4} parent=0 // pred_region
    _
  $region13: #{rnn_forward.4} parent=0 // pred_fallthru
    _
  %v16 = vld [vmem:[%s0] sm:$0xff]
  %v17 = vld [vmem:[%s0 + $0x8] sm:$0xff]
  %v18 = vld [vmem:[%s1] sm:$0xff]
  %v19 = vld [vmem:[%s1 + $0x8] sm:$0xff]
  %v20 = vld [vmem:[%s2] sm:$0x1]
  %v22 = vlaneseq
  %v23 = vshrl.u32 %v22, 7
  %v24 = vsub.s32 0, %v23
  %v25 = vrot.slane %v20, %v24
  %vm27 = vcmask 130048
  %v29 = vsel %vm27, %v16, 0
  %v32 = vsel %vm27, %v17, 0
  %34 = vmatprep.subr.mxu0 0.0
  %35 = vmatpush1.msra.mxu0 %v18
  %36 = vmatprep.subr.mxu0 0.0
  %37 = vmatpush1.msra.mxu0 %v19
  %38 = vmatprep.subr.mxu0 0.0
  %39 = vmatpush1.msra.mxu0 0.0
  %40 = vmatprep.subr.mxu0 0.0
  %41 = vmatpush1.msra.mxu0 0.0
  %42 = vmatprep.subr.mxu0 0.0
  %43 = vmatpush1.msra.mxu0 0.0
  %44 = vmatprep.subr.mxu0 0.0
  %45 = vmatpush1.msra.mxu0 0.0
  %46 = vmatprep.subr.mxu0 0.0
  %47 = vmatpush1.msra.mxu0 0.0
  %48 = vmatprep.subr.mxu0 0.0
  %49 = vmatpush1.msra.mxu0 0.0
  %50 = vmatprep.subr.mxu0 0.0
  %51 = vmatpush1.msra.mxu0 0.0
  %52 = vmatprep.subr.mxu0 0.0
  %53 = vmatpush1.msra.mxu0 0.0
  %54 = vmatprep.subr.mxu0 0.0
  %55 = vmatpush1.msra.mxu0 0.0
  %56 = vmatprep.subr.mxu0 0.0
  %57 = vmatpush1.msra.mxu0 0.0
  %58 = vmatprep.subr.mxu0 0.0
  %59 = vmatpush1.msra.mxu0 0.0
  %60 = vmatprep.subr.mxu0 0.0
  %61 = vmatpush1.msra.mxu0 0.0
  %62 = vmatprep.subr.mxu0 0.0
  %63 = vmatpush1.msra.mxu0 0.0
  %64 = vmatprep.subr.mxu0 0.0
  %65 = vmatpush1.msra.mxu0 0.0
  %66 = vmatprep.subr.mxu0 0.0
  %67 = vmatpush1.msra.mxu0 0.0
  %68 = vmatprep.subr.mxu0 0.0
  %69 = vmatpush1.msra.mxu0 0.0
  %70 = vmatprep.subr.mxu0 0.0
  %71 = vmatpush1.msra.mxu0 0.0
  %72 = vmatprep.subr.mxu0 0.0
  %73 = vmatpush1.msra.mxu0 0.0
  %74 = vmatprep.subr.mxu0 0.0
  %75 = vmatpush1.msra.mxu0 0.0
  %76 = vmatprep.subr.mxu0 0.0
  %77 = vmatpush1.msra.mxu0 0.0
  %78 = vmatprep.subr.mxu0 0.0
  %79 = vmatpush1.msra.mxu0 0.0
  %80 = vmatprep.subr.mxu0 0.0
  %81 = vmatpush1.msra.mxu0 0.0
  %82 = vmatprep.subr.mxu0 0.0
  %83 = vmatpush1.msra.mxu0 0.0
  %84 = vmatprep.subr.mxu0 0.0
  %85 = vmatpush1.msra.mxu0 0.0
  %86 = vmatprep.subr.mxu0 0.0
  %87 = vmatpush1.msra.mxu0 0.0
  %88 = vmatprep.subr.mxu0 0.0
  %89 = vmatpush1.msra.mxu0 0.0
  %90 = vmatprep.subr.mxu0 0.0
  %91 = vmatpush1.msra.mxu0 0.0
  %92 = vmatprep.subr.mxu0 0.0
  %93 = vmatpush1.msra.mxu0 0.0
  %94 = vmatprep.subr.mxu0 0.0
  %95 = vmatpush1.msra.mxu0 0.0
  %96 = vmatprep.subr.mxu0 0.0
  %97 = vmatpush1.msra.mxu0 0.0
  %98 = vmatprep.mubr.f32.mxu0 0.0
  %99 = vmatmul.mubr.f32.gmra.mrb[0].mxu0 %v29
  %v100 = vpop.f32.mrb[0].mxu0
  %v101 = vadd.f32 %v25, %v100
  %v102 = vpop.f32.mrb[0].mxu0
  %103 = vmatprep.mubr.f32.mxu0 0.0
  %104 = vmatmul.mubr.f32.gmra.mrb[0].mxu0 %v32
  %v105 = vpop.f32.mrb[0].mxu0
  %v106 = vadd.f32 %v25, %v105
  %v107 = vpop.f32.mrb[0].mxu0
  %108 = vdwg.mxu0
  %vm109 = vcmask 261120
  %110 = vst.msk [vmem:[%s3] sm:$0xff] %vm109, %v101
  %111 = vst.msk [vmem:[%s3 + $0x8] sm:$0xff] %vm109, %v106
  %s112 = scalar_lea.vmem %s1, 16
  %v113 = vld [vmem:[%s112] sm:$0xff]
  %v114 = vld [vmem:[%s112 + $0x8] sm:$0xff]
  %s115 = scalar_lea.vmem %s2, 1
  %v116 = vld [vmem:[%s115] sm:$0x1]
  %v118 = vlaneseq
  %v119 = vshrl.u32 %v118, 7
  %v120 = vsub.s32 0, %v119
  %v121 = vrot.slane %v116, %v120
  %123 = vmatprep.subr.mxu0 0.0
  %124 = vmatpush1.msra.mxu0 %v113
  %125 = vmatprep.subr.mxu0 0.0
  %126 = vmatpush1.msra.mxu0 %v114
  %127 = vmatprep.subr.mxu0 0.0
  %128 = vmatpush1.msra.mxu0 0.0
  %129 = vmatprep.subr.mxu0 0.0
  %130 = vmatpush1.msra.mxu0 0.0
  %131 = vmatprep.subr.mxu0 0.0
  %132 = vmatpush1.msra.mxu0 0.0
  %133 = vmatprep.subr.mxu0 0.0
  %134 = vmatpush1.msra.mxu0 0.0
  %135 = vmatprep.subr.mxu0 0.0
  %136 = vmatpush1.msra.mxu0 0.0
  %137 = vmatprep.subr.mxu0 0.0
  %138 = vmatpush1.msra.mxu0 0.0
  %139 = vmatprep.subr.mxu0 0.0
  %140 = vmatpush1.msra.mxu0 0.0
  %141 = vmatprep.subr.mxu0 0.0
  %142 = vmatpush1.msra.mxu0 0.0
  %143 = vmatprep.subr.mxu0 0.0
  %144 = vmatpush1.msra.mxu0 0.0
  %145 = vmatprep.subr.mxu0 0.0
  %146 = vmatpush1.msra.mxu0 0.0
  %147 = vmatprep.subr.mxu0 0.0
  %148 = vmatpush1.msra.mxu0 0.0
  %149 = vmatprep.subr.mxu0 0.0
  %150 = vmatpush1.msra.mxu0 0.0
  %151 = vmatprep.subr.mxu0 0.0
  %152 = vmatpush1.msra.mxu0 0.0
  %153 = vmatprep.subr.mxu0 0.0
  %154 = vmatpush1.msra.mxu0 0.0
  %155 = vmatprep.subr.mxu0 0.0
  %156 = vmatpush1.msra.mxu0 0.0
  %157 = vmatprep.subr.mxu0 0.0
  %158 = vmatpush1.msra.mxu0 0.0
  %159 = vmatprep.subr.mxu0 0.0
  %160 = vmatpush1.msra.mxu0 0.0
  %161 = vmatprep.subr.mxu0 0.0
  %162 = vmatpush1.msra.mxu0 0.0
  %163 = vmatprep.subr.mxu0 0.0
  %164 = vmatpush1.msra.mxu0 0.0
  %165 = vmatprep.subr.mxu0 0.0
  %166 = vmatpush1.msra.mxu0 0.0
  %167 = vmatprep.subr.mxu0 0.0
  %168 = vmatpush1.msra.mxu0 0.0
  %169 = vmatprep.subr.mxu0 0.0
  %170 = vmatpush1.msra.mxu0 0.0
  %171 = vmatprep.subr.mxu0 0.0
  %172 = vmatpush1.msra.mxu0 0.0
  %173 = vmatprep.subr.mxu0 0.0
  %174 = vmatpush1.msra.mxu0 0.0
  %175 = vmatprep.subr.mxu0 0.0
  %176 = vmatpush1.msra.mxu0 0.0
  %177 = vmatprep.subr.mxu0 0.0
  %178 = vmatpush1.msra.mxu0 0.0
  %179 = vmatprep.subr.mxu0 0.0
  %180 = vmatpush1.msra.mxu0 0.0
  %181 = vmatprep.subr.mxu0 0.0
  %182 = vmatpush1.msra.mxu0 0.0
  %183 = vmatprep.subr.mxu0 0.0
  %184 = vmatpush1.msra.mxu0 0.0
  %185 = vmatprep.subr.mxu0 0.0
  %186 = vmatpush1.msra.mxu0 0.0
  %187 = vmatprep.mubr.f32.mxu0 0.0
  %188 = vmatmul.mubr.f32.gmra.mrb[0].mxu0 %v29
  %v189 = vpop.f32.mrb[0].mxu0
  %v190 = vadd.f32 %v121, %v189
  %v191 = vpop.f32.mrb[0].mxu0
  %192 = vmatprep.mubr.f32.mxu0 0.0
  %193 = vmatmul.mubr.f32.gmra.mrb[0].mxu0 %v32
  %v194 = vpop.f32.mrb[0].mxu0
  %v195 = vadd.f32 %v121, %v194
  %v196 = vpop.f32.mrb[0].mxu0
  %197 = vdwg.mxu0
  %198 = vst.msk [vmem:[%s4] sm:$0xff] %vm109, %v190
  %199 = vst.msk [vmem:[%s4 + $0x8] sm:$0xff] %vm109, %v195
  // Predicated region
  $region14: #{rnn_forward.4} parent=0 // pred_check
    _
  $region15: #{rnn_forward.4} parent=0 // pred_check_branch
    %201 = sbr.rel (0) target = $region17
  $region16: #{rnn_forward.4} parent=0 // pred_region
    _
  $region17: #{rnn_forward.4} parent=0 // pred_fallthru
    _
  // Predicated region
  $region18: #{rnn_forward.4} parent=0 // pred_check
    _
  $region19: #{rnn_forward.4} parent=0 // pred_check_branch
    %203 = sbr.rel (0) target = $region21
  $region20: #{rnn_forward.4} parent=0 // pred_region
    _
  $region21: #{rnn_forward.4} parent=0 // pred_fallthru
    _
  // Predicated region
  $region22: #{rnn_forward.4} parent=0 // pred_check
    _
  $region23: #{rnn_forward.4} parent=0 // pred_check_branch
    %205 = sbr.rel (0) target = $region25
  $region24: #{rnn_forward.4} parent=0 // pred_region
    _
  $region25: #{rnn_forward.4} parent=0 // pred_fallthru
    _
  // Predicated region
  $region26: #{rnn_forward.4} parent=0 // pred_check
    _
  $region27: #{rnn_forward.4} parent=0 // pred_check_branch
    %207 = sbr.rel (0) target = $region29
  $region28: #{rnn_forward.4} parent=0 // pred_region
    _
  $region29: #{rnn_forward.4} parent=0 // pred_fallthru
    _

// kernel: rnn_forward.6
$region0: #{rnn_forward.6}
  #allocation0 [shape = 'u32[]', space=smem, size = 0x4, offset = 0x4, fixed_abs, tag = 'smem constant byte address 0x4 - core index']
  #allocation1 [shape = 'u32[144,128]{1,0:T(1,128)}', space=vmem, size = 0x12000, scoped, tag = 'internal scratch']
  %s0 = inlined_call_operand.vmem [shape: f32[16,32], index: 0, kind: input, shape index: {}]
  %s1 = inlined_call_operand.vmem [shape: f32[16,32], index: 1, kind: input, shape index: {}]
  %s2 = inlined_call_operand.vmem [shape: f32[4,32,32], index: 2, kind: input, shape index: {}]
  %s3 = inlined_call_operand.vmem [shape: f32[2,1,32], index: 3, kind: input, shape index: {}]
  %s4 = inlined_call_operand.vmem [shape: f32[16,32], index: 4, kind: output, shape index: {0}]
  %s5 = inlined_call_operand.vmem [shape: f32[16,32], index: 5, kind: output, shape index: {1}]
  %6 = xla_tuple %s4, %s5
  %s7 = sld [smem:[#allocation0]]
  $region34: #{rnn_forward.6} parent=0
    _
  %s9 = ssub.s32 1, %s7
  %s10 = scalar_select 0, %s9, %s7
  // Predicated region
  $region2: #{rnn_forward.6} parent=0 // pred_check
    _
  $region3: #{rnn_forward.6} parent=0 // pred_check_branch
    %12 = sbr.rel (0) target = $region5
  $region4: #{rnn_forward.6} parent=0 // pred_region
    _
  $region5: #{rnn_forward.6} parent=0 // pred_fallthru
    _
  // Predicated region
  $region6: #{rnn_forward.6} parent=0 // pred_check
    _
  $region7: #{rnn_forward.6} parent=0 // pred_check_branch
    %14 = sbr.rel (0) target = $region9
  $region8: #{rnn_forward.6} parent=0 // pred_region
    _
  $region9: #{rnn_forward.6} parent=0 // pred_fallthru
    _
  // Predicated region
  $region10: #{rnn_forward.6} parent=0 // pred_check
    _
  $region11: #{rnn_forward.6} parent=0 // pred_check_branch
    %16 = sbr.rel (0) target = $region13
  $region12: #{rnn_forward.6} parent=0 // pred_region
    _
  $region13: #{rnn_forward.6} parent=0 // pred_fallthru
    _
  // Predicated region
  $region14: #{rnn_forward.6} parent=0 // pred_check
    _
  $region15: #{rnn_forward.6} parent=0 // pred_check_branch
    %18 = sbr.rel (0) target = $region17
  $region16: #{rnn_forward.6} parent=0 // pred_region
    _
  $region17: #{rnn_forward.6} parent=0 // pred_fallthru
    _
  %v19 = vld [vmem:[%s0] sm:$0xff]
  %v20 = vld [vmem:[%s0 + $0x8] sm:$0xff]
  %v21 = vld [vmem:[%s1] sm:$0xff]
  %v22 = vld [vmem:[%s1 + $0x8] sm:$0xff]
  %v23 = vld [vmem:[%s2] sm:$0xff]
  %v24 = vld [vmem:[%s2 + $0x8] sm:$0xff]
  %v25 = vld [vmem:[%s2 + $0x10] sm:$0xff]
  %v26 = vld [vmem:[%s2 + $0x18] sm:$0xff]
  %s27 = scalar_lea.vmem %s2, 32
  %v28 = vld [vmem:[%s27] sm:$0xff]
  %v29 = vld [vmem:[%s27 + $0x8] sm:$0xff]
  %v30 = vld [vmem:[%s27 + $0x10] sm:$0xff]
  %v31 = vld [vmem:[%s27 + $0x18] sm:$0xff]
  %vm32 = vcmask 261120
  %v34 = vsel %vm32, %v21, 0
  %v37 = vsel %vm32, %v22, 0
  %39 = vmatprep.subr.mxu0 0.0
  %40 = vmatpush1.msra.mxu0 %v28
  %41 = vmatprep.subr.mxu0 0.0
  %42 = vmatpush1.msra.mxu0 %v29
  %43 = vmatprep.subr.mxu0 0.0
  %44 = vmatpush1.msra.mxu0 %v30
  %45 = vmatprep.subr.mxu0 0.0
  %46 = vmatpush1.msra.mxu0 %v31
  %47 = vmatprep.subr.mxu0 0.0
  %48 = vmatpush1.msra.mxu0 0.0
  %49 = vmatprep.subr.mxu0 0.0
  %50 = vmatpush1.msra.mxu0 0.0
  %51 = vmatprep.subr.mxu0 0.0
  %52 = vmatpush1.msra.mxu0 0.0
  %53 = vmatprep.subr.mxu0 0.0
  %54 = vmatpush1.msra.mxu0 0.0
  %55 = vmatprep.subr.mxu0 0.0
  %56 = vmatpush1.msra.mxu0 0.0
  %57 = vmatprep.subr.mxu0 0.0
  %58 = vmatpush1.msra.mxu0 0.0
  %59 = vmatprep.subr.mxu0 0.0
  %60 = vmatpush1.msra.mxu0 0.0
  %61 = vmatprep.subr.mxu0 0.0
  %62 = vmatpush1.msra.mxu0 0.0
  %63 = vmatprep.subr.mxu0 0.0
  %64 = vmatpush1.msra.mxu0 0.0
  %65 = vmatprep.subr.mxu0 0.0
  %66 = vmatpush1.msra.mxu0 0.0
  %67 = vmatprep.subr.mxu0 0.0
  %68 = vmatpush1.msra.mxu0 0.0
  %69 = vmatprep.subr.mxu0 0.0
  %70 = vmatpush1.msra.mxu0 0.0
  %71 = vmatprep.subr.mxu0 0.0
  %72 = vmatpush1.msra.mxu0 0.0
  %73 = vmatprep.subr.mxu0 0.0
  %74 = vmatpush1.msra.mxu0 0.0
  %75 = vmatprep.subr.mxu0 0.0
  %76 = vmatpush1.msra.mxu0 0.0
  %77 = vmatprep.subr.mxu0 0.0
  %78 = vmatpush1.msra.mxu0 0.0
  %79 = vmatprep.subr.mxu0 0.0
  %80 = vmatpush1.msra.mxu0 0.0
  %81 = vmatprep.subr.mxu0 0.0
  %82 = vmatpush1.msra.mxu0 0.0
  %83 = vmatprep.subr.mxu0 0.0
  %84 = vmatpush1.msra.mxu0 0.0
  %85 = vmatprep.subr.mxu0 0.0
  %86 = vmatpush1.msra.mxu0 0.0
  %87 = vmatprep.subr.mxu0 0.0
  %88 = vmatpush1.msra.mxu0 0.0
  %89 = vmatprep.subr.mxu0 0.0
  %90 = vmatpush1.msra.mxu0 0.0
  %91 = vmatprep.subr.mxu0 0.0
  %92 = vmatpush1.msra.mxu0 0.0
  %93 = vmatprep.subr.mxu0 0.0
  %94 = vmatpush1.msra.mxu0 0.0
  %95 = vmatprep.subr.mxu0 0.0
  %96 = vmatpush1.msra.mxu0 0.0
  %97 = vmatprep.subr.mxu0 0.0
  %98 = vmatpush1.msra.mxu0 0.0
  %99 = vmatprep.subr.mxu0 0.0
  %100 = vmatpush1.msra.mxu0 0.0
  %101 = vmatprep.subr.mxu0 0.0
  %102 = vmatpush1.msra.mxu0 0.0
  %103 = vmatprep.mubr.f32.mxu0 0.0
  %104 = vmatmul.mubr.f32.gmra.mrb[0].mxu0 %v34
  %v105 = vpop.f32.mrb[0].mxu0
  %v106 = vadd.f32 0.0, %v105
  %v107 = vpop.f32.mrb[0].mxu0
  %108 = vmatprep.mubr.f32.mxu0 0.0
  %109 = vmatmul.mubr.f32.gmra.mrb[0].mxu0 %v37
  %v110 = vpop.f32.mrb[0].mxu0
  %v111 = vadd.f32 0.0, %v110
  %v112 = vpop.f32.mrb[0].mxu0
  %113 = vdwg.mxu0
  %v115 = vsel %vm32, %v19, 0
  %v118 = vsel %vm32, %v20, 0
  %120 = vmatprep.subr.mxu0 0.0
  %121 = vmatpush1.msra.mxu0 %v23
  %122 = vmatprep.subr.mxu0 0.0
  %123 = vmatpush1.msra.mxu0 %v24
  %124 = vmatprep.subr.mxu0 0.0
  %125 = vmatpush1.msra.mxu0 %v25
  %126 = vmatprep.subr.mxu0 0.0
  %127 = vmatpush1.msra.mxu0 %v26
  %128 = vmatprep.subr.mxu0 0.0
  %129 = vmatpush1.msra.mxu0 0.0
  %130 = vmatprep.subr.mxu0 0.0
  %131 = vmatpush1.msra.mxu0 0.0
  %132 = vmatprep.subr.mxu0 0.0
  %133 = vmatpush1.msra.mxu0 0.0
  %134 = vmatprep.subr.mxu0 0.0
  %135 = vmatpush1.msra.mxu0 0.0
  %136 = vmatprep.subr.mxu0 0.0
  %137 = vmatpush1.msra.mxu0 0.0
  %138 = vmatprep.subr.mxu0 0.0
  %139 = vmatpush1.msra.mxu0 0.0
  %140 = vmatprep.subr.mxu0 0.0
  %141 = vmatpush1.msra.mxu0 0.0
  %142 = vmatprep.subr.mxu0 0.0
  %143 = vmatpush1.msra.mxu0 0.0
  %144 = vmatprep.subr.mxu0 0.0
  %145 = vmatpush1.msra.mxu0 0.0
  %146 = vmatprep.subr.mxu0 0.0
  %147 = vmatpush1.msra.mxu0 0.0
  %148 = vmatprep.subr.mxu0 0.0
  %149 = vmatpush1.msra.mxu0 0.0
  %150 = vmatprep.subr.mxu0 0.0
  %151 = vmatpush1.msra.mxu0 0.0
  %152 = vmatprep.subr.mxu0 0.0
  %153 = vmatpush1.msra.mxu0 0.0
  %154 = vmatprep.subr.mxu0 0.0
  %155 = vmatpush1.msra.mxu0 0.0
  %156 = vmatprep.subr.mxu0 0.0
  %157 = vmatpush1.msra.mxu0 0.0
  %158 = vmatprep.subr.mxu0 0.0
  %159 = vmatpush1.msra.mxu0 0.0
  %160 = vmatprep.subr.mxu0 0.0
  %161 = vmatpush1.msra.mxu0 0.0
  %162 = vmatprep.subr.mxu0 0.0
  %163 = vmatpush1.msra.mxu0 0.0
  %164 = vmatprep.subr.mxu0 0.0
  %165 = vmatpush1.msra.mxu0 0.0
  %166 = vmatprep.subr.mxu0 0.0
  %167 = vmatpush1.msra.mxu0 0.0
  %168 = vmatprep.subr.mxu0 0.0
  %169 = vmatpush1.msra.mxu0 0.0
  %170 = vmatprep.subr.mxu0 0.0
  %171 = vmatpush1.msra.mxu0 0.0
  %172 = vmatprep.subr.mxu0 0.0
  %173 = vmatpush1.msra.mxu0 0.0
  %174 = vmatprep.subr.mxu0 0.0
  %175 = vmatpush1.msra.mxu0 0.0
  %176 = vmatprep.subr.mxu0 0.0
  %177 = vmatpush1.msra.mxu0 0.0
  %178 = vmatprep.subr.mxu0 0.0
  %179 = vmatpush1.msra.mxu0 0.0
  %180 = vmatprep.subr.mxu0 0.0
  %181 = vmatpush1.msra.mxu0 0.0
  %182 = vmatprep.subr.mxu0 0.0
  %183 = vmatpush1.msra.mxu0 0.0
  %184 = vmatprep.mubr.f32.mxu0 0.0
  %185 = vmatmul.mubr.f32.gmra.mrb[0].mxu0 %v115
  %v186 = vpop.f32.mrb[0].mxu0
  %v187 = vadd.f32 %v106, %v186
  %v188 = vpop.f32.mrb[0].mxu0
  %189 = vmatprep.mubr.f32.mxu0 0.0
  %190 = vmatmul.mubr.f32.gmra.mrb[0].mxu0 %v118
  %v191 = vpop.f32.mrb[0].mxu0
  %v192 = vadd.f32 %v111, %v191
  %v193 = vpop.f32.mrb[0].mxu0
  %194 = vdwg.mxu0
  %v195 = vld [vmem:[%s3] sm:$0x1]
  %v197 = vlaneseq
  %v198 = vshrl.u32 %v197, 7
  %v199 = vsub.s32 0, %v198
  %v200 = vrot.slane %v195, %v199
  %v202 = vadd.f32 %v187, %v200
  %v203 = vadd.f32 %v192, %v200
  %204 = vst.msk [vmem:[%s4] sm:$0xff] %vm32, %v202
  %205 = vst.msk [vmem:[%s4 + $0x8] sm:$0xff] %vm32, %v203
  %s206 = scalar_lea.vmem %s2, 64
  %v207 = vld [vmem:[%s206] sm:$0xff]
  %v208 = vld [vmem:[%s206 + $0x8] sm:$0xff]
  %v209 = vld [vmem:[%s206 + $0x10] sm:$0xff]
  %v210 = vld [vmem:[%s206 + $0x18] sm:$0xff]
  %s211 = scalar_lea.vmem %s2, 96
  %v212 = vld [vmem:[%s211] sm:$0xff]
  %v213 = vld [vmem:[%s211 + $0x8] sm:$0xff]
  %v214 = vld [vmem:[%s211 + $0x10] sm:$0xff]
  %v215 = vld [vmem:[%s211 + $0x18] sm:$0xff]
  %216 = vmatprep.subr.mxu0 0.0
  %217 = vmatpush1.msra.mxu0 %v212
  %218 = vmatprep.subr.mxu0 0.0
  %219 = vmatpush1.msra.mxu0 %v213
  %220 = vmatprep.subr.mxu0 0.0
  %221 = vmatpush1.msra.mxu0 %v214
  %222 = vmatprep.subr.mxu0 0.0
  %223 = vmatpush1.msra.mxu0 %v215
  %224 = vmatprep.subr.mxu0 0.0
  %225 = vmatpush1.msra.mxu0 0.0
  %226 = vmatprep.subr.mxu0 0.0
  %227 = vmatpush1.msra.mxu0 0.0
  %228 = vmatprep.subr.mxu0 0.0
  %229 = vmatpush1.msra.mxu0 0.0
  %230 = vmatprep.subr.mxu0 0.0
  %231 = vmatpush1.msra.mxu0 0.0
  %232 = vmatprep.subr.mxu0 0.0
  %233 = vmatpush1.msra.mxu0 0.0
  %234 = vmatprep.subr.mxu0 0.0
  %235 = vmatpush1.msra.mxu0 0.0
  %236 = vmatprep.subr.mxu0 0.0
  %237 = vmatpush1.msra.mxu0 0.0
  %238 = vmatprep.subr.mxu0 0.0
  %239 = vmatpush1.msra.mxu0 0.0
  %240 = vmatprep.subr.mxu0 0.0
  %241 = vmatpush1.msra.mxu0 0.0
  %242 = vmatprep.subr.mxu0 0.0
  %243 = vmatpush1.msra.mxu0 0.0
  %244 = vmatprep.subr.mxu0 0.0
  %245 = vmatpush1.msra.mxu0 0.0
  %246 = vmatprep.subr.mxu0 0.0
  %247 = vmatpush1.msra.mxu0 0.0
  %248 = vmatprep.subr.mxu0 0.0
  %249 = vmatpush1.msra.mxu0 0.0
  %250 = vmatprep.subr.mxu0 0.0
  %251 = vmatpush1.msra.mxu0 0.0
  %252 = vmatprep.subr.mxu0 0.0
  %253 = vmatpush1.msra.mxu0 0.0
  %254 = vmatprep.subr.mxu0 0.0
  %255 = vmatpush1.msra.mxu0 0.0
  %256 = vmatprep.subr.mxu0 0.0
  %257 = vmatpush1.msra.mxu0 0.0
  %258 = vmatprep.subr.mxu0 0.0
  %259 = vmatpush1.msra.mxu0 0.0
  %260 = vmatprep.subr.mxu0 0.0
  %261 = vmatpush1.msra.mxu0 0.0
  %262 = vmatprep.subr.mxu0 0.0
  %263 = vmatpush1.msra.mxu0 0.0
  %264 = vmatprep.subr.mxu0 0.0
  %265 = vmatpush1.msra.mxu0 0.0
  %266 = vmatprep.subr.mxu0 0.0
  %267 = vmatpush1.msra.mxu0 0.0
  %268 = vmatprep.subr.mxu0 0.0
  %269 = vmatpush1.msra.mxu0 0.0
  %270 = vmatprep.subr.mxu0 0.0
  %271 = vmatpush1.msra.mxu0 0.0
  %272 = vmatprep.subr.mxu0 0.0
  %273 = vmatpush1.msra.mxu0 0.0
  %274 = vmatprep.subr.mxu0 0.0
  %275 = vmatpush1.msra.mxu0 0.0
  %276 = vmatprep.subr.mxu0 0.0
  %277 = vmatpush1.msra.mxu0 0.0
  %278 = vmatprep.subr.mxu0 0.0
  %279 = vmatpush1.msra.mxu0 0.0
  %280 = vmatprep.mubr.f32.mxu0 0.0
  %281 = vmatmul.mubr.f32.gmra.mrb[0].mxu0 %v34
  %v282 = vpop.f32.mrb[0].mxu0
  %v283 = vadd.f32 0.0, %v282
  %v284 = vpop.f32.mrb[0].mxu0
  %285 = vmatprep.mubr.f32.mxu0 0.0
  %286 = vmatmul.mubr.f32.gmra.mrb[0].mxu0 %v37
  %v287 = vpop.f32.mrb[0].mxu0
  %v288 = vadd.f32 0.0, %v287
  %v289 = vpop.f32.mrb[0].mxu0
  %290 = vdwg.mxu0
  %291 = vmatprep.subr.mxu0 0.0
  %292 = vmatpush1.msra.mxu0 %v207
  %293 = vmatprep.subr.mxu0 0.0
  %294 = vmatpush1.msra.mxu0 %v208
  %295 = vmatprep.subr.mxu0 0.0
  %296 = vmatpush1.msra.mxu0 %v209
  %297 = vmatprep.subr.mxu0 0.0
  %298 = vmatpush1.msra.mxu0 %v210
  %299 = vmatprep.subr.mxu0 0.0
  %300 = vmatpush1.msra.mxu0 0.0
  %301 = vmatprep.subr.mxu0 0.0
  %302 = vmatpush1.msra.mxu0 0.0
  %303 = vmatprep.subr.mxu0 0.0
  %304 = vmatpush1.msra.mxu0 0.0
  %305 = vmatprep.subr.mxu0 0.0
  %306 = vmatpush1.msra.mxu0 0.0
  %307 = vmatprep.subr.mxu0 0.0
  %308 = vmatpush1.msra.mxu0 0.0
  %309 = vmatprep.subr.mxu0 0.0
  %310 = vmatpush1.msra.mxu0 0.0
  %311 = vmatprep.subr.mxu0 0.0
  %312 = vmatpush1.msra.mxu0 0.0
  %313 = vmatprep.subr.mxu0 0.0
  %314 = vmatpush1.msra.mxu0 0.0
  %315 = vmatprep.subr.mxu0 0.0
  %316 = vmatpush1.msra.mxu0 0.0
  %317 = vmatprep.subr.mxu0 0.0
  %318 = vmatpush1.msra.mxu0 0.0
  %319 = vmatprep.subr.mxu0 0.0
  %320 = vmatpush1.msra.mxu0 0.0
  %321 = vmatprep.subr.mxu0 0.0
  %322 = vmatpush1.msra.mxu0 0.0
  %323 = vmatprep.subr.mxu0 0.0
  %324 = vmatpush1.msra.mxu0 0.0
  %325 = vmatprep.subr.mxu0 0.0
  %326 = vmatpush1.msra.mxu0 0.0
  %327 = vmatprep.subr.mxu0 0.0
  %328 = vmatpush1.msra.mxu0 0.0
  %329 = vmatprep.subr.mxu0 0.0
  %330 = vmatpush1.msra.mxu0 0.0
  %331 = vmatprep.subr.mxu0 0.0
  %332 = vmatpush1.msra.mxu0 0.0
  %333 = vmatprep.subr.mxu0 0.0
  %334 = vmatpush1.msra.mxu0 0.0
  %335 = vmatprep.subr.mxu0 0.0
  %336 = vmatpush1.msra.mxu0 0.0
  %337 = vmatprep.subr.mxu0 0.0
  %338 = vmatpush1.msra.mxu0 0.0
  %339 = vmatprep.subr.mxu0 0.0
  %340 = vmatpush1.msra.mxu0 0.0
  %341 = vmatprep.subr.mxu0 0.0
  %342 = vmatpush1.msra.mxu0 0.0
  %343 = vmatprep.subr.mxu0 0.0
  %344 = vmatpush1.msra.mxu0 0.0
  %345 = vmatprep.subr.mxu0 0.0
  %346 = vmatpush1.msra.mxu0 0.0
  %347 = vmatprep.subr.mxu0 0.0
  %348 = vmatpush1.msra.mxu0 0.0
  %349 = vmatprep.subr.mxu0 0.0
  %350 = vmatpush1.msra.mxu0 0.0
  %351 = vmatprep.subr.mxu0 0.0
  %352 = vmatpush1.msra.mxu0 0.0
  %353 = vmatprep.subr.mxu0 0.0
  %354 = vmatpush1.msra.mxu0 0.0
  %355 = vmatprep.mubr.f32.mxu0 0.0
  %356 = vmatmul.mubr.f32.gmra.mrb[0].mxu0 %v115
  %v357 = vpop.f32.mrb[0].mxu0
  %v358 = vadd.f32 %v283, %v357
  %v359 = vpop.f32.mrb[0].mxu0
  %360 = vmatprep.mubr.f32.mxu0 0.0
  %361 = vmatmul.mubr.f32.gmra.mrb[0].mxu0 %v118
  %v362 = vpop.f32.mrb[0].mxu0
  %v363 = vadd.f32 %v288, %v362
  %v364 = vpop.f32.mrb[0].mxu0
  %365 = vdwg.mxu0
  %s366 = scalar_lea.vmem %s3, 1
  %v367 = vld [vmem:[%s366] sm:$0x1]
  %v369 = vlaneseq
  %v370 = vshrl.u32 %v369, 7
  %v371 = vsub.s32 0, %v370
  %v372 = vrot.slane %v367, %v371
  %v374 = vadd.f32 %v358, %v372
  %v375 = vadd.f32 %v363, %v372
  %376 = vst.msk [vmem:[%s5] sm:$0xff] %vm32, %v374
  %377 = vst.msk [vmem:[%s5 + $0x8] sm:$0xff] %vm32, %v375
  // Predicated region
  $region18: #{rnn_forward.6} parent=0 // pred_check
    _
  $region19: #{rnn_forward.6} parent=0 // pred_check_branch
    %379 = sbr.rel (0) target = $region21
  $region20: #{rnn_forward.6} parent=0 // pred_region
    _
  $region21: #{rnn_forward.6} parent=0 // pred_fallthru
    _
  // Predicated region
  $region22: #{rnn_forward.6} parent=0 // pred_check
    _
  $region23: #{rnn_forward.6} parent=0 // pred_check_branch
    %381 = sbr.rel (0) target = $region25
  $region24: #{rnn_forward.6} parent=0 // pred_region
    _
  $region25: #{rnn_forward.6} parent=0 // pred_fallthru
    _
  // Predicated region
  $region26: #{rnn_forward.6} parent=0 // pred_check
    _
  $region27: #{rnn_forward.6} parent=0 // pred_check_branch
    %383 = sbr.rel (0) target = $region29
  $region28: #{rnn_forward.6} parent=0 // pred_region
    _
  $region29: #{rnn_forward.6} parent=0 // pred_fallthru
    _
  // Predicated region
  $region30: #{rnn_forward.6} parent=0 // pred_check
    _
  $region31: #{rnn_forward.6} parent=0 // pred_check_branch
    %385 = sbr.rel (0) target = $region33
  $region32: #{rnn_forward.6} parent=0 // pred_region
    _
  $region33: #{rnn_forward.6} parent=0 // pred_fallthru
    _

// kernel: rnn_forward.5
$region0: #{rnn_forward.5}
  #allocation0 [shape = 'u32[]', space=smem, size = 0x4, offset = 0x4, fixed_abs, tag = 'smem constant byte address 0x4 - core index']
  #allocation1 [shape = 'u32[144,128]{1,0:T(1,128)}', space=vmem, size = 0x12000, scoped, tag = 'internal scratch']
  %s0 = inlined_call_operand.vmem [shape: f32[8,2,32], index: 0, kind: input, shape index: {}]
  %s1 = inlined_call_operand.vmem [shape: f32[8,2,32], index: 1, kind: input, shape index: {}]
  %s2 = inlined_call_operand.vmem [shape: f32[2,32,32], index: 2, kind: input, shape index: {}]
  %s3 = inlined_call_operand.vmem [shape: f32[8,2,32], index: 3, kind: output, shape index: {0}]
  %s4 = inlined_call_operand.vmem [shape: f32[8,2,32], index: 4, kind: output, shape index: {1}]
  %5 = xla_tuple %s3, %s4
  %s6 = sld [smem:[#allocation0]]
  $region30: #{rnn_forward.5} parent=0
    _
  %s8 = ssub.s32 1, %s6
  %s9 = scalar_select 0, %s8, %s6
  // Predicated region
  $region2: #{rnn_forward.5} parent=0 // pred_check
    _
  $region3: #{rnn_forward.5} parent=0 // pred_check_branch
    %11 = sbr.rel (0) target = $region5
  $region4: #{rnn_forward.5} parent=0 // pred_region
    _
  $region5: #{rnn_forward.5} parent=0 // pred_fallthru
    _
  // Predicated region
  $region6: #{rnn_forward.5} parent=0 // pred_check
    _
  $region7: #{rnn_forward.5} parent=0 // pred_check_branch
    %13 = sbr.rel (0) target = $region9
  $region8: #{rnn_forward.5} parent=0 // pred_region
    _
  $region9: #{rnn_forward.5} parent=0 // pred_fallthru
    _
  // Predicated region
  $region10: #{rnn_forward.5} parent=0 // pred_check
    _
  $region11: #{rnn_forward.5} parent=0 // pred_check_branch
    %15 = sbr.rel (0) target = $region13
  $region12: #{rnn_forward.5} parent=0 // pred_region
    _
  $region13: #{rnn_forward.5} parent=0 // pred_fallthru
    _
  %v16 = vld [vmem:[%s2] sm:$0xff]
  %v17 = vld [vmem:[%s2 + $0x8] sm:$0xff]
  %v18 = vld [vmem:[%s2 + $0x10] sm:$0xff]
  %v19 = vld [vmem:[%s2 + $0x18] sm:$0xff]
  %s20 = scalar_lea.vmem %s2, 32
  %v21 = vld [vmem:[%s20] sm:$0xff]
  %v22 = vld [vmem:[%s20 + $0x8] sm:$0xff]
  %v23 = vld [vmem:[%s20 + $0x10] sm:$0xff]
  %v24 = vld [vmem:[%s20 + $0x18] sm:$0xff]
  %v25 = vld [vmem:[%s0] sm:$0x3]
  %v26 = vtanh.pop %v25
  %s27 = scalar_lea.vmem %s1, 14
  %v28 = vld [vmem:[%s27] sm:$0x3]
  %v29 = vtanh.pop %v28
  %vm30 = vcmask 254976
  %31 = vst.msk [vmem:[%s3] sm:$0x3] %vm30, %v26
  %s32 = scalar_lea.vmem %s4, 14
  %33 = vst.msk [vmem:[%s32] sm:$0x3] %vm30, %v29
  %s34 = scalar_lea.vmem %s0, 2
  %v35 = vld [vmem:[%s34] sm:$0x3]
  %vm36 = vcmask 261120
  %v38 = vsel %vm36, %v26, 0
  %40 = vmatprep.subr.mxu0 0.0
  %41 = vmatpush1.msra.mxu0 %v16
  %42 = vmatprep.subr.mxu0 0.0
  %43 = vmatpush1.msra.mxu0 %v17
  %44 = vmatprep.subr.mxu0 0.0
  %45 = vmatpush1.msra.mxu0 %v18
  %46 = vmatprep.subr.mxu0 0.0
  %47 = vmatpush1.msra.mxu0 %v19
  %48 = vmatprep.subr.mxu0 0.0
  %49 = vmatpush1.msra.mxu0 0.0
  %50 = vmatprep.subr.mxu0 0.0
  %51 = vmatpush1.msra.mxu0 0.0
  %52 = vmatprep.subr.mxu0 0.0
  %53 = vmatpush1.msra.mxu0 0.0
  %54 = vmatprep.subr.mxu0 0.0
  %55 = vmatpush1.msra.mxu0 0.0
  %56 = vmatprep.subr.mxu0 0.0
  %57 = vmatpush1.msra.mxu0 0.0
  %58 = vmatprep.subr.mxu0 0.0
  %59 = vmatpush1.msra.mxu0 0.0
  %60 = vmatprep.subr.mxu0 0.0
  %61 = vmatpush1.msra.mxu0 0.0
  %62 = vmatprep.subr.mxu0 0.0
  %63 = vmatpush1.msra.mxu0 0.0
  %64 = vmatprep.subr.mxu0 0.0
  %65 = vmatpush1.msra.mxu0 0.0
  %66 = vmatprep.subr.mxu0 0.0
  %67 = vmatpush1.msra.mxu0 0.0
  %68 = vmatprep.subr.mxu0 0.0
  %69 = vmatpush1.msra.mxu0 0.0
  %70 = vmatprep.subr.mxu0 0.0
  %71 = vmatpush1.msra.mxu0 0.0
  %72 = vmatprep.subr.mxu0 0.0
  %73 = vmatpush1.msra.mxu0 0.0
  %74 = vmatprep.subr.mxu0 0.0
  %75 = vmatpush1.msra.mxu0 0.0
  %76 = vmatprep.subr.mxu0 0.0
  %77 = vmatpush1.msra.mxu0 0.0
  %78 = vmatprep.subr.mxu0 0.0
  %79 = vmatpush1.msra.mxu0 0.0
  %80 = vmatprep.subr.mxu0 0.0
  %81 = vmatpush1.msra.mxu0 0.0
  %82 = vmatprep.subr.mxu0 0.0
  %83 = vmatpush1.msra.mxu0 0.0
  %84 = vmatprep.subr.mxu0 0.0
  %85 = vmatpush1.msra.mxu0 0.0
  %86 = vmatprep.subr.mxu0 0.0
  %87 = vmatpush1.msra.mxu0 0.0
  %88 = vmatprep.subr.mxu0 0.0
  %89 = vmatpush1.msra.mxu0 0.0
  %90 = vmatprep.subr.mxu0 0.0
  %91 = vmatpush1.msra.mxu0 0.0
  %92 = vmatprep.subr.mxu0 0.0
  %93 = vmatpush1.msra.mxu0 0.0
  %94 = vmatprep.subr.mxu0 0.0
  %95 = vmatpush1.msra.mxu0 0.0
  %96 = vmatprep.subr.mxu0 0.0
  %97 = vmatpush1.msra.mxu0 0.0
  %98 = vmatprep.subr.mxu0 0.0
  %99 = vmatpush1.msra.mxu0 0.0
  %100 = vmatprep.subr.mxu0 0.0
  %101 = vmatpush1.msra.mxu0 0.0
  %102 = vmatprep.subr.mxu0 0.0
  %103 = vmatpush1.msra.mxu0 0.0
  %104 = vmatprep.mubr.f32.mxu0 0.0
  %105 = vmatmul.mubr.f32.gmra.mrb[0].mxu0 %v38
  %v106 = vpop.f32.mrb[0].mxu0
  %v107 = vadd.f32 0.0, %v106
  %v108 = vpop.f32.mrb[0].mxu0
  %109 = vdwg.mxu0
  %v110 = vadd.f32 %v35, %v107
  %v111 = vtanh.pop %v110
  %s112 = scalar_lea.vmem %s1, 12
  %v113 = vld [vmem:[%s112] sm:$0x3]
  %v115 = vsel %vm36, %v29, 0
  %117 = vmatprep.subr.mxu0 0.0
  %118 = vmatpush1.msra.mxu0 %v21
  %119 = vmatprep.subr.mxu0 0.0
  %120 = vmatpush1.msra.mxu0 %v22
  %121 = vmatprep.subr.mxu0 0.0
  %122 = vmatpush1.msra.mxu0 %v23
  %123 = vmatprep.subr.mxu0 0.0
  %124 = vmatpush1.msra.mxu0 %v24
  %125 = vmatprep.subr.mxu0 0.0
  %126 = vmatpush1.msra.mxu0 0.0
  %127 = vmatprep.subr.mxu0 0.0
  %128 = vmatpush1.msra.mxu0 0.0
  %129 = vmatprep.subr.mxu0 0.0
  %130 = vmatpush1.msra.mxu0 0.0
  %131 = vmatprep.subr.mxu0 0.0
  %132 = vmatpush1.msra.mxu0 0.0
  %133 = vmatprep.subr.mxu0 0.0
  %134 = vmatpush1.msra.mxu0 0.0
  %135 = vmatprep.subr.mxu0 0.0
  %136 = vmatpush1.msra.mxu0 0.0
  %137 = vmatprep.subr.mxu0 0.0
  %138 = vmatpush1.msra.mxu0 0.0
  %139 = vmatprep.subr.mxu0 0.0
  %140 = vmatpush1.msra.mxu0 0.0
  %141 = vmatprep.subr.mxu0 0.0
  %142 = vmatpush1.msra.mxu0 0.0
  %143 = vmatprep.subr.mxu0 0.0
  %144 = vmatpush1.msra.mxu0 0.0
  %145 = vmatprep.subr.mxu0 0.0
  %146 = vmatpush1.msra.mxu0 0.0
  %147 = vmatprep.subr.mxu0 0.0
  %148 = vmatpush1.msra.mxu0 0.0
  %149 = vmatprep.subr.mxu0 0.0
  %150 = vmatpush1.msra.mxu0 0.0
  %151 = vmatprep.subr.mxu0 0.0
  %152 = vmatpush1.msra.mxu0 0.0
  %153 = vmatprep.subr.mxu0 0.0
  %154 = vmatpush1.msra.mxu0 0.0
  %155 = vmatprep.subr.mxu0 0.0
  %156 = vmatpush1.msra.mxu0 0.0
  %157 = vmatprep.subr.mxu0 0.0
  %158 = vmatpush1.msra.mxu0 0.0
  %159 = vmatprep.subr.mxu0 0.0
  %160 = vmatpush1.msra.mxu0 0.0
  %161 = vmatprep.subr.mxu0 0.0
  %162 = vmatpush1.msra.mxu0 0.0
  %163 = vmatprep.subr.mxu0 0.0
  %164 = vmatpush1.msra.mxu0 0.0
  %165 = vmatprep.subr.mxu0 0.0
  %166 = vmatpush1.msra.mxu0 0.0
  %167 = vmatprep.subr.mxu0 0.0
  %168 = vmatpush1.msra.mxu0 0.0
  %169 = vmatprep.subr.mxu0 0.0
  %170 = vmatpush1.msra.mxu0 0.0
  %171 = vmatprep.subr.mxu0 0.0
  %172 = vmatpush1.msra.mxu0 0.0
  %173 = vmatprep.subr.mxu0 0.0
  %174 = vmatpush1.msra.mxu0 0.0
  %175 = vmatprep.subr.mxu0 0.0
  %176 = vmatpush1.msra.mxu0 0.0
  %177 = vmatprep.subr.mxu0 0.0
  %178 = vmatpush1.msra.mxu0 0.0
  %179 = vmatprep.subr.mxu0 0.0
  %180 = vmatpush1.msra.mxu0 0.0
  %181 = vmatprep.mubr.f32.mxu0 0.0
  %182 = vmatmul.mubr.f32.gmra.mrb[0].mxu0 %v115
  %v183 = vpop.f32.mrb[0].mxu0
  %v184 = vadd.f32 0.0, %v183
  %v185 = vpop.f32.mrb[0].mxu0
  %186 = vdwg.mxu0
  %v187 = vadd.f32 %v113, %v184
  %v188 = vtanh.pop %v187
  %s189 = scalar_lea.vmem %s3, 2
  %190 = vst.msk [vmem:[%s189] sm:$0x3] %vm30, %v111
  %s191 = scalar_lea.vmem %s4, 12
  %192 = vst.msk [vmem:[%s191] sm:$0x3] %vm30, %v188
  %s193 = scalar_lea.vmem %s0, 4
  %v194 = vld [vmem:[%s193] sm:$0x3]
  %v196 = vsel %vm36, %v111, 0
  %198 = vmatprep.subr.mxu0 0.0
  %199 = vmatpush1.msra.mxu0 %v16
  %200 = vmatprep.subr.mxu0 0.0
  %201 = vmatpush1.msra.mxu0 %v17
  %202 = vmatprep.subr.mxu0 0.0
  %203 = vmatpush1.msra.mxu0 %v18
  %204 = vmatprep.subr.mxu0 0.0
  %205 = vmatpush1.msra.mxu0 %v19
  %206 = vmatprep.subr.mxu0 0.0
  %207 = vmatpush1.msra.mxu0 0.0
  %208 = vmatprep.subr.mxu0 0.0
  %209 = vmatpush1.msra.mxu0 0.0
  %210 = vmatprep.subr.mxu0 0.0
  %211 = vmatpush1.msra.mxu0 0.0
  %212 = vmatprep.subr.mxu0 0.0
  %213 = vmatpush1.msra.mxu0 0.0
  %214 = vmatprep.subr.mxu0 0.0
  %215 = vmatpush1.msra.mxu0 0.0
  %216 = vmatprep.subr.mxu0 0.0
  %217 = vmatpush1.msra.mxu0 0.0
  %218 = vmatprep.subr.mxu0 0.0
  %219 = vmatpush1.msra.mxu0 0.0
  %220 = vmatprep.subr.mxu0 0.0
  %221 = vmatpush1.msra.mxu0 0.0
  %222 = vmatprep.subr.mxu0 0.0
  %223 = vmatpush1.msra.mxu0 0.0
  %224 = vmatprep.subr.mxu0 0.0
  %225 = vmatpush1.msra.mxu0 0.0
  %226 = vmatprep.subr.mxu0 0.0
  %227 = vmatpush1.msra.mxu0 0.0
  %228 = vmatprep.subr.mxu0 0.0
  %229 = vmatpush1.msra.mxu0 0.0
  %230 = vmatprep.subr.mxu0 0.0
  %231 = vmatpush1.msra.mxu0 0.0
  %232 = vmatprep.subr.mxu0 0.0
  %233 = vmatpush1.msra.mxu0 0.0
  %234 = vmatprep.subr.mxu0 0.0
  %235 = vmatpush1.msra.mxu0 0.0
  %236 = vmatprep.subr.mxu0 0.0
  %237 = vmatpush1.msra.mxu0 0.0
  %238 = vmatprep.subr.mxu0 0.0
  %239 = vmatpush1.msra.mxu0 0.0
  %240 = vmatprep.subr.mxu0 0.0
  %241 = vmatpush1.msra.mxu0 0.0
  %242 = vmatprep.subr.mxu0 0.0
  %243 = vmatpush1.msra.mxu0 0.0
  %244 = vmatprep.subr.mxu0 0.0
  %245 = vmatpush1.msra.mxu0 0.0
  %246 = vmatprep.subr.mxu0 0.0
  %247 = vmatpush1.msra.mxu0 0.0
  %248 = vmatprep.subr.mxu0 0.0
  %249 = vmatpush1.msra.mxu0 0.0
  %250 = vmatprep.subr.mxu0 0.0
  %251 = vmatpush1.msra.mxu0 0.0
  %252 = vmatprep.subr.mxu0 0.0
  %253 = vmatpush1.msra.mxu0 0.0
  %254 = vmatprep.subr.mxu0 0.0
  %255 = vmatpush1.msra.mxu0 0.0
  %256 = vmatprep.subr.mxu0 0.0
  %257 = vmatpush1.msra.mxu0 0.0
  %258 = vmatprep.subr.mxu0 0.0
  %259 = vmatpush1.msra.mxu0 0.0
  %260 = vmatprep.subr.mxu0 0.0
  %261 = vmatpush1.msra.mxu0 0.0
  %262 = vmatprep.mubr.f32.mxu0 0.0
  %263 = vmatmul.mubr.f32.gmra.mrb[0].mxu0 %v196
  %v264 = vpop.f32.mrb[0].mxu0
  %v265 = vadd.f32 0.0, %v264
  %v266 = vpop.f32.mrb[0].mxu0
  %267 = vdwg.mxu0
  %v268 = vadd.f32 %v194, %v265
  %v269 = vtanh.pop %v268
  %s270 = scalar_lea.vmem %s1, 10
  %v271 = vld [vmem:[%s270] sm:$0x3]
  %v273 = vsel %vm36, %v188, 0
  %275 = vmatprep.subr.mxu0 0.0
  %276 = vmatpush1.msra.mxu0 %v21
  %277 = vmatprep.subr.mxu0 0.0
  %278 = vmatpush1.msra.mxu0 %v22
  %279 = vmatprep.subr.mxu0 0.0
  %280 = vmatpush1.msra.mxu0 %v23
  %281 = vmatprep.subr.mxu0 0.0
  %282 = vmatpush1.msra.mxu0 %v24
  %283 = vmatprep.subr.mxu0 0.0
  %284 = vmatpush1.msra.mxu0 0.0
  %285 = vmatprep.subr.mxu0 0.0
  %286 = vmatpush1.msra.mxu0 0.0
  %287 = vmatprep.subr.mxu0 0.0
  %288 = vmatpush1.msra.mxu0 0.0
  %289 = vmatprep.subr.mxu0 0.0
  %290 = vmatpush1.msra.mxu0 0.0
  %291 = vmatprep.subr.mxu0 0.0
  %292 = vmatpush1.msra.mxu0 0.0
  %293 = vmatprep.subr.mxu0 0.0
  %294 = vmatpush1.msra.mxu0 0.0
  %295 = vmatprep.subr.mxu0 0.0
  %296 = vmatpush1.msra.mxu0 0.0
  %297 = vmatprep.subr.mxu0 0.0
  %298 = vmatpush1.msra.mxu0 0.0
  %299 = vmatprep.subr.mxu0 0.0
  %300 = vmatpush1.msra.mxu0 0.0
  %301 = vmatprep.subr.mxu0 0.0
  %302 = vmatpush1.msra.mxu0 0.0
  %303 = vmatprep.subr.mxu0 0.0
  %304 = vmatpush1.msra.mxu0 0.0
  %305 = vmatprep.subr.mxu0 0.0
  %306 = vmatpush1.msra.mxu0 0.0
  %307 = vmatprep.subr.mxu0 0.0
  %308 = vmatpush1.msra.mxu0 0.0
  %309 = vmatprep.subr.mxu0 0.0
  %310 = vmatpush1.msra.mxu0 0.0
  %311 = vmatprep.subr.mxu0 0.0
  %312 = vmatpush1.msra.mxu0 0.0
  %313 = vmatprep.subr.mxu0 0.0
  %314 = vmatpush1.msra.mxu0 0.0
  %315 = vmatprep.subr.mxu0 0.0
  %316 = vmatpush1.msra.mxu0 0.0
  %317 = vmatprep.subr.mxu0 0.0
  %318 = vmatpush1.msra.mxu0 0.0
  %319 = vmatprep.subr.mxu0 0.0
  %320 = vmatpush1.msra.mxu0 0.0
  %321 = vmatprep.subr.mxu0 0.0
  %322 = vmatpush1.msra.mxu0 0.0
  %323 = vmatprep.subr.mxu0 0.0
  %324 = vmatpush1.msra.mxu0 0.0
  %325 = vmatprep.subr.mxu0 0.0
  %326 = vmatpush1.msra.mxu0 0.0
  %327 = vmatprep.subr.mxu0 0.0
  %328 = vmatpush1.msra.mxu0 0.0
  %329 = vmatprep.subr.mxu0 0.0
  %330 = vmatpush1.msra.mxu0 0.0
  %331 = vmatprep.subr.mxu0 0.0
  %332 = vmatpush1.msra.mxu0 0.0
  %333 = vmatprep.subr.mxu0 0.0
  %334 = vmatpush1.msra.mxu0 0.0
  %335 = vmatprep.subr.mxu0 0.0
  %336 = vmatpush1.msra.mxu0 0.0
  %337 = vmatprep.subr.mxu0 0.0
  %338 = vmatpush1.msra.mxu0 0.0
  %339 = vmatprep.mubr.f32.mxu0 0.0
  %340 = vmatmul.mubr.f32.gmra.mrb[0].mxu0 %v273
  %v341 = vpop.f32.mrb[0].mxu0
  %v342 = vadd.f32 0.0, %v341
  %v343 = vpop.f32.mrb[0].mxu0
  %344 = vdwg.mxu0
  %v345 = vadd.f32 %v271, %v342
  %v346 = vtanh.pop %v345
  %s347 = scalar_lea.vmem %s3, 4
  %348 = vst.msk [vmem:[%s347] sm:$0x3] %vm30, %v269
  %s349 = scalar_lea.vmem %s4, 10
  %350 = vst.msk [vmem:[%s349] sm:$0x3] %vm30, %v346
  %s351 = scalar_lea.vmem %s0, 6
  %v352 = vld [vmem:[%s351] sm:$0x3]
  %v354 = vsel %vm36, %v269, 0
  %356 = vmatprep.subr.mxu0 0.0
  %357 = vmatpush1.msra.mxu0 %v16
  %358 = vmatprep.subr.mxu0 0.0
  %359 = vmatpush1.msra.mxu0 %v17
  %360 = vmatprep.subr.mxu0 0.0
  %361 = vmatpush1.msra.mxu0 %v18
  %362 = vmatprep.subr.mxu0 0.0
  %363 = vmatpush1.msra.mxu0 %v19
  %364 = vmatprep.subr.mxu0 0.0
  %365 = vmatpush1.msra.mxu0 0.0
  %366 = vmatprep.subr.mxu0 0.0
  %367 = vmatpush1.msra.mxu0 0.0
  %368 = vmatprep.subr.mxu0 0.0
  %369 = vmatpush1.msra.mxu0 0.0
  %370 = vmatprep.subr.mxu0 0.0
  %371 = vmatpush1.msra.mxu0 0.0
  %372 = vmatprep.subr.mxu0 0.0
  %373 = vmatpush1.msra.mxu0 0.0
  %374 = vmatprep.subr.mxu0 0.0
  %375 = vmatpush1.msra.mxu0 0.0
  %376 = vmatprep.subr.mxu0 0.0
  %377 = vmatpush1.msra.mxu0 0.0
  %378 = vmatprep.subr.mxu0 0.0
  %379 = vmatpush1.msra.mxu0 0.0
  %380 = vmatprep.subr.mxu0 0.0
  %381 = vmatpush1.msra.mxu0 0.0
  %382 = vmatprep.subr.mxu0 0.0
  %383 = vmatpush1.msra.mxu0 0.0
  %384 = vmatprep.subr.mxu0 0.0
  %385 = vmatpush1.msra.mxu0 0.0
  %386 = vmatprep.subr.mxu0 0.0
  %387 = vmatpush1.msra.mxu0 0.0
  %388 = vmatprep.subr.mxu0 0.0
  %389 = vmatpush1.msra.mxu0 0.0
  %390 = vmatprep.subr.mxu0 0.0
  %391 = vmatpush1.msra.mxu0 0.0
  %392 = vmatprep.subr.mxu0 0.0
  %393 = vmatpush1.msra.mxu0 0.0
  %394 = vmatprep.subr.mxu0 0.0
  %395 = vmatpush1.msra.mxu0 0.0
  %396 = vmatprep.subr.mxu0 0.0
  %397 = vmatpush1.msra.mxu0 0.0
  %398 = vmatprep.subr.mxu0 0.0
  %399 = vmatpush1.msra.mxu0 0.0
  %400 = vmatprep.subr.mxu0 0.0
  %401 = vmatpush1.msra.mxu0 0.0
  %402 = vmatprep.subr.mxu0 0.0
  %403 = vmatpush1.msra.mxu0 0.0
  %404 = vmatprep.subr.mxu0 0.0
  %405 = vmatpush1.msra.mxu0 0.0
  %406 = vmatprep.subr.mxu0 0.0
  %407 = vmatpush1.msra.mxu0 0.0
  %408 = vmatprep.subr.mxu0 0.0
  %409 = vmatpush1.msra.mxu0 0.0
  %410 = vmatprep.subr.mxu0 0.0
  %411 = vmatpush1.msra.mxu0 0.0
  %412 = vmatprep.subr.mxu0 0.0
  %413 = vmatpush1.msra.mxu0 0.0
  %414 = vmatprep.subr.mxu0 0.0
  %415 = vmatpush1.msra.mxu0 0.0
  %416 = vmatprep.subr.mxu0 0.0
  %417 = vmatpush1.msra.mxu0 0.0
  %418 = vmatprep.subr.mxu0 0.0
  %419 = vmatpush1.msra.mxu0 0.0
  %420 = vmatprep.mubr.f32.mxu0 0.0
  %421 = vmatmul.mubr.f32.gmra.mrb[0].mxu0 %v354
  %v422 = vpop.f32.mrb[0].mxu0
  %v423 = vadd.f32 0.0, %v422
  %v424 = vpop.f32.mrb[0].mxu0
  %425 = vdwg.mxu0
  %v426 = vadd.f32 %v352, %v423
  %v427 = vtanh.pop %v426
  %s428 = scalar_lea.vmem %s1, 8
  %v429 = vld [vmem:[%s428] sm:$0x3]
  %v431 = vsel %vm36, %v346, 0
  %433 = vmatprep.subr.mxu0 0.0
  %434 = vmatpush1.msra.mxu0 %v21
  %435 = vmatprep.subr.mxu0 0.0
  %436 = vmatpush1.msra.mxu0 %v22
  %437 = vmatprep.subr.mxu0 0.0
  %438 = vmatpush1.msra.mxu0 %v23
  %439 = vmatprep.subr.mxu0 0.0
  %440 = vmatpush1.msra.mxu0 %v24
  %441 = vmatprep.subr.mxu0 0.0
  %442 = vmatpush1.msra.mxu0 0.0
  %443 = vmatprep.subr.mxu0 0.0
  %444 = vmatpush1.msra.mxu0 0.0
  %445 = vmatprep.subr.mxu0 0.0
  %446 = vmatpush1.msra.mxu0 0.0
  %447 = vmatprep.subr.mxu0 0.0
  %448 = vmatpush1.msra.mxu0 0.0
  %449 = vmatprep.subr.mxu0 0.0
  %450 = vmatpush1.msra.mxu0 0.0
  %451 = vmatprep.subr.mxu0 0.0
  %452 = vmatpush1.msra.mxu0 0.0
  %453 = vmatprep.subr.mxu0 0.0
  %454 = vmatpush1.msra.mxu0 0.0
  %455 = vmatprep.subr.mxu0 0.0
  %456 = vmatpush1.msra.mxu0 0.0
  %457 = vmatprep.subr.mxu0 0.0
  %458 = vmatpush1.msra.mxu0 0.0
  %459 = vmatprep.subr.mxu0 0.0
  %460 = vmatpush1.msra.mxu0 0.0
  %461 = vmatprep.subr.mxu0 0.0
  %462 = vmatpush1.msra.mxu0 0.0
  %463 = vmatprep.subr.mxu0 0.0
  %464 = vmatpush1.msra.mxu0 0.0
  %465 = vmatprep.subr.mxu0 0.0
  %466 = vmatpush1.msra.mxu0 0.0
  %467 = vmatprep.subr.mxu0 0.0
  %468 = vmatpush1.msra.mxu0 0.0
  %469 = vmatprep.subr.mxu0 0.0
  %470 = vmatpush1.msra.mxu0 0.0
  %471 = vmatprep.subr.mxu0 0.0
  %472 = vmatpush1.msra.mxu0 0.0
  %473 = vmatprep.subr.mxu0 0.0
  %474 = vmatpush1.msra.mxu0 0.0
  %475 = vmatprep.subr.mxu0 0.0
  %476 = vmatpush1.msra.mxu0 0.0
  %477 = vmatprep.subr.mxu0 0.0
  %478 = vmatpush1.msra.mxu0 0.0
  %479 = vmatprep.subr.mxu0 0.0
  %480 = vmatpush1.msra.mxu0 0.0
  %481 = vmatprep.subr.mxu0 0.0
  %482 = vmatpush1.msra.mxu0 0.0
  %483 = vmatprep.subr.mxu0 0.0
  %484 = vmatpush1.msra.mxu0 0.0
  %485 = vmatprep.subr.mxu0 0.0
  %486 = vmatpush1.msra.mxu0 0.0
  %487 = vmatprep.subr.mxu0 0.0
  %488 = vmatpush1.msra.mxu0 0.0
  %489 = vmatprep.subr.mxu0 0.0
  %490 = vmatpush1.msra.mxu0 0.0
  %491 = vmatprep.subr.mxu0 0.0
  %492 = vmatpush1.msra.mxu0 0.0
  %493 = vmatprep.subr.mxu0 0.0
  %494 = vmatpush1.msra.mxu0 0.0
  %495 = vmatprep.subr.mxu0 0.0
  %496 = vmatpush1.msra.mxu0 0.0
  %497 = vmatprep.mubr.f32.mxu0 0.0
  %498 = vmatmul.mubr.f32.gmra.mrb[0].mxu0 %v431
  %v499 = vpop.f32.mrb[0].mxu0
  %v500 = vadd.f32 0.0, %v499
  %v501 = vpop.f32.mrb[0].mxu0
  %502 = vdwg.mxu0
  %v503 = vadd.f32 %v429, %v500
  %v504 = vtanh.pop %v503
  %s505 = scalar_lea.vmem %s3, 6
  %506 = vst.msk [vmem:[%s505] sm:$0x3] %vm30, %v427
  %s507 = scalar_lea.vmem %s4, 8
  %508 = vst.msk [vmem:[%s507] sm:$0x3] %vm30, %v504
  %s509 = scalar_lea.vmem %s0, 8
  %v510 = vld [vmem:[%s509] sm:$0x3]
  %v512 = vsel %vm36, %v427, 0
  %514 = vmatprep.subr.mxu0 0.0
  %515 = vmatpush1.msra.mxu0 %v16
  %516 = vmatprep.subr.mxu0 0.0
  %517 = vmatpush1.msra.mxu0 %v17
  %518 = vmatprep.subr.mxu0 0.0
  %519 = vmatpush1.msra.mxu0 %v18
  %520 = vmatprep.subr.mxu0 0.0
  %521 = vmatpush1.msra.mxu0 %v19
  %522 = vmatprep.subr.mxu0 0.0
  %523 = vmatpush1.msra.mxu0 0.0
  %524 = vmatprep.subr.mxu0 0.0
  %525 = vmatpush1.msra.mxu0 0.0
  %526 = vmatprep.subr.mxu0 0.0
  %527 = vmatpush1.msra.mxu0 0.0
  %528 = vmatprep.subr.mxu0 0.0
  %529 = vmatpush1.msra.mxu0 0.0
  %530 = vmatprep.subr.mxu0 0.0
  %531 = vmatpush1.msra.mxu0 0.0
  %532 = vmatprep.subr.mxu0 0.0
  %533 = vmatpush1.msra.mxu0 0.0
  %534 = vmatprep.subr.mxu0 0.0
  %535 = vmatpush1.msra.mxu0 0.0
  %536 = vmatprep.subr.mxu0 0.0
  %537 = vmatpush1.msra.mxu0 0.0
  %538 = vmatprep.subr.mxu0 0.0
  %539 = vmatpush1.msra.mxu0 0.0
  %540 = vmatprep.subr.mxu0 0.0
  %541 = vmatpush1.msra.mxu0 0.0
  %542 = vmatprep.subr.mxu0 0.0
  %543 = vmatpush1.msra.mxu0 0.0
  %544 = vmatprep.subr.mxu0 0.0
  %545 = vmatpush1.msra.mxu0 0.0
  %546 = vmatprep.subr.mxu0 0.0
  %547 = vmatpush1.msra.mxu0 0.0
  %548 = vmatprep.subr.mxu0 0.0
  %549 = vmatpush1.msra.mxu0 0.0
  %550 = vmatprep.subr.mxu0 0.0
  %551 = vmatpush1.msra.mxu0 0.0
  %552 = vmatprep.subr.mxu0 0.0
  %553 = vmatpush1.msra.mxu0 0.0
  %554 = vmatprep.subr.mxu0 0.0
  %555 = vmatpush1.msra.mxu0 0.0
  %556 = vmatprep.subr.mxu0 0.0
  %557 = vmatpush1.msra.mxu0 0.0
  %558 = vmatprep.subr.mxu0 0.0
  %559 = vmatpush1.msra.mxu0 0.0
  %560 = vmatprep.subr.mxu0 0.0
  %561 = vmatpush1.msra.mxu0 0.0
  %562 = vmatprep.subr.mxu0 0.0
  %563 = vmatpush1.msra.mxu0 0.0
  %564 = vmatprep.subr.mxu0 0.0
  %565 = vmatpush1.msra.mxu0 0.0
  %566 = vmatprep.subr.mxu0 0.0
  %567 = vmatpush1.msra.mxu0 0.0
  %568 = vmatprep.subr.mxu0 0.0
  %569 = vmatpush1.msra.mxu0 0.0
  %570 = vmatprep.subr.mxu0 0.0
  %571 = vmatpush1.msra.mxu0 0.0
  %572 = vmatprep.subr.mxu0 0.0
  %573 = vmatpush1.msra.mxu0 0.0
  %574 = vmatprep.subr.mxu0 0.0
  %575 = vmatpush1.msra.mxu0 0.0
  %576 = vmatprep.subr.mxu0 0.0
  %577 = vmatpush1.msra.mxu0 0.0
  %578 = vmatprep.mubr.f32.mxu0 0.0
  %579 = vmatmul.mubr.f32.gmra.mrb[0].mxu0 %v512
  %v580 = vpop.f32.mrb[0].mxu0
  %v581 = vadd.f32 0.0, %v580
  %v582 = vpop.f32.mrb[0].mxu0
  %583 = vdwg.mxu0
  %v584 = vadd.f32 %v510, %v581
  %v585 = vtanh.pop %v584
  %s586 = scalar_lea.vmem %s1, 6
  %v587 = vld [vmem:[%s586] sm:$0x3]
  %v589 = vsel %vm36, %v504, 0
  %591 = vmatprep.subr.mxu0 0.0
  %592 = vmatpush1.msra.mxu0 %v21
  %593 = vmatprep.subr.mxu0 0.0
  %594 = vmatpush1.msra.mxu0 %v22
  %595 = vmatprep.subr.mxu0 0.0
  %596 = vmatpush1.msra.mxu0 %v23
  %597 = vmatprep.subr.mxu0 0.0
  %598 = vmatpush1.msra.mxu0 %v24
  %599 = vmatprep.subr.mxu0 0.0
  %600 = vmatpush1.msra.mxu0 0.0
  %601 = vmatprep.subr.mxu0 0.0
  %602 = vmatpush1.msra.mxu0 0.0
  %603 = vmatprep.subr.mxu0 0.0
  %604 = vmatpush1.msra.mxu0 0.0
  %605 = vmatprep.subr.mxu0 0.0
  %606 = vmatpush1.msra.mxu0 0.0
  %607 = vmatprep.subr.mxu0 0.0
  %608 = vmatpush1.msra.mxu0 0.0
  %609 = vmatprep.subr.mxu0 0.0
  %610 = vmatpush1.msra.mxu0 0.0
  %611 = vmatprep.subr.mxu0 0.0
  %612 = vmatpush1.msra.mxu0 0.0
  %613 = vmatprep.subr.mxu0 0.0
  %614 = vmatpush1.msra.mxu0 0.0
  %615 = vmatprep.subr.mxu0 0.0
  %616 = vmatpush1.msra.mxu0 0.0
  %617 = vmatprep.subr.mxu0 0.0
  %618 = vmatpush1.msra.mxu0 0.0
  %619 = vmatprep.subr.mxu0 0.0
  %620 = vmatpush1.msra.mxu0 0.0
  %621 = vmatprep.subr.mxu0 0.0
  %622 = vmatpush1.msra.mxu0 0.0
  %623 = vmatprep.subr.mxu0 0.0
  %624 = vmatpush1.msra.mxu0 0.0
  %625 = vmatprep.subr.mxu0 0.0
  %626 = vmatpush1.msra.mxu0 0.0
  %627 = vmatprep.subr.mxu0 0.0
  %628 = vmatpush1.msra.mxu0 0.0
  %629 = vmatprep.subr.mxu0 0.0
  %630 = vmatpush1.msra.mxu0 0.0
  %631 = vmatprep.subr.mxu0 0.0
  %632 = vmatpush1.msra.mxu0 0.0
  %633 = vmatprep.subr.mxu0 0.0
  %634 = vmatpush1.msra.mxu0 0.0
  %635 = vmatprep.subr.mxu0 0.0
  %636 = vmatpush1.msra.mxu0 0.0
  %637 = vmatprep.subr.mxu0 0.0
  %638 = vmatpush1.msra.mxu0 0.0
  %639 = vmatprep.subr.mxu0 0.0
  %640 = vmatpush1.msra.mxu0 0.0
  %641 = vmatprep.subr.mxu0 0.0
  %642 = vmatpush1.msra.mxu0 0.0
  %643 = vmatprep.subr.mxu0 0.0
  %644 = vmatpush1.msra.mxu0 0.0
  %645 = vmatprep.subr.mxu0 0.0
  %646 = vmatpush1.msra.mxu0 0.0
  %647 = vmatprep.subr.mxu0 0.0
  %648 = vmatpush1.msra.mxu0 0.0
  %649 = vmatprep.subr.mxu0 0.0
  %650 = vmatpush1.msra.mxu0 0.0
  %651 = vmatprep.subr.mxu0 0.0
  %652 = vmatpush1.msra.mxu0 0.0
  %653 = vmatprep.subr.mxu0 0.0
  %654 = vmatpush1.msra.mxu0 0.0
  %655 = vmatprep.mubr.f32.mxu0 0.0
  %656 = vmatmul.mubr.f32.gmra.mrb[0].mxu0 %v589
  %v657 = vpop.f32.mrb[0].mxu0
  %v658 = vadd.f32 0.0, %v657
  %v659 = vpop.f32.mrb[0].mxu0
  %660 = vdwg.mxu0
  %v661 = vadd.f32 %v587, %v658
  %v662 = vtanh.pop %v661
  %s663 = scalar_lea.vmem %s3, 8
  %664 = vst.msk [vmem:[%s663] sm:$0x3] %vm30, %v585
  %s665 = scalar_lea.vmem %s4, 6
  %666 = vst.msk [vmem:[%s665] sm:$0x3] %vm30, %v662
  %s667 = scalar_lea.vmem %s0, 10
  %v668 = vld [vmem:[%s667] sm:$0x3]
  %v670 = vsel %vm36, %v585, 0
  %672 = vmatprep.subr.mxu0 0.0
  %673 = vmatpush1.msra.mxu0 %v16
  %674 = vmatprep.subr.mxu0 0.0
  %675 = vmatpush1.msra.mxu0 %v17
  %676 = vmatprep.subr.mxu0 0.0
  %677 = vmatpush1.msra.mxu0 %v18
  %678 = vmatprep.subr.mxu0 0.0
  %679 = vmatpush1.msra.mxu0 %v19
  %680 = vmatprep.subr.mxu0 0.0
  %681 = vmatpush1.msra.mxu0 0.0
  %682 = vmatprep.subr.mxu0 0.0
  %683 = vmatpush1.msra.mxu0 0.0
  %684 = vmatprep.subr.mxu0 0.0
  %685 = vmatpush1.msra.mxu0 0.0
  %686 = vmatprep.subr.mxu0 0.0
  %687 = vmatpush1.msra.mxu0 0.0
  %688 = vmatprep.subr.mxu0 0.0
  %689 = vmatpush1.msra.mxu0 0.0
  %690 = vmatprep.subr.mxu0 0.0
  %691 = vmatpush1.msra.mxu0 0.0
  %692 = vmatprep.subr.mxu0 0.0
  %693 = vmatpush1.msra.mxu0 0.0
  %694 = vmatprep.subr.mxu0 0.0
  %695 = vmatpush1.msra.mxu0 0.0
  %696 = vmatprep.subr.mxu0 0.0
  %697 = vmatpush1.msra.mxu0 0.0
  %698 = vmatprep.subr.mxu0 0.0
  %699 = vmatpush1.msra.mxu0 0.0
  %700 = vmatprep.subr.mxu0 0.0
  %701 = vmatpush1.msra.mxu0 0.0
  %702 = vmatprep.subr.mxu0 0.0
  %703 = vmatpush1.msra.mxu0 0.0
  %704 = vmatprep.subr.mxu0 0.0
  %705 = vmatpush1.msra.mxu0 0.0
  %706 = vmatprep.subr.mxu0 0.0
  %707 = vmatpush1.msra.mxu0 0.0
  %708 = vmatprep.subr.mxu0 0.0
  %709 = vmatpush1.msra.mxu0 0.0
  %710 = vmatprep.subr.mxu0 0.0
  %711 = vmatpush1.msra.mxu0 0.0
  %712 = vmatprep.subr.mxu0 0.0
  %713 = vmatpush1.msra.mxu0 0.0
  %714 = vmatprep.subr.mxu0 0.0
  %715 = vmatpush1.msra.mxu0 0.0
  %716 = vmatprep.subr.mxu0 0.0
  %717 = vmatpush1.msra.mxu0 0.0
  %718 = vmatprep.subr.mxu0 0.0
  %719 = vmatpush1.msra.mxu0 0.0
  %720 = vmatprep.subr.mxu0 0.0
  %721 = vmatpush1.msra.mxu0 0.0
  %722 = vmatprep.subr.mxu0 0.0
  %723 = vmatpush1.msra.mxu0 0.0
  %724 = vmatprep.subr.mxu0 0.0
  %725 = vmatpush1.msra.mxu0 0.0
  %726 = vmatprep.subr.mxu0 0.0
  %727 = vmatpush1.msra.mxu0 0.0
  %728 = vmatprep.subr.mxu0 0.0
  %729 = vmatpush1.msra.mxu0 0.0
  %730 = vmatprep.subr.mxu0 0.0
  %731 = vmatpush1.msra.mxu0 0.0
  %732 = vmatprep.subr.mxu0 0.0
  %733 = vmatpush1.msra.mxu0 0.0
  %734 = vmatprep.subr.mxu0 0.0
  %735 = vmatpush1.msra.mxu0 0.0
  %736 = vmatprep.mubr.f32.mxu0 0.0
  %737 = vmatmul.mubr.f32.gmra.mrb[0].mxu0 %v670
  %v738 = vpop.f32.mrb[0].mxu0
  %v739 = vadd.f32 0.0, %v738
  %v740 = vpop.f32.mrb[0].mxu0
  %741 = vdwg.mxu0
  %v742 = vadd.f32 %v668, %v739
  %v743 = vtanh.pop %v742
  %s744 = scalar_lea.vmem %s1, 4
  %v745 = vld [vmem:[%s744] sm:$0x3]
  %v747 = vsel %vm36, %v662, 0
  %749 = vmatprep.subr.mxu0 0.0
  %750 = vmatpush1.msra.mxu0 %v21
  %751 = vmatprep.subr.mxu0 0.0
  %752 = vmatpush1.msra.mxu0 %v22
  %753 = vmatprep.subr.mxu0 0.0
  %754 = vmatpush1.msra.mxu0 %v23
  %755 = vmatprep.subr.mxu0 0.0
  %756 = vmatpush1.msra.mxu0 %v24
  %757 = vmatprep.subr.mxu0 0.0
  %758 = vmatpush1.msra.mxu0 0.0
  %759 = vmatprep.subr.mxu0 0.0
  %760 = vmatpush1.msra.mxu0 0.0
  %761 = vmatprep.subr.mxu0 0.0
  %762 = vmatpush1.msra.mxu0 0.0
  %763 = vmatprep.subr.mxu0 0.0
  %764 = vmatpush1.msra.mxu0 0.0
  %765 = vmatprep.subr.mxu0 0.0
  %766 = vmatpush1.msra.mxu0 0.0
  %767 = vmatprep.subr.mxu0 0.0
  %768 = vmatpush1.msra.mxu0 0.0
  %769 = vmatprep.subr.mxu0 0.0
  %770 = vmatpush1.msra.mxu0 0.0
  %771 = vmatprep.subr.mxu0 0.0
  %772 = vmatpush1.msra.mxu0 0.0
  %773 = vmatprep.subr.mxu0 0.0
  %774 = vmatpush1.msra.mxu0 0.0
  %775 = vmatprep.subr.mxu0 0.0
  %776 = vmatpush1.msra.mxu0 0.0
  %777 = vmatprep.subr.mxu0 0.0
  %778 = vmatpush1.msra.mxu0 0.0
  %779 = vmatprep.subr.mxu0 0.0
  %780 = vmatpush1.msra.mxu0 0.0
  %781 = vmatprep.subr.mxu0 0.0
  %782 = vmatpush1.msra.mxu0 0.0
  %783 = vmatprep.subr.mxu0 0.0
  %784 = vmatpush1.msra.mxu0 0.0
  %785 = vmatprep.subr.mxu0 0.0
  %786 = vmatpush1.msra.mxu0 0.0
  %787 = vmatprep.subr.mxu0 0.0
  %788 = vmatpush1.msra.mxu0 0.0
  %789 = vmatprep.subr.mxu0 0.0
  %790 = vmatpush1.msra.mxu0 0.0
  %791 = vmatprep.subr.mxu0 0.0
  %792 = vmatpush1.msra.mxu0 0.0
  %793 = vmatprep.subr.mxu0 0.0
  %794 = vmatpush1.msra.mxu0 0.0
  %795 = vmatprep.subr.mxu0 0.0
  %796 = vmatpush1.msra.mxu0 0.0
  %797 = vmatprep.subr.mxu0 0.0
  %798 = vmatpush1.msra.mxu0 0.0
  %799 = vmatprep.subr.mxu0 0.0
  %800 = vmatpush1.msra.mxu0 0.0
  %801 = vmatprep.subr.mxu0 0.0
  %802 = vmatpush1.msra.mxu0 0.0
  %803 = vmatprep.subr.mxu0 0.0
  %804 = vmatpush1.msra.mxu0 0.0
  %805 = vmatprep.subr.mxu0 0.0
  %806 = vmatpush1.msra.mxu0 0.0
  %807 = vmatprep.subr.mxu0 0.0
  %808 = vmatpush1.msra.mxu0 0.0
  %809 = vmatprep.subr.mxu0 0.0
  %810 = vmatpush1.msra.mxu0 0.0
  %811 = vmatprep.subr.mxu0 0.0
  %812 = vmatpush1.msra.mxu0 0.0
  %813 = vmatprep.mubr.f32.mxu0 0.0
  %814 = vmatmul.mubr.f32.gmra.mrb[0].mxu0 %v747
  %v815 = vpop.f32.mrb[0].mxu0
  %v816 = vadd.f32 0.0, %v815
  %v817 = vpop.f32.mrb[0].mxu0
  %818 = vdwg.mxu0
  %v819 = vadd.f32 %v745, %v816
  %v820 = vtanh.pop %v819
  %s821 = scalar_lea.vmem %s3, 10
  %822 = vst.msk [vmem:[%s821] sm:$0x3] %vm30, %v743
  %s823 = scalar_lea.vmem %s4, 4
  %824 = vst.msk [vmem:[%s823] sm:$0x3] %vm30, %v820
  %s825 = scalar_lea.vmem %s0, 12
  %v826 = vld [vmem:[%s825] sm:$0x3]
  %v828 = vsel %vm36, %v743, 0
  %830 = vmatprep.subr.mxu0 0.0
  %831 = vmatpush1.msra.mxu0 %v16
  %832 = vmatprep.subr.mxu0 0.0
  %833 = vmatpush1.msra.mxu0 %v17
  %834 = vmatprep.subr.mxu0 0.0
  %835 = vmatpush1.msra.mxu0 %v18
  %836 = vmatprep.subr.mxu0 0.0
  %837 = vmatpush1.msra.mxu0 %v19
  %838 = vmatprep.subr.mxu0 0.0
  %839 = vmatpush1.msra.mxu0 0.0
  %840 = vmatprep.subr.mxu0 0.0
  %841 = vmatpush1.msra.mxu0 0.0
  %842 = vmatprep.subr.mxu0 0.0
  %843 = vmatpush1.msra.mxu0 0.0
  %844 = vmatprep.subr.mxu0 0.0
  %845 = vmatpush1.msra.mxu0 0.0
  %846 = vmatprep.subr.mxu0 0.0
  %847 = vmatpush1.msra.mxu0 0.0
  %848 = vmatprep.subr.mxu0 0.0
  %849 = vmatpush1.msra.mxu0 0.0
  %850 = vmatprep.subr.mxu0 0.0
  %851 = vmatpush1.msra.mxu0 0.0
  %852 = vmatprep.subr.mxu0 0.0
  %853 = vmatpush1.msra.mxu0 0.0
  %854 = vmatprep.subr.mxu0 0.0
  %855 = vmatpush1.msra.mxu0 0.0
  %856 = vmatprep.subr.mxu0 0.0
  %857 = vmatpush1.msra.mxu0 0.0
  %858 = vmatprep.subr.mxu0 0.0
  %859 = vmatpush1.msra.mxu0 0.0
  %860 = vmatprep.subr.mxu0 0.0
  %861 = vmatpush1.msra.mxu0 0.0
  %862 = vmatprep.subr.mxu0 0.0
  %863 = vmatpush1.msra.mxu0 0.0
  %864 = vmatprep.subr.mxu0 0.0
  %865 = vmatpush1.msra.mxu0 0.0
  %866 = vmatprep.subr.mxu0 0.0
  %867 = vmatpush1.msra.mxu0 0.0
  %868 = vmatprep.subr.mxu0 0.0
  %869 = vmatpush1.msra.mxu0 0.0
  %870 = vmatprep.subr.mxu0 0.0
  %871 = vmatpush1.msra.mxu0 0.0
  %872 = vmatprep.subr.mxu0 0.0
  %873 = vmatpush1.msra.mxu0 0.0
  %874 = vmatprep.subr.mxu0 0.0
  %875 = vmatpush1.msra.mxu0 0.0
  %876 = vmatprep.subr.mxu0 0.0
  %877 = vmatpush1.msra.mxu0 0.0
  %878 = vmatprep.subr.mxu0 0.0
  %879 = vmatpush1.msra.mxu0 0.0
  %880 = vmatprep.subr.mxu0 0.0
  %881 = vmatpush1.msra.mxu0 0.0
  %882 = vmatprep.subr.mxu0 0.0
  %883 = vmatpush1.msra.mxu0 0.0
  %884 = vmatprep.subr.mxu0 0.0
  %885 = vmatpush1.msra.mxu0 0.0
  %886 = vmatprep.subr.mxu0 0.0
  %887 = vmatpush1.msra.mxu0 0.0
  %888 = vmatprep.subr.mxu0 0.0
  %889 = vmatpush1.msra.mxu0 0.0
  %890 = vmatprep.subr.mxu0 0.0
  %891 = vmatpush1.msra.mxu0 0.0
  %892 = vmatprep.subr.mxu0 0.0
  %893 = vmatpush1.msra.mxu0 0.0
  %894 = vmatprep.mubr.f32.mxu0 0.0
  %895 = vmatmul.mubr.f32.gmra.mrb[0].mxu0 %v828
  %v896 = vpop.f32.mrb[0].mxu0
  %v897 = vadd.f32 0.0, %v896
  %v898 = vpop.f32.mrb[0].mxu0
  %899 = vdwg.mxu0
  %v900 = vadd.f32 %v826, %v897
  %v901 = vtanh.pop %v900
  %s902 = scalar_lea.vmem %s1, 2
  %v903 = vld [vmem:[%s902] sm:$0x3]
  %v905 = vsel %vm36, %v820, 0
  %907 = vmatprep.subr.mxu0 0.0
  %908 = vmatpush1.msra.mxu0 %v21
  %909 = vmatprep.subr.mxu0 0.0
  %910 = vmatpush1.msra.mxu0 %v22
  %911 = vmatprep.subr.mxu0 0.0
  %912 = vmatpush1.msra.mxu0 %v23
  %913 = vmatprep.subr.mxu0 0.0
  %914 = vmatpush1.msra.mxu0 %v24
  %915 = vmatprep.subr.mxu0 0.0
  %916 = vmatpush1.msra.mxu0 0.0
  %917 = vmatprep.subr.mxu0 0.0
  %918 = vmatpush1.msra.mxu0 0.0
  %919 = vmatprep.subr.mxu0 0.0
  %920 = vmatpush1.msra.mxu0 0.0
  %921 = vmatprep.subr.mxu0 0.0
  %922 = vmatpush1.msra.mxu0 0.0
  %923 = vmatprep.subr.mxu0 0.0
  %924 = vmatpush1.msra.mxu0 0.0
  %925 = vmatprep.subr.mxu0 0.0
  %926 = vmatpush1.msra.mxu0 0.0
  %927 = vmatprep.subr.mxu0 0.0
  %928 = vmatpush1.msra.mxu0 0.0
  %929 = vmatprep.subr.mxu0 0.0
  %930 = vmatpush1.msra.mxu0 0.0
  %931 = vmatprep.subr.mxu0 0.0
  %932 = vmatpush1.msra.mxu0 0.0
  %933 = vmatprep.subr.mxu0 0.0
  %934 = vmatpush1.msra.mxu0 0.0
  %935 = vmatprep.subr.mxu0 0.0
  %936 = vmatpush1.msra.mxu0 0.0
  %937 = vmatprep.subr.mxu0 0.0
  %938 = vmatpush1.msra.mxu0 0.0
  %939 = vmatprep.subr.mxu0 0.0
  %940 = vmatpush1.msra.mxu0 0.0
  %941 = vmatprep.subr.mxu0 0.0
  %942 = vmatpush1.msra.mxu0 0.0
  %943 = vmatprep.subr.mxu0 0.0
  %944 = vmatpush1.msra.mxu0 0.0
  %945 = vmatprep.subr.mxu0 0.0
  %946 = vmatpush1.msra.mxu0 0.0
  %947 = vmatprep.subr.mxu0 0.0
  %948 = vmatpush1.msra.mxu0 0.0
  %949 = vmatprep.subr.mxu0 0.0
  %950 = vmatpush1.msra.mxu0 0.0
  %951 = vmatprep.subr.mxu0 0.0
  %952 = vmatpush1.msra.mxu0 0.0
  %953 = vmatprep.subr.mxu0 0.0
  %954 = vmatpush1.msra.mxu0 0.0
  %955 = vmatprep.subr.mxu0 0.0
  %956 = vmatpush1.msra.mxu0 0.0
  %957 = vmatprep.subr.mxu0 0.0
  %958 = vmatpush1.msra.mxu0 0.0
  %959 = vmatprep.subr.mxu0 0.0
  %960 = vmatpush1.msra.mxu0 0.0
  %961 = vmatprep.subr.mxu0 0.0
  %962 = vmatpush1.msra.mxu0 0.0
  %963 = vmatprep.subr.mxu0 0.0
  %964 = vmatpush1.msra.mxu0 0.0
  %965 = vmatprep.subr.mxu0 0.0
  %966 = vmatpush1.msra.mxu0 0.0
  %967 = vmatprep.subr.mxu0 0.0
  %968 = vmatpush1.msra.mxu0 0.0
  %969 = vmatprep.subr.mxu0 0.0
  %970 = vmatpush1.msra.mxu0 0.0
  %971 = vmatprep.mubr.f32.mxu0 0.0
  %972 = vmatmul.mubr.f32.gmra.mrb[0].mxu0 %v905
  %v973 = vpop.f32.mrb[0].mxu0
  %v974 = vadd.f32 0.0, %v973
  %v975 = vpop.f32.mrb[0].mxu0
  %976 = vdwg.mxu0
  %v977 = vadd.f32 %v903, %v974
  %v978 = vtanh.pop %v977
  %s979 = scalar_lea.vmem %s3, 12
  %980 = vst.msk [vmem:[%s979] sm:$0x3] %vm30, %v901
  %s981 = scalar_lea.vmem %s4, 2
  %982 = vst.msk [vmem:[%s981] sm:$0x3] %vm30, %v978
  %s983 = scalar_lea.vmem %s0, 14
  %v984 = vld [vmem:[%s983] sm:$0x3]
  %v986 = vsel %vm36, %v901, 0
  %988 = vmatprep.subr.mxu0 0.0
  %989 = vmatpush1.msra.mxu0 %v16
  %990 = vmatprep.subr.mxu0 0.0
  %991 = vmatpush1.msra.mxu0 %v17
  %992 = vmatprep.subr.mxu0 0.0
  %993 = vmatpush1.msra.mxu0 %v18
  %994 = vmatprep.subr.mxu0 0.0
  %995 = vmatpush1.msra.mxu0 %v19
  %996 = vmatprep.subr.mxu0 0.0
  %997 = vmatpush1.msra.mxu0 0.0
  %998 = vmatprep.subr.mxu0 0.0
  %999 = vmatpush1.msra.mxu0 0.0
  %1000 = vmatprep.subr.mxu0 0.0
  %1001 = vmatpush1.msra.mxu0 0.0
  %1002 = vmatprep.subr.mxu0 0.0
  %1003 = vmatpush1.msra.mxu0 0.0
  %1004 = vmatprep.subr.mxu0 0.0
  %1005 = vmatpush1.msra.mxu0 0.0
  %1006 = vmatprep.subr.mxu0 0.0
  %1007 = vmatpush1.msra.mxu0 0.0
  %1008 = vmatprep.subr.mxu0 0.0
  %1009 = vmatpush1.msra.mxu0 0.0
  %1010 = vmatprep.subr.mxu0 0.0
  %1011 = vmatpush1.msra.mxu0 0.0
  %1012 = vmatprep.subr.mxu0 0.0
  %1013 = vmatpush1.msra.mxu0 0.0
  %1014 = vmatprep.subr.mxu0 0.0
  %1015 = vmatpush1.msra.mxu0 0.0
  %1016 = vmatprep.subr.mxu0 0.0
  %1017 = vmatpush1.msra.mxu0 0.0
  %1018 = vmatprep.subr.mxu0 0.0
  %1019 = vmatpush1.msra.mxu0 0.0
  %1020 = vmatprep.subr.mxu0 0.0
  %1021 = vmatpush1.msra.mxu0 0.0
  %1022 = vmatprep.subr.mxu0 0.0
  %1023 = vmatpush1.msra.mxu0 0.0
  %1024 = vmatprep.subr.mxu0 0.0
  %1025 = vmatpush1.msra.mxu0 0.0
  %1026 = vmatprep.subr.mxu0 0.0
  %1027 = vmatpush1.msra.mxu0 0.0
  %1028 = vmatprep.subr.mxu0 0.0
  %1029 = vmatpush1.msra.mxu0 0.0
  %1030 = vmatprep.subr.mxu0 0.0
  %1031 = vmatpush1.msra.mxu0 0.0
  %1032 = vmatprep.subr.mxu0 0.0
  %1033 = vmatpush1.msra.mxu0 0.0
  %1034 = vmatprep.subr.mxu0 0.0
  %1035 = vmatpush1.msra.mxu0 0.0
  %1036 = vmatprep.subr.mxu0 0.0
  %1037 = vmatpush1.msra.mxu0 0.0
  %1038 = vmatprep.subr.mxu0 0.0
  %1039 = vmatpush1.msra.mxu0 0.0
  %1040 = vmatprep.subr.mxu0 0.0
  %1041 = vmatpush1.msra.mxu0 0.0
  %1042 = vmatprep.subr.mxu0 0.0
  %1043 = vmatpush1.msra.mxu0 0.0
  %1044 = vmatprep.subr.mxu0 0.0
  %1045 = vmatpush1.msra.mxu0 0.0
  %1046 = vmatprep.subr.mxu0 0.0
  %1047 = vmatpush1.msra.mxu0 0.0
  %1048 = vmatprep.subr.mxu0 0.0
  %1049 = vmatpush1.msra.mxu0 0.0
  %1050 = vmatprep.subr.mxu0 0.0
  %1051 = vmatpush1.msra.mxu0 0.0
  %1052 = vmatprep.mubr.f32.mxu0 0.0
  %1053 = vmatmul.mubr.f32.gmra.mrb[0].mxu0 %v986
  %v1054 = vpop.f32.mrb[0].mxu0
  %v1055 = vadd.f32 0.0, %v1054
  %v1056 = vpop.f32.mrb[0].mxu0
  %1057 = vdwg.mxu0
  %v1058 = vadd.f32 %v984, %v1055
  %v1059 = vtanh.pop %v1058
  %v1060 = vld [vmem:[%s1] sm:$0x3]
  %v1062 = vsel %vm36, %v978, 0
  %1064 = vmatprep.subr.mxu0 0.0
  %1065 = vmatpush1.msra.mxu0 %v21
  %1066 = vmatprep.subr.mxu0 0.0
  %1067 = vmatpush1.msra.mxu0 %v22
  %1068 = vmatprep.subr.mxu0 0.0
  %1069 = vmatpush1.msra.mxu0 %v23
  %1070 = vmatprep.subr.mxu0 0.0
  %1071 = vmatpush1.msra.mxu0 %v24
  %1072 = vmatprep.subr.mxu0 0.0
  %1073 = vmatpush1.msra.mxu0 0.0
  %1074 = vmatprep.subr.mxu0 0.0
  %1075 = vmatpush1.msra.mxu0 0.0
  %1076 = vmatprep.subr.mxu0 0.0
  %1077 = vmatpush1.msra.mxu0 0.0
  %1078 = vmatprep.subr.mxu0 0.0
  %1079 = vmatpush1.msra.mxu0 0.0
  %1080 = vmatprep.subr.mxu0 0.0
  %1081 = vmatpush1.msra.mxu0 0.0
  %1082 = vmatprep.subr.mxu0 0.0
  %1083 = vmatpush1.msra.mxu0 0.0
  %1084 = vmatprep.subr.mxu0 0.0
  %1085 = vmatpush1.msra.mxu0 0.0
  %1086 = vmatprep.subr.mxu0 0.0
  %1087 = vmatpush1.msra.mxu0 0.0
  %1088 = vmatprep.subr.mxu0 0.0
  %1089 = vmatpush1.msra.mxu0 0.0
  %1090 = vmatprep.subr.mxu0 0.0
  %1091 = vmatpush1.msra.mxu0 0.0
  %1092 = vmatprep.subr.mxu0 0.0
  %1093 = vmatpush1.msra.mxu0 0.0
  %1094 = vmatprep.subr.mxu0 0.0
  %1095 = vmatpush1.msra.mxu0 0.0
  %1096 = vmatprep.subr.mxu0 0.0
  %1097 = vmatpush1.msra.mxu0 0.0
  %1098 = vmatprep.subr.mxu0 0.0
  %1099 = vmatpush1.msra.mxu0 0.0
  %1100 = vmatprep.subr.mxu0 0.0
  %1101 = vmatpush1.msra.mxu0 0.0
  %1102 = vmatprep.subr.mxu0 0.0
  %1103 = vmatpush1.msra.mxu0 0.0
  %1104 = vmatprep.subr.mxu0 0.0
  %1105 = vmatpush1.msra.mxu0 0.0
  %1106 = vmatprep.subr.mxu0 0.0
  %1107 = vmatpush1.msra.mxu0 0.0
  %1108 = vmatprep.subr.mxu0 0.0
  %1109 = vmatpush1.msra.mxu0 0.0
  %1110 = vmatprep.subr.mxu0 0.0
  %1111 = vmatpush1.msra.mxu0 0.0
  %1112 = vmatprep.subr.mxu0 0.0
  %1113 = vmatpush1.msra.mxu0 0.0
  %1114 = vmatprep.subr.mxu0 0.0
  %1115 = vmatpush1.msra.mxu0 0.0
  %1116 = vmatprep.subr.mxu0 0.0
  %1117 = vmatpush1.msra.mxu0 0.0
  %1118 = vmatprep.subr.mxu0 0.0
  %1119 = vmatpush1.msra.mxu0 0.0
  %1120 = vmatprep.subr.mxu0 0.0
  %1121 = vmatpush1.msra.mxu0 0.0
  %1122 = vmatprep.subr.mxu0 0.0
  %1123 = vmatpush1.msra.mxu0 0.0
  %1124 = vmatprep.subr.mxu0 0.0
  %1125 = vmatpush1.msra.mxu0 0.0
  %1126 = vmatprep.subr.mxu0 0.0
  %1127 = vmatpush1.msra.mxu0 0.0
  %1128 = vmatprep.mubr.f32.mxu0 0.0
  %1129 = vmatmul.mubr.f32.gmra.mrb[0].mxu0 %v1062
  %v1130 = vpop.f32.mrb[0].mxu0
  %v1131 = vadd.f32 0.0, %v1130
  %v1132 = vpop.f32.mrb[0].mxu0
  %1133 = vdwg.mxu0
  %v1134 = vadd.f32 %v1060, %v1131
  %v1135 = vtanh.pop %v1134
  %s1136 = scalar_lea.vmem %s3, 14
  %1137 = vst.msk [vmem:[%s1136] sm:$0x3] %vm30, %v1059
  %1138 = vst.msk [vmem:[%s4] sm:$0x3] %vm30, %v1135
  // Predicated region
  $region14: #{rnn_forward.5} parent=0 // pred_check
    _
  $region15: #{rnn_forward.5} parent=0 // pred_check_branch
    %1140 = sbr.rel (0) target = $region17
  $region16: #{rnn_forward.5} parent=0 // pred_region
    _
  $region17: #{rnn_forward.5} parent=0 // pred_fallthru
    _
  // Predicated region
  $region18: #{rnn_forward.5} parent=0 // pred_check
    _
  $region19: #{rnn_forward.5} parent=0 // pred_check_branch
    %1142 = sbr.rel (0) target = $region21
  $region20: #{rnn_forward.5} parent=0 // pred_region
    _
  $region21: #{rnn_forward.5} parent=0 // pred_fallthru
    _
  // Predicated region
  $region22: #{rnn_forward.5} parent=0 // pred_check
    _
  $region23: #{rnn_forward.5} parent=0 // pred_check_branch
    %1144 = sbr.rel (0) target = $region25
  $region24: #{rnn_forward.5} parent=0 // pred_region
    _
  $region25: #{rnn_forward.5} parent=0 // pred_fallthru
    _
  // Predicated region
  $region26: #{rnn_forward.5} parent=0 // pred_check
    _
  $region27: #{rnn_forward.5} parent=0 // pred_check_branch
    %1146 = sbr.rel (0) target = $region29
  $region28: #{rnn_forward.5} parent=0 // pred_region
    _
  $region29: #{rnn_forward.5} parent=0 // pred_fallthru
    _

// kernel: rnn_forward.7
$region0: #{rnn_forward.7}
  #allocation0 [shape = 'u32[]', space=smem, size = 0x4, offset = 0x4, fixed_abs, tag = 'smem constant byte address 0x4 - core index']
  #allocation1 [shape = 'u32[144,128]{1,0:T(1,128)}', space=vmem, size = 0x12000, scoped, tag = 'internal scratch']
  %s0 = inlined_call_operand.vmem [shape: f32[8,2,32], index: 0, kind: input, shape index: {}]
  %s1 = inlined_call_operand.vmem [shape: f32[8,2,32], index: 1, kind: input, shape index: {}]
  %s2 = inlined_call_operand.vmem [shape: f32[2,32,32], index: 2, kind: input, shape index: {}]
  %s3 = inlined_call_operand.vmem [shape: f32[2,32,4], index: 3, kind: input, shape index: {}]
  %s4 = inlined_call_operand.vmem [shape: f32[1,4], index: 4, kind: input, shape index: {}]
  %s5 = inlined_call_operand.hbm [shape: f32[2,4], index: 5, kind: output, shape index: {}]
  %s6 = sld [smem:[#allocation0]]
  $region30: #{rnn_forward.7} parent=0
    _
  %s8 = ssub.s32 1, %s6
  %s9 = scalar_select 0, %s8, %s6
  $region1: #{rnn_forward.7} parent=0
    #allocation2 [shape = 'u8[1024]{0}', space=vmem, size = 0x400, scoped, tag = 'output window, operand 0, single buffered']
    #allocation3 [shape = 's32[1]{0}', space=sflag, size = 0x4, scoped, tag = 'scoped memory for rnn_forward.7']
    %10 = vsyncpa [#allocation3], 0
    // Predicated region
    $region2: #{rnn_forward.7} parent=1 // pred_check
      _
    $region3: #{rnn_forward.7} parent=1 // pred_check_branch
      %12 = sbr.rel (0) target = $region5
    $region4: #{rnn_forward.7} parent=1 // pred_region
      _
    $region5: #{rnn_forward.7} parent=1 // pred_fallthru
      _
    // Predicated region
    $region6: #{rnn_forward.7} parent=1 // pred_check
      _
    $region7: #{rnn_forward.7} parent=1 // pred_check_branch
      %14 = sbr.rel (0) target = $region9
    $region8: #{rnn_forward.7} parent=1 // pred_region
      _
    $region9: #{rnn_forward.7} parent=1 // pred_fallthru
      _
    // Predicated region
    $region10: #{rnn_forward.7} parent=1 // pred_check
      _
    $region11: #{rnn_forward.7} parent=1 // pred_check_branch
      %16 = sbr.rel (0) target = $region13
    $region12: #{rnn_forward.7} parent=1 // pred_region
      _
    $region13: #{rnn_forward.7} parent=1 // pred_fallthru
      _
    // Predicated region
    $region14: #{rnn_forward.7} parent=1 // pred_check
      _
    $region15: #{rnn_forward.7} parent=1 // pred_check_branch
      %18 = sbr.rel (0) target = $region17
    $region16: #{rnn_forward.7} parent=1 // pred_region
      _
    $region17: #{rnn_forward.7} parent=1 // pred_fallthru
      _
    // Predicated region
    $region18: #{rnn_forward.7} parent=1 // pred_check
      _
    $region19: #{rnn_forward.7} parent=1 // pred_check_branch
      %20 = sbr.rel (0) target = $region21
    $region20: #{rnn_forward.7} parent=1 // pred_region
      _
    $region21: #{rnn_forward.7} parent=1 // pred_fallthru
      _
    %v21 = vld [vmem:[%s2] sm:$0xff]
    %v22 = vld [vmem:[%s2 + $0x8] sm:$0xff]
    %v23 = vld [vmem:[%s2 + $0x10] sm:$0xff]
    %v24 = vld [vmem:[%s2 + $0x18] sm:$0xff]
    %s25 = scalar_lea.vmem %s2, 32
    %v26 = vld [vmem:[%s25] sm:$0xff]
    %v27 = vld [vmem:[%s25 + $0x8] sm:$0xff]
    %v28 = vld [vmem:[%s25 + $0x10] sm:$0xff]
    %v29 = vld [vmem:[%s25 + $0x18] sm:$0xff]
    %v30 = vld [vmem:[%s0] sm:$0x3]
    %v31 = vtanh.pop %v30
    %s32 = scalar_lea.vmem %s1, 14
    %v33 = vld [vmem:[%s32] sm:$0x3]
    %v34 = vtanh.pop %v33
    %s35 = scalar_lea.vmem %s0, 2
    %v36 = vld [vmem:[%s35] sm:$0x3]
    %vm37 = vcmask 261120
    %v39 = vsel %vm37, %v31, 0
    %41 = vmatprep.subr.mxu0 0.0
    %42 = vmatpush1.msra.mxu0 %v21
    %43 = vmatprep.subr.mxu0 0.0
    %44 = vmatpush1.msra.mxu0 %v22
    %45 = vmatprep.subr.mxu0 0.0
    %46 = vmatpush1.msra.mxu0 %v23
    %47 = vmatprep.subr.mxu0 0.0
    %48 = vmatpush1.msra.mxu0 %v24
    %49 = vmatprep.subr.mxu0 0.0
    %50 = vmatpush1.msra.mxu0 0.0
    %51 = vmatprep.subr.mxu0 0.0
    %52 = vmatpush1.msra.mxu0 0.0
    %53 = vmatprep.subr.mxu0 0.0
    %54 = vmatpush1.msra.mxu0 0.0
    %55 = vmatprep.subr.mxu0 0.0
    %56 = vmatpush1.msra.mxu0 0.0
    %57 = vmatprep.subr.mxu0 0.0
    %58 = vmatpush1.msra.mxu0 0.0
    %59 = vmatprep.subr.mxu0 0.0
    %60 = vmatpush1.msra.mxu0 0.0
    %61 = vmatprep.subr.mxu0 0.0
    %62 = vmatpush1.msra.mxu0 0.0
    %63 = vmatprep.subr.mxu0 0.0
    %64 = vmatpush1.msra.mxu0 0.0
    %65 = vmatprep.subr.mxu0 0.0
    %66 = vmatpush1.msra.mxu0 0.0
    %67 = vmatprep.subr.mxu0 0.0
    %68 = vmatpush1.msra.mxu0 0.0
    %69 = vmatprep.subr.mxu0 0.0
    %70 = vmatpush1.msra.mxu0 0.0
    %71 = vmatprep.subr.mxu0 0.0
    %72 = vmatpush1.msra.mxu0 0.0
    %73 = vmatprep.subr.mxu0 0.0
    %74 = vmatpush1.msra.mxu0 0.0
    %75 = vmatprep.subr.mxu0 0.0
    %76 = vmatpush1.msra.mxu0 0.0
    %77 = vmatprep.subr.mxu0 0.0
    %78 = vmatpush1.msra.mxu0 0.0
    %79 = vmatprep.subr.mxu0 0.0
    %80 = vmatpush1.msra.mxu0 0.0
    %81 = vmatprep.subr.mxu0 0.0
    %82 = vmatpush1.msra.mxu0 0.0
    %83 = vmatprep.subr.mxu0 0.0
    %84 = vmatpush1.msra.mxu0 0.0
    %85 = vmatprep.subr.mxu0 0.0
    %86 = vmatpush1.msra.mxu0 0.0
    %87 = vmatprep.subr.mxu0 0.0
    %88 = vmatpush1.msra.mxu0 0.0
    %89 = vmatprep.subr.mxu0 0.0
    %90 = vmatpush1.msra.mxu0 0.0
    %91 = vmatprep.subr.mxu0 0.0
    %92 = vmatpush1.msra.mxu0 0.0
    %93 = vmatprep.subr.mxu0 0.0
    %94 = vmatpush1.msra.mxu0 0.0
    %95 = vmatprep.subr.mxu0 0.0
    %96 = vmatpush1.msra.mxu0 0.0
    %97 = vmatprep.subr.mxu0 0.0
    %98 = vmatpush1.msra.mxu0 0.0
    %99 = vmatprep.subr.mxu0 0.0
    %100 = vmatpush1.msra.mxu0 0.0
    %101 = vmatprep.subr.mxu0 0.0
    %102 = vmatpush1.msra.mxu0 0.0
    %103 = vmatprep.subr.mxu0 0.0
    %104 = vmatpush1.msra.mxu0 0.0
    %105 = vmatprep.mubr.f32.mxu0 0.0
    %106 = vmatmul.mubr.f32.gmra.mrb[0].mxu0 %v39
    %v107 = vpop.f32.mrb[0].mxu0
    %v108 = vadd.f32 0.0, %v107
    %v109 = vpop.f32.mrb[0].mxu0
    %110 = vdwg.mxu0
    %v111 = vadd.f32 %v36, %v108
    %v112 = vtanh.pop %v111
    %s113 = scalar_lea.vmem %s1, 12
    %v114 = vld [vmem:[%s113] sm:$0x3]
    %v116 = vsel %vm37, %v34, 0
    %118 = vmatprep.subr.mxu0 0.0
    %119 = vmatpush1.msra.mxu0 %v26
    %120 = vmatprep.subr.mxu0 0.0
    %121 = vmatpush1.msra.mxu0 %v27
    %122 = vmatprep.subr.mxu0 0.0
    %123 = vmatpush1.msra.mxu0 %v28
    %124 = vmatprep.subr.mxu0 0.0
    %125 = vmatpush1.msra.mxu0 %v29
    %126 = vmatprep.subr.mxu0 0.0
    %127 = vmatpush1.msra.mxu0 0.0
    %128 = vmatprep.subr.mxu0 0.0
    %129 = vmatpush1.msra.mxu0 0.0
    %130 = vmatprep.subr.mxu0 0.0
    %131 = vmatpush1.msra.mxu0 0.0
    %132 = vmatprep.subr.mxu0 0.0
    %133 = vmatpush1.msra.mxu0 0.0
    %134 = vmatprep.subr.mxu0 0.0
    %135 = vmatpush1.msra.mxu0 0.0
    %136 = vmatprep.subr.mxu0 0.0
    %137 = vmatpush1.msra.mxu0 0.0
    %138 = vmatprep.subr.mxu0 0.0
    %139 = vmatpush1.msra.mxu0 0.0
    %140 = vmatprep.subr.mxu0 0.0
    %141 = vmatpush1.msra.mxu0 0.0
    %142 = vmatprep.subr.mxu0 0.0
    %143 = vmatpush1.msra.mxu0 0.0
    %144 = vmatprep.subr.mxu0 0.0
    %145 = vmatpush1.msra.mxu0 0.0
    %146 = vmatprep.subr.mxu0 0.0
    %147 = vmatpush1.msra.mxu0 0.0
    %148 = vmatprep.subr.mxu0 0.0
    %149 = vmatpush1.msra.mxu0 0.0
    %150 = vmatprep.subr.mxu0 0.0
    %151 = vmatpush1.msra.mxu0 0.0
    %152 = vmatprep.subr.mxu0 0.0
    %153 = vmatpush1.msra.mxu0 0.0
    %154 = vmatprep.subr.mxu0 0.0
    %155 = vmatpush1.msra.mxu0 0.0
    %156 = vmatprep.subr.mxu0 0.0
    %157 = vmatpush1.msra.mxu0 0.0
    %158 = vmatprep.subr.mxu0 0.0
    %159 = vmatpush1.msra.mxu0 0.0
    %160 = vmatprep.subr.mxu0 0.0
    %161 = vmatpush1.msra.mxu0 0.0
    %162 = vmatprep.subr.mxu0 0.0
    %163 = vmatpush1.msra.mxu0 0.0
    %164 = vmatprep.subr.mxu0 0.0
    %165 = vmatpush1.msra.mxu0 0.0
    %166 = vmatprep.subr.mxu0 0.0
    %167 = vmatpush1.msra.mxu0 0.0
    %168 = vmatprep.subr.mxu0 0.0
    %169 = vmatpush1.msra.mxu0 0.0
    %170 = vmatprep.subr.mxu0 0.0
    %171 = vmatpush1.msra.mxu0 0.0
    %172 = vmatprep.subr.mxu0 0.0
    %173 = vmatpush1.msra.mxu0 0.0
    %174 = vmatprep.subr.mxu0 0.0
    %175 = vmatpush1.msra.mxu0 0.0
    %176 = vmatprep.subr.mxu0 0.0
    %177 = vmatpush1.msra.mxu0 0.0
    %178 = vmatprep.subr.mxu0 0.0
    %179 = vmatpush1.msra.mxu0 0.0
    %180 = vmatprep.subr.mxu0 0.0
    %181 = vmatpush1.msra.mxu0 0.0
    %182 = vmatprep.mubr.f32.mxu0 0.0
    %183 = vmatmul.mubr.f32.gmra.mrb[0].mxu0 %v116
    %v184 = vpop.f32.mrb[0].mxu0
    %v185 = vadd.f32 0.0, %v184
    %v186 = vpop.f32.mrb[0].mxu0
    %187 = vdwg.mxu0
    %v188 = vadd.f32 %v114, %v185
    %v189 = vtanh.pop %v188
    %s190 = scalar_lea.vmem %s0, 4
    %v191 = vld [vmem:[%s190] sm:$0x3]
    %v193 = vsel %vm37, %v112, 0
    %195 = vmatprep.subr.mxu0 0.0
    %196 = vmatpush1.msra.mxu0 %v21
    %197 = vmatprep.subr.mxu0 0.0
    %198 = vmatpush1.msra.mxu0 %v22
    %199 = vmatprep.subr.mxu0 0.0
    %200 = vmatpush1.msra.mxu0 %v23
    %201 = vmatprep.subr.mxu0 0.0
    %202 = vmatpush1.msra.mxu0 %v24
    %203 = vmatprep.subr.mxu0 0.0
    %204 = vmatpush1.msra.mxu0 0.0
    %205 = vmatprep.subr.mxu0 0.0
    %206 = vmatpush1.msra.mxu0 0.0
    %207 = vmatprep.subr.mxu0 0.0
    %208 = vmatpush1.msra.mxu0 0.0
    %209 = vmatprep.subr.mxu0 0.0
    %210 = vmatpush1.msra.mxu0 0.0
    %211 = vmatprep.subr.mxu0 0.0
    %212 = vmatpush1.msra.mxu0 0.0
    %213 = vmatprep.subr.mxu0 0.0
    %214 = vmatpush1.msra.mxu0 0.0
    %215 = vmatprep.subr.mxu0 0.0
    %216 = vmatpush1.msra.mxu0 0.0
    %217 = vmatprep.subr.mxu0 0.0
    %218 = vmatpush1.msra.mxu0 0.0
    %219 = vmatprep.subr.mxu0 0.0
    %220 = vmatpush1.msra.mxu0 0.0
    %221 = vmatprep.subr.mxu0 0.0
    %222 = vmatpush1.msra.mxu0 0.0
    %223 = vmatprep.subr.mxu0 0.0
    %224 = vmatpush1.msra.mxu0 0.0
    %225 = vmatprep.subr.mxu0 0.0
    %226 = vmatpush1.msra.mxu0 0.0
    %227 = vmatprep.subr.mxu0 0.0
    %228 = vmatpush1.msra.mxu0 0.0
    %229 = vmatprep.subr.mxu0 0.0
    %230 = vmatpush1.msra.mxu0 0.0
    %231 = vmatprep.subr.mxu0 0.0
    %232 = vmatpush1.msra.mxu0 0.0
    %233 = vmatprep.subr.mxu0 0.0
    %234 = vmatpush1.msra.mxu0 0.0
    %235 = vmatprep.subr.mxu0 0.0
    %236 = vmatpush1.msra.mxu0 0.0
    %237 = vmatprep.subr.mxu0 0.0
    %238 = vmatpush1.msra.mxu0 0.0
    %239 = vmatprep.subr.mxu0 0.0
    %240 = vmatpush1.msra.mxu0 0.0
    %241 = vmatprep.subr.mxu0 0.0
    %242 = vmatpush1.msra.mxu0 0.0
    %243 = vmatprep.subr.mxu0 0.0
    %244 = vmatpush1.msra.mxu0 0.0
    %245 = vmatprep.subr.mxu0 0.0
    %246 = vmatpush1.msra.mxu0 0.0
    %247 = vmatprep.subr.mxu0 0.0
    %248 = vmatpush1.msra.mxu0 0.0
    %249 = vmatprep.subr.mxu0 0.0
    %250 = vmatpush1.msra.mxu0 0.0
    %251 = vmatprep.subr.mxu0 0.0
    %252 = vmatpush1.msra.mxu0 0.0
    %253 = vmatprep.subr.mxu0 0.0
    %254 = vmatpush1.msra.mxu0 0.0
    %255 = vmatprep.subr.mxu0 0.0
    %256 = vmatpush1.msra.mxu0 0.0
    %257 = vmatprep.subr.mxu0 0.0
    %258 = vmatpush1.msra.mxu0 0.0
    %259 = vmatprep.mubr.f32.mxu0 0.0
    %260 = vmatmul.mubr.f32.gmra.mrb[0].mxu0 %v193
    %v261 = vpop.f32.mrb[0].mxu0
    %v262 = vadd.f32 0.0, %v261
    %v263 = vpop.f32.mrb[0].mxu0
    %264 = vdwg.mxu0
    %v265 = vadd.f32 %v191, %v262
    %v266 = vtanh.pop %v265
    %s267 = scalar_lea.vmem %s1, 10
    %v268 = vld [vmem:[%s267] sm:$0x3]
    %v270 = vsel %vm37, %v189, 0
    %272 = vmatprep.subr.mxu0 0.0
    %273 = vmatpush1.msra.mxu0 %v26
    %274 = vmatprep.subr.mxu0 0.0
    %275 = vmatpush1.msra.mxu0 %v27
    %276 = vmatprep.subr.mxu0 0.0
    %277 = vmatpush1.msra.mxu0 %v28
    %278 = vmatprep.subr.mxu0 0.0
    %279 = vmatpush1.msra.mxu0 %v29
    %280 = vmatprep.subr.mxu0 0.0
    %281 = vmatpush1.msra.mxu0 0.0
    %282 = vmatprep.subr.mxu0 0.0
    %283 = vmatpush1.msra.mxu0 0.0
    %284 = vmatprep.subr.mxu0 0.0
    %285 = vmatpush1.msra.mxu0 0.0
    %286 = vmatprep.subr.mxu0 0.0
    %287 = vmatpush1.msra.mxu0 0.0
    %288 = vmatprep.subr.mxu0 0.0
    %289 = vmatpush1.msra.mxu0 0.0
    %290 = vmatprep.subr.mxu0 0.0
    %291 = vmatpush1.msra.mxu0 0.0
    %292 = vmatprep.subr.mxu0 0.0
    %293 = vmatpush1.msra.mxu0 0.0
    %294 = vmatprep.subr.mxu0 0.0
    %295 = vmatpush1.msra.mxu0 0.0
    %296 = vmatprep.subr.mxu0 0.0
    %297 = vmatpush1.msra.mxu0 0.0
    %298 = vmatprep.subr.mxu0 0.0
    %299 = vmatpush1.msra.mxu0 0.0
    %300 = vmatprep.subr.mxu0 0.0
    %301 = vmatpush1.msra.mxu0 0.0
    %302 = vmatprep.subr.mxu0 0.0
    %303 = vmatpush1.msra.mxu0 0.0
    %304 = vmatprep.subr.mxu0 0.0
    %305 = vmatpush1.msra.mxu0 0.0
    %306 = vmatprep.subr.mxu0 0.0
    %307 = vmatpush1.msra.mxu0 0.0
    %308 = vmatprep.subr.mxu0 0.0
    %309 = vmatpush1.msra.mxu0 0.0
    %310 = vmatprep.subr.mxu0 0.0
    %311 = vmatpush1.msra.mxu0 0.0
    %312 = vmatprep.subr.mxu0 0.0
    %313 = vmatpush1.msra.mxu0 0.0
    %314 = vmatprep.subr.mxu0 0.0
    %315 = vmatpush1.msra.mxu0 0.0
    %316 = vmatprep.subr.mxu0 0.0
    %317 = vmatpush1.msra.mxu0 0.0
    %318 = vmatprep.subr.mxu0 0.0
    %319 = vmatpush1.msra.mxu0 0.0
    %320 = vmatprep.subr.mxu0 0.0
    %321 = vmatpush1.msra.mxu0 0.0
    %322 = vmatprep.subr.mxu0 0.0
    %323 = vmatpush1.msra.mxu0 0.0
    %324 = vmatprep.subr.mxu0 0.0
    %325 = vmatpush1.msra.mxu0 0.0
    %326 = vmatprep.subr.mxu0 0.0
    %327 = vmatpush1.msra.mxu0 0.0
    %328 = vmatprep.subr.mxu0 0.0
    %329 = vmatpush1.msra.mxu0 0.0
    %330 = vmatprep.subr.mxu0 0.0
    %331 = vmatpush1.msra.mxu0 0.0
    %332 = vmatprep.subr.mxu0 0.0
    %333 = vmatpush1.msra.mxu0 0.0
    %334 = vmatprep.subr.mxu0 0.0
    %335 = vmatpush1.msra.mxu0 0.0
    %336 = vmatprep.mubr.f32.mxu0 0.0
    %337 = vmatmul.mubr.f32.gmra.mrb[0].mxu0 %v270
    %v338 = vpop.f32.mrb[0].mxu0
    %v339 = vadd.f32 0.0, %v338
    %v340 = vpop.f32.mrb[0].mxu0
    %341 = vdwg.mxu0
    %v342 = vadd.f32 %v268, %v339
    %v343 = vtanh.pop %v342
    %s344 = scalar_lea.vmem %s0, 6
    %v345 = vld [vmem:[%s344] sm:$0x3]
    %v347 = vsel %vm37, %v266, 0
    %349 = vmatprep.subr.mxu0 0.0
    %350 = vmatpush1.msra.mxu0 %v21
    %351 = vmatprep.subr.mxu0 0.0
    %352 = vmatpush1.msra.mxu0 %v22
    %353 = vmatprep.subr.mxu0 0.0
    %354 = vmatpush1.msra.mxu0 %v23
    %355 = vmatprep.subr.mxu0 0.0
    %356 = vmatpush1.msra.mxu0 %v24
    %357 = vmatprep.subr.mxu0 0.0
    %358 = vmatpush1.msra.mxu0 0.0
    %359 = vmatprep.subr.mxu0 0.0
    %360 = vmatpush1.msra.mxu0 0.0
    %361 = vmatprep.subr.mxu0 0.0
    %362 = vmatpush1.msra.mxu0 0.0
    %363 = vmatprep.subr.mxu0 0.0
    %364 = vmatpush1.msra.mxu0 0.0
    %365 = vmatprep.subr.mxu0 0.0
    %366 = vmatpush1.msra.mxu0 0.0
    %367 = vmatprep.subr.mxu0 0.0
    %368 = vmatpush1.msra.mxu0 0.0
    %369 = vmatprep.subr.mxu0 0.0
    %370 = vmatpush1.msra.mxu0 0.0
    %371 = vmatprep.subr.mxu0 0.0
    %372 = vmatpush1.msra.mxu0 0.0
    %373 = vmatprep.subr.mxu0 0.0
    %374 = vmatpush1.msra.mxu0 0.0
    %375 = vmatprep.subr.mxu0 0.0
    %376 = vmatpush1.msra.mxu0 0.0
    %377 = vmatprep.subr.mxu0 0.0
    %378 = vmatpush1.msra.mxu0 0.0
    %379 = vmatprep.subr.mxu0 0.0
    %380 = vmatpush1.msra.mxu0 0.0
    %381 = vmatprep.subr.mxu0 0.0
    %382 = vmatpush1.msra.mxu0 0.0
    %383 = vmatprep.subr.mxu0 0.0
    %384 = vmatpush1.msra.mxu0 0.0
    %385 = vmatprep.subr.mxu0 0.0
    %386 = vmatpush1.msra.mxu0 0.0
    %387 = vmatprep.subr.mxu0 0.0
    %388 = vmatpush1.msra.mxu0 0.0
    %389 = vmatprep.subr.mxu0 0.0
    %390 = vmatpush1.msra.mxu0 0.0
    %391 = vmatprep.subr.mxu0 0.0
    %392 = vmatpush1.msra.mxu0 0.0
    %393 = vmatprep.subr.mxu0 0.0
    %394 = vmatpush1.msra.mxu0 0.0
    %395 = vmatprep.subr.mxu0 0.0
    %396 = vmatpush1.msra.mxu0 0.0
    %397 = vmatprep.subr.mxu0 0.0
    %398 = vmatpush1.msra.mxu0 0.0
    %399 = vmatprep.subr.mxu0 0.0
    %400 = vmatpush1.msra.mxu0 0.0
    %401 = vmatprep.subr.mxu0 0.0
    %402 = vmatpush1.msra.mxu0 0.0
    %403 = vmatprep.subr.mxu0 0.0
    %404 = vmatpush1.msra.mxu0 0.0
    %405 = vmatprep.subr.mxu0 0.0
    %406 = vmatpush1.msra.mxu0 0.0
    %407 = vmatprep.subr.mxu0 0.0
    %408 = vmatpush1.msra.mxu0 0.0
    %409 = vmatprep.subr.mxu0 0.0
    %410 = vmatpush1.msra.mxu0 0.0
    %411 = vmatprep.subr.mxu0 0.0
    %412 = vmatpush1.msra.mxu0 0.0
    %413 = vmatprep.mubr.f32.mxu0 0.0
    %414 = vmatmul.mubr.f32.gmra.mrb[0].mxu0 %v347
    %v415 = vpop.f32.mrb[0].mxu0
    %v416 = vadd.f32 0.0, %v415
    %v417 = vpop.f32.mrb[0].mxu0
    %418 = vdwg.mxu0
    %v419 = vadd.f32 %v345, %v416
    %v420 = vtanh.pop %v419
    %s421 = scalar_lea.vmem %s1, 8
    %v422 = vld [vmem:[%s421] sm:$0x3]
    %v424 = vsel %vm37, %v343, 0
    %426 = vmatprep.subr.mxu0 0.0
    %427 = vmatpush1.msra.mxu0 %v26
    %428 = vmatprep.subr.mxu0 0.0
    %429 = vmatpush1.msra.mxu0 %v27
    %430 = vmatprep.subr.mxu0 0.0
    %431 = vmatpush1.msra.mxu0 %v28
    %432 = vmatprep.subr.mxu0 0.0
    %433 = vmatpush1.msra.mxu0 %v29
    %434 = vmatprep.subr.mxu0 0.0
    %435 = vmatpush1.msra.mxu0 0.0
    %436 = vmatprep.subr.mxu0 0.0
    %437 = vmatpush1.msra.mxu0 0.0
    %438 = vmatprep.subr.mxu0 0.0
    %439 = vmatpush1.msra.mxu0 0.0
    %440 = vmatprep.subr.mxu0 0.0
    %441 = vmatpush1.msra.mxu0 0.0
    %442 = vmatprep.subr.mxu0 0.0
    %443 = vmatpush1.msra.mxu0 0.0
    %444 = vmatprep.subr.mxu0 0.0
    %445 = vmatpush1.msra.mxu0 0.0
    %446 = vmatprep.subr.mxu0 0.0
    %447 = vmatpush1.msra.mxu0 0.0
    %448 = vmatprep.subr.mxu0 0.0
    %449 = vmatpush1.msra.mxu0 0.0
    %450 = vmatprep.subr.mxu0 0.0
    %451 = vmatpush1.msra.mxu0 0.0
    %452 = vmatprep.subr.mxu0 0.0
    %453 = vmatpush1.msra.mxu0 0.0
    %454 = vmatprep.subr.mxu0 0.0
    %455 = vmatpush1.msra.mxu0 0.0
    %456 = vmatprep.subr.mxu0 0.0
    %457 = vmatpush1.msra.mxu0 0.0
    %458 = vmatprep.subr.mxu0 0.0
    %459 = vmatpush1.msra.mxu0 0.0
    %460 = vmatprep.subr.mxu0 0.0
    %461 = vmatpush1.msra.mxu0 0.0
    %462 = vmatprep.subr.mxu0 0.0
    %463 = vmatpush1.msra.mxu0 0.0
    %464 = vmatprep.subr.mxu0 0.0
    %465 = vmatpush1.msra.mxu0 0.0
    %466 = vmatprep.subr.mxu0 0.0
    %467 = vmatpush1.msra.mxu0 0.0
    %468 = vmatprep.subr.mxu0 0.0
    %469 = vmatpush1.msra.mxu0 0.0
    %470 = vmatprep.subr.mxu0 0.0
    %471 = vmatpush1.msra.mxu0 0.0
    %472 = vmatprep.subr.mxu0 0.0
    %473 = vmatpush1.msra.mxu0 0.0
    %474 = vmatprep.subr.mxu0 0.0
    %475 = vmatpush1.msra.mxu0 0.0
    %476 = vmatprep.subr.mxu0 0.0
    %477 = vmatpush1.msra.mxu0 0.0
    %478 = vmatprep.subr.mxu0 0.0
    %479 = vmatpush1.msra.mxu0 0.0
    %480 = vmatprep.subr.mxu0 0.0
    %481 = vmatpush1.msra.mxu0 0.0
    %482 = vmatprep.subr.mxu0 0.0
    %483 = vmatpush1.msra.mxu0 0.0
    %484 = vmatprep.subr.mxu0 0.0
    %485 = vmatpush1.msra.mxu0 0.0
    %486 = vmatprep.subr.mxu0 0.0
    %487 = vmatpush1.msra.mxu0 0.0
    %488 = vmatprep.subr.mxu0 0.0
    %489 = vmatpush1.msra.mxu0 0.0
    %490 = vmatprep.mubr.f32.mxu0 0.0
    %491 = vmatmul.mubr.f32.gmra.mrb[0].mxu0 %v424
    %v492 = vpop.f32.mrb[0].mxu0
    %v493 = vadd.f32 0.0, %v492
    %v494 = vpop.f32.mrb[0].mxu0
    %495 = vdwg.mxu0
    %v496 = vadd.f32 %v422, %v493
    %v497 = vtanh.pop %v496
    %s498 = scalar_lea.vmem %s0, 8
    %v499 = vld [vmem:[%s498] sm:$0x3]
    %v501 = vsel %vm37, %v420, 0
    %503 = vmatprep.subr.mxu0 0.0
    %504 = vmatpush1.msra.mxu0 %v21
    %505 = vmatprep.subr.mxu0 0.0
    %506 = vmatpush1.msra.mxu0 %v22
    %507 = vmatprep.subr.mxu0 0.0
    %508 = vmatpush1.msra.mxu0 %v23
    %509 = vmatprep.subr.mxu0 0.0
    %510 = vmatpush1.msra.mxu0 %v24
    %511 = vmatprep.subr.mxu0 0.0
    %512 = vmatpush1.msra.mxu0 0.0
    %513 = vmatprep.subr.mxu0 0.0
    %514 = vmatpush1.msra.mxu0 0.0
    %515 = vmatprep.subr.mxu0 0.0
    %516 = vmatpush1.msra.mxu0 0.0
    %517 = vmatprep.subr.mxu0 0.0
    %518 = vmatpush1.msra.mxu0 0.0
    %519 = vmatprep.subr.mxu0 0.0
    %520 = vmatpush1.msra.mxu0 0.0
    %521 = vmatprep.subr.mxu0 0.0
    %522 = vmatpush1.msra.mxu0 0.0
    %523 = vmatprep.subr.mxu0 0.0
    %524 = vmatpush1.msra.mxu0 0.0
    %525 = vmatprep.subr.mxu0 0.0
    %526 = vmatpush1.msra.mxu0 0.0
    %527 = vmatprep.subr.mxu0 0.0
    %528 = vmatpush1.msra.mxu0 0.0
    %529 = vmatprep.subr.mxu0 0.0
    %530 = vmatpush1.msra.mxu0 0.0
    %531 = vmatprep.subr.mxu0 0.0
    %532 = vmatpush1.msra.mxu0 0.0
    %533 = vmatprep.subr.mxu0 0.0
    %534 = vmatpush1.msra.mxu0 0.0
    %535 = vmatprep.subr.mxu0 0.0
    %536 = vmatpush1.msra.mxu0 0.0
    %537 = vmatprep.subr.mxu0 0.0
    %538 = vmatpush1.msra.mxu0 0.0
    %539 = vmatprep.subr.mxu0 0.0
    %540 = vmatpush1.msra.mxu0 0.0
    %541 = vmatprep.subr.mxu0 0.0
    %542 = vmatpush1.msra.mxu0 0.0
    %543 = vmatprep.subr.mxu0 0.0
    %544 = vmatpush1.msra.mxu0 0.0
    %545 = vmatprep.subr.mxu0 0.0
    %546 = vmatpush1.msra.mxu0 0.0
    %547 = vmatprep.subr.mxu0 0.0
    %548 = vmatpush1.msra.mxu0 0.0
    %549 = vmatprep.subr.mxu0 0.0
    %550 = vmatpush1.msra.mxu0 0.0
    %551 = vmatprep.subr.mxu0 0.0
    %552 = vmatpush1.msra.mxu0 0.0
    %553 = vmatprep.subr.mxu0 0.0
    %554 = vmatpush1.msra.mxu0 0.0
    %555 = vmatprep.subr.mxu0 0.0
    %556 = vmatpush1.msra.mxu0 0.0
    %557 = vmatprep.subr.mxu0 0.0
    %558 = vmatpush1.msra.mxu0 0.0
    %559 = vmatprep.subr.mxu0 0.0
    %560 = vmatpush1.msra.mxu0 0.0
    %561 = vmatprep.subr.mxu0 0.0
    %562 = vmatpush1.msra.mxu0 0.0
    %563 = vmatprep.subr.mxu0 0.0
    %564 = vmatpush1.msra.mxu0 0.0
    %565 = vmatprep.subr.mxu0 0.0
    %566 = vmatpush1.msra.mxu0 0.0
    %567 = vmatprep.mubr.f32.mxu0 0.0
    %568 = vmatmul.mubr.f32.gmra.mrb[0].mxu0 %v501
    %v569 = vpop.f32.mrb[0].mxu0
    %v570 = vadd.f32 0.0, %v569
    %v571 = vpop.f32.mrb[0].mxu0
    %572 = vdwg.mxu0
    %v573 = vadd.f32 %v499, %v570
    %v574 = vtanh.pop %v573
    %s575 = scalar_lea.vmem %s1, 6
    %v576 = vld [vmem:[%s575] sm:$0x3]
    %v578 = vsel %vm37, %v497, 0
    %580 = vmatprep.subr.mxu0 0.0
    %581 = vmatpush1.msra.mxu0 %v26
    %582 = vmatprep.subr.mxu0 0.0
    %583 = vmatpush1.msra.mxu0 %v27
    %584 = vmatprep.subr.mxu0 0.0
    %585 = vmatpush1.msra.mxu0 %v28
    %586 = vmatprep.subr.mxu0 0.0
    %587 = vmatpush1.msra.mxu0 %v29
    %588 = vmatprep.subr.mxu0 0.0
    %589 = vmatpush1.msra.mxu0 0.0
    %590 = vmatprep.subr.mxu0 0.0
    %591 = vmatpush1.msra.mxu0 0.0
    %592 = vmatprep.subr.mxu0 0.0
    %593 = vmatpush1.msra.mxu0 0.0
    %594 = vmatprep.subr.mxu0 0.0
    %595 = vmatpush1.msra.mxu0 0.0
    %596 = vmatprep.subr.mxu0 0.0
    %597 = vmatpush1.msra.mxu0 0.0
    %598 = vmatprep.subr.mxu0 0.0
    %599 = vmatpush1.msra.mxu0 0.0
    %600 = vmatprep.subr.mxu0 0.0
    %601 = vmatpush1.msra.mxu0 0.0
    %602 = vmatprep.subr.mxu0 0.0
    %603 = vmatpush1.msra.mxu0 0.0
    %604 = vmatprep.subr.mxu0 0.0
    %605 = vmatpush1.msra.mxu0 0.0
    %606 = vmatprep.subr.mxu0 0.0
    %607 = vmatpush1.msra.mxu0 0.0
    %608 = vmatprep.subr.mxu0 0.0
    %609 = vmatpush1.msra.mxu0 0.0
    %610 = vmatprep.subr.mxu0 0.0
    %611 = vmatpush1.msra.mxu0 0.0
    %612 = vmatprep.subr.mxu0 0.0
    %613 = vmatpush1.msra.mxu0 0.0
    %614 = vmatprep.subr.mxu0 0.0
    %615 = vmatpush1.msra.mxu0 0.0
    %616 = vmatprep.subr.mxu0 0.0
    %617 = vmatpush1.msra.mxu0 0.0
    %618 = vmatprep.subr.mxu0 0.0
    %619 = vmatpush1.msra.mxu0 0.0
    %620 = vmatprep.subr.mxu0 0.0
    %621 = vmatpush1.msra.mxu0 0.0
    %622 = vmatprep.subr.mxu0 0.0
    %623 = vmatpush1.msra.mxu0 0.0
    %624 = vmatprep.subr.mxu0 0.0
    %625 = vmatpush1.msra.mxu0 0.0
    %626 = vmatprep.subr.mxu0 0.0
    %627 = vmatpush1.msra.mxu0 0.0
    %628 = vmatprep.subr.mxu0 0.0
    %629 = vmatpush1.msra.mxu0 0.0
    %630 = vmatprep.subr.mxu0 0.0
    %631 = vmatpush1.msra.mxu0 0.0
    %632 = vmatprep.subr.mxu0 0.0
    %633 = vmatpush1.msra.mxu0 0.0
    %634 = vmatprep.subr.mxu0 0.0
    %635 = vmatpush1.msra.mxu0 0.0
    %636 = vmatprep.subr.mxu0 0.0
    %637 = vmatpush1.msra.mxu0 0.0
    %638 = vmatprep.subr.mxu0 0.0
    %639 = vmatpush1.msra.mxu0 0.0
    %640 = vmatprep.subr.mxu0 0.0
    %641 = vmatpush1.msra.mxu0 0.0
    %642 = vmatprep.subr.mxu0 0.0
    %643 = vmatpush1.msra.mxu0 0.0
    %644 = vmatprep.mubr.f32.mxu0 0.0
    %645 = vmatmul.mubr.f32.gmra.mrb[0].mxu0 %v578
    %v646 = vpop.f32.mrb[0].mxu0
    %v647 = vadd.f32 0.0, %v646
    %v648 = vpop.f32.mrb[0].mxu0
    %649 = vdwg.mxu0
    %v650 = vadd.f32 %v576, %v647
    %v651 = vtanh.pop %v650
    %s652 = scalar_lea.vmem %s0, 10
    %v653 = vld [vmem:[%s652] sm:$0x3]
    %v655 = vsel %vm37, %v574, 0
    %657 = vmatprep.subr.mxu0 0.0
    %658 = vmatpush1.msra.mxu0 %v21
    %659 = vmatprep.subr.mxu0 0.0
    %660 = vmatpush1.msra.mxu0 %v22
    %661 = vmatprep.subr.mxu0 0.0
    %662 = vmatpush1.msra.mxu0 %v23
    %663 = vmatprep.subr.mxu0 0.0
    %664 = vmatpush1.msra.mxu0 %v24
    %665 = vmatprep.subr.mxu0 0.0
    %666 = vmatpush1.msra.mxu0 0.0
    %667 = vmatprep.subr.mxu0 0.0
    %668 = vmatpush1.msra.mxu0 0.0
    %669 = vmatprep.subr.mxu0 0.0
    %670 = vmatpush1.msra.mxu0 0.0
    %671 = vmatprep.subr.mxu0 0.0
    %672 = vmatpush1.msra.mxu0 0.0
    %673 = vmatprep.subr.mxu0 0.0
    %674 = vmatpush1.msra.mxu0 0.0
    %675 = vmatprep.subr.mxu0 0.0
    %676 = vmatpush1.msra.mxu0 0.0
    %677 = vmatprep.subr.mxu0 0.0
    %678 = vmatpush1.msra.mxu0 0.0
    %679 = vmatprep.subr.mxu0 0.0
    %680 = vmatpush1.msra.mxu0 0.0
    %681 = vmatprep.subr.mxu0 0.0
    %682 = vmatpush1.msra.mxu0 0.0
    %683 = vmatprep.subr.mxu0 0.0
    %684 = vmatpush1.msra.mxu0 0.0
    %685 = vmatprep.subr.mxu0 0.0
    %686 = vmatpush1.msra.mxu0 0.0
    %687 = vmatprep.subr.mxu0 0.0
    %688 = vmatpush1.msra.mxu0 0.0
    %689 = vmatprep.subr.mxu0 0.0
    %690 = vmatpush1.msra.mxu0 0.0
    %691 = vmatprep.subr.mxu0 0.0
    %692 = vmatpush1.msra.mxu0 0.0
    %693 = vmatprep.subr.mxu0 0.0
    %694 = vmatpush1.msra.mxu0 0.0
    %695 = vmatprep.subr.mxu0 0.0
    %696 = vmatpush1.msra.mxu0 0.0
    %697 = vmatprep.subr.mxu0 0.0
    %698 = vmatpush1.msra.mxu0 0.0
    %699 = vmatprep.subr.mxu0 0.0
    %700 = vmatpush1.msra.mxu0 0.0
    %701 = vmatprep.subr.mxu0 0.0
    %702 = vmatpush1.msra.mxu0 0.0
    %703 = vmatprep.subr.mxu0 0.0
    %704 = vmatpush1.msra.mxu0 0.0
    %705 = vmatprep.subr.mxu0 0.0
    %706 = vmatpush1.msra.mxu0 0.0
    %707 = vmatprep.subr.mxu0 0.0
    %708 = vmatpush1.msra.mxu0 0.0
    %709 = vmatprep.subr.mxu0 0.0
    %710 = vmatpush1.msra.mxu0 0.0
    %711 = vmatprep.subr.mxu0 0.0
    %712 = vmatpush1.msra.mxu0 0.0
    %713 = vmatprep.subr.mxu0 0.0
    %714 = vmatpush1.msra.mxu0 0.0
    %715 = vmatprep.subr.mxu0 0.0
    %716 = vmatpush1.msra.mxu0 0.0
    %717 = vmatprep.subr.mxu0 0.0
    %718 = vmatpush1.msra.mxu0 0.0
    %719 = vmatprep.subr.mxu0 0.0
    %720 = vmatpush1.msra.mxu0 0.0
    %721 = vmatprep.mubr.f32.mxu0 0.0
    %722 = vmatmul.mubr.f32.gmra.mrb[0].mxu0 %v655
    %v723 = vpop.f32.mrb[0].mxu0
    %v724 = vadd.f32 0.0, %v723
    %v725 = vpop.f32.mrb[0].mxu0
    %726 = vdwg.mxu0
    %v727 = vadd.f32 %v653, %v724
    %v728 = vtanh.pop %v727
    %s729 = scalar_lea.vmem %s1, 4
    %v730 = vld [vmem:[%s729] sm:$0x3]
    %v732 = vsel %vm37, %v651, 0
    %734 = vmatprep.subr.mxu0 0.0
    %735 = vmatpush1.msra.mxu0 %v26
    %736 = vmatprep.subr.mxu0 0.0
    %737 = vmatpush1.msra.mxu0 %v27
    %738 = vmatprep.subr.mxu0 0.0
    %739 = vmatpush1.msra.mxu0 %v28
    %740 = vmatprep.subr.mxu0 0.0
    %741 = vmatpush1.msra.mxu0 %v29
    %742 = vmatprep.subr.mxu0 0.0
    %743 = vmatpush1.msra.mxu0 0.0
    %744 = vmatprep.subr.mxu0 0.0
    %745 = vmatpush1.msra.mxu0 0.0
    %746 = vmatprep.subr.mxu0 0.0
    %747 = vmatpush1.msra.mxu0 0.0
    %748 = vmatprep.subr.mxu0 0.0
    %749 = vmatpush1.msra.mxu0 0.0
    %750 = vmatprep.subr.mxu0 0.0
    %751 = vmatpush1.msra.mxu0 0.0
    %752 = vmatprep.subr.mxu0 0.0
    %753 = vmatpush1.msra.mxu0 0.0
    %754 = vmatprep.subr.mxu0 0.0
    %755 = vmatpush1.msra.mxu0 0.0
    %756 = vmatprep.subr.mxu0 0.0
    %757 = vmatpush1.msra.mxu0 0.0
    %758 = vmatprep.subr.mxu0 0.0
    %759 = vmatpush1.msra.mxu0 0.0
    %760 = vmatprep.subr.mxu0 0.0
    %761 = vmatpush1.msra.mxu0 0.0
    %762 = vmatprep.subr.mxu0 0.0
    %763 = vmatpush1.msra.mxu0 0.0
    %764 = vmatprep.subr.mxu0 0.0
    %765 = vmatpush1.msra.mxu0 0.0
    %766 = vmatprep.subr.mxu0 0.0
    %767 = vmatpush1.msra.mxu0 0.0
    %768 = vmatprep.subr.mxu0 0.0
    %769 = vmatpush1.msra.mxu0 0.0
    %770 = vmatprep.subr.mxu0 0.0
    %771 = vmatpush1.msra.mxu0 0.0
    %772 = vmatprep.subr.mxu0 0.0
    %773 = vmatpush1.msra.mxu0 0.0
    %774 = vmatprep.subr.mxu0 0.0
    %775 = vmatpush1.msra.mxu0 0.0
    %776 = vmatprep.subr.mxu0 0.0
    %777 = vmatpush1.msra.mxu0 0.0
    %778 = vmatprep.subr.mxu0 0.0
    %779 = vmatpush1.msra.mxu0 0.0
    %780 = vmatprep.subr.mxu0 0.0
    %781 = vmatpush1.msra.mxu0 0.0
    %782 = vmatprep.subr.mxu0 0.0
    %783 = vmatpush1.msra.mxu0 0.0
    %784 = vmatprep.subr.mxu0 0.0
    %785 = vmatpush1.msra.mxu0 0.0
    %786 = vmatprep.subr.mxu0 0.0
    %787 = vmatpush1.msra.mxu0 0.0
    %788 = vmatprep.subr.mxu0 0.0
    %789 = vmatpush1.msra.mxu0 0.0
    %790 = vmatprep.subr.mxu0 0.0
    %791 = vmatpush1.msra.mxu0 0.0
    %792 = vmatprep.subr.mxu0 0.0
    %793 = vmatpush1.msra.mxu0 0.0
    %794 = vmatprep.subr.mxu0 0.0
    %795 = vmatpush1.msra.mxu0 0.0
    %796 = vmatprep.subr.mxu0 0.0
    %797 = vmatpush1.msra.mxu0 0.0
    %798 = vmatprep.mubr.f32.mxu0 0.0
    %799 = vmatmul.mubr.f32.gmra.mrb[0].mxu0 %v732
    %v800 = vpop.f32.mrb[0].mxu0
    %v801 = vadd.f32 0.0, %v800
    %v802 = vpop.f32.mrb[0].mxu0
    %803 = vdwg.mxu0
    %v804 = vadd.f32 %v730, %v801
    %v805 = vtanh.pop %v804
    %s806 = scalar_lea.vmem %s0, 12
    %v807 = vld [vmem:[%s806] sm:$0x3]
    %v809 = vsel %vm37, %v728, 0
    %811 = vmatprep.subr.mxu0 0.0
    %812 = vmatpush1.msra.mxu0 %v21
    %813 = vmatprep.subr.mxu0 0.0
    %814 = vmatpush1.msra.mxu0 %v22
    %815 = vmatprep.subr.mxu0 0.0
    %816 = vmatpush1.msra.mxu0 %v23
    %817 = vmatprep.subr.mxu0 0.0
    %818 = vmatpush1.msra.mxu0 %v24
    %819 = vmatprep.subr.mxu0 0.0
    %820 = vmatpush1.msra.mxu0 0.0
    %821 = vmatprep.subr.mxu0 0.0
    %822 = vmatpush1.msra.mxu0 0.0
    %823 = vmatprep.subr.mxu0 0.0
    %824 = vmatpush1.msra.mxu0 0.0
    %825 = vmatprep.subr.mxu0 0.0
    %826 = vmatpush1.msra.mxu0 0.0
    %827 = vmatprep.subr.mxu0 0.0
    %828 = vmatpush1.msra.mxu0 0.0
    %829 = vmatprep.subr.mxu0 0.0
    %830 = vmatpush1.msra.mxu0 0.0
    %831 = vmatprep.subr.mxu0 0.0
    %832 = vmatpush1.msra.mxu0 0.0
    %833 = vmatprep.subr.mxu0 0.0
    %834 = vmatpush1.msra.mxu0 0.0
    %835 = vmatprep.subr.mxu0 0.0
    %836 = vmatpush1.msra.mxu0 0.0
    %837 = vmatprep.subr.mxu0 0.0
    %838 = vmatpush1.msra.mxu0 0.0
    %839 = vmatprep.subr.mxu0 0.0
    %840 = vmatpush1.msra.mxu0 0.0
    %841 = vmatprep.subr.mxu0 0.0
    %842 = vmatpush1.msra.mxu0 0.0
    %843 = vmatprep.subr.mxu0 0.0
    %844 = vmatpush1.msra.mxu0 0.0
    %845 = vmatprep.subr.mxu0 0.0
    %846 = vmatpush1.msra.mxu0 0.0
    %847 = vmatprep.subr.mxu0 0.0
    %848 = vmatpush1.msra.mxu0 0.0
    %849 = vmatprep.subr.mxu0 0.0
    %850 = vmatpush1.msra.mxu0 0.0
    %851 = vmatprep.subr.mxu0 0.0
    %852 = vmatpush1.msra.mxu0 0.0
    %853 = vmatprep.subr.mxu0 0.0
    %854 = vmatpush1.msra.mxu0 0.0
    %855 = vmatprep.subr.mxu0 0.0
    %856 = vmatpush1.msra.mxu0 0.0
    %857 = vmatprep.subr.mxu0 0.0
    %858 = vmatpush1.msra.mxu0 0.0
    %859 = vmatprep.subr.mxu0 0.0
    %860 = vmatpush1.msra.mxu0 0.0
    %861 = vmatprep.subr.mxu0 0.0
    %862 = vmatpush1.msra.mxu0 0.0
    %863 = vmatprep.subr.mxu0 0.0
    %864 = vmatpush1.msra.mxu0 0.0
    %865 = vmatprep.subr.mxu0 0.0
    %866 = vmatpush1.msra.mxu0 0.0
    %867 = vmatprep.subr.mxu0 0.0
    %868 = vmatpush1.msra.mxu0 0.0
    %869 = vmatprep.subr.mxu0 0.0
    %870 = vmatpush1.msra.mxu0 0.0
    %871 = vmatprep.subr.mxu0 0.0
    %872 = vmatpush1.msra.mxu0 0.0
    %873 = vmatprep.subr.mxu0 0.0
    %874 = vmatpush1.msra.mxu0 0.0
    %875 = vmatprep.mubr.f32.mxu0 0.0
    %876 = vmatmul.mubr.f32.gmra.mrb[0].mxu0 %v809
    %v877 = vpop.f32.mrb[0].mxu0
    %v878 = vadd.f32 0.0, %v877
    %v879 = vpop.f32.mrb[0].mxu0
    %880 = vdwg.mxu0
    %v881 = vadd.f32 %v807, %v878
    %v882 = vtanh.pop %v881
    %s883 = scalar_lea.vmem %s1, 2
    %v884 = vld [vmem:[%s883] sm:$0x3]
    %v886 = vsel %vm37, %v805, 0
    %888 = vmatprep.subr.mxu0 0.0
    %889 = vmatpush1.msra.mxu0 %v26
    %890 = vmatprep.subr.mxu0 0.0
    %891 = vmatpush1.msra.mxu0 %v27
    %892 = vmatprep.subr.mxu0 0.0
    %893 = vmatpush1.msra.mxu0 %v28
    %894 = vmatprep.subr.mxu0 0.0
    %895 = vmatpush1.msra.mxu0 %v29
    %896 = vmatprep.subr.mxu0 0.0
    %897 = vmatpush1.msra.mxu0 0.0
    %898 = vmatprep.subr.mxu0 0.0
    %899 = vmatpush1.msra.mxu0 0.0
    %900 = vmatprep.subr.mxu0 0.0
    %901 = vmatpush1.msra.mxu0 0.0
    %902 = vmatprep.subr.mxu0 0.0
    %903 = vmatpush1.msra.mxu0 0.0
    %904 = vmatprep.subr.mxu0 0.0
    %905 = vmatpush1.msra.mxu0 0.0
    %906 = vmatprep.subr.mxu0 0.0
    %907 = vmatpush1.msra.mxu0 0.0
    %908 = vmatprep.subr.mxu0 0.0
    %909 = vmatpush1.msra.mxu0 0.0
    %910 = vmatprep.subr.mxu0 0.0
    %911 = vmatpush1.msra.mxu0 0.0
    %912 = vmatprep.subr.mxu0 0.0
    %913 = vmatpush1.msra.mxu0 0.0
    %914 = vmatprep.subr.mxu0 0.0
    %915 = vmatpush1.msra.mxu0 0.0
    %916 = vmatprep.subr.mxu0 0.0
    %917 = vmatpush1.msra.mxu0 0.0
    %918 = vmatprep.subr.mxu0 0.0
    %919 = vmatpush1.msra.mxu0 0.0
    %920 = vmatprep.subr.mxu0 0.0
    %921 = vmatpush1.msra.mxu0 0.0
    %922 = vmatprep.subr.mxu0 0.0
    %923 = vmatpush1.msra.mxu0 0.0
    %924 = vmatprep.subr.mxu0 0.0
    %925 = vmatpush1.msra.mxu0 0.0
    %926 = vmatprep.subr.mxu0 0.0
    %927 = vmatpush1.msra.mxu0 0.0
    %928 = vmatprep.subr.mxu0 0.0
    %929 = vmatpush1.msra.mxu0 0.0
    %930 = vmatprep.subr.mxu0 0.0
    %931 = vmatpush1.msra.mxu0 0.0
    %932 = vmatprep.subr.mxu0 0.0
    %933 = vmatpush1.msra.mxu0 0.0
    %934 = vmatprep.subr.mxu0 0.0
    %935 = vmatpush1.msra.mxu0 0.0
    %936 = vmatprep.subr.mxu0 0.0
    %937 = vmatpush1.msra.mxu0 0.0
    %938 = vmatprep.subr.mxu0 0.0
    %939 = vmatpush1.msra.mxu0 0.0
    %940 = vmatprep.subr.mxu0 0.0
    %941 = vmatpush1.msra.mxu0 0.0
    %942 = vmatprep.subr.mxu0 0.0
    %943 = vmatpush1.msra.mxu0 0.0
    %944 = vmatprep.subr.mxu0 0.0
    %945 = vmatpush1.msra.mxu0 0.0
    %946 = vmatprep.subr.mxu0 0.0
    %947 = vmatpush1.msra.mxu0 0.0
    %948 = vmatprep.subr.mxu0 0.0
    %949 = vmatpush1.msra.mxu0 0.0
    %950 = vmatprep.subr.mxu0 0.0
    %951 = vmatpush1.msra.mxu0 0.0
    %952 = vmatprep.mubr.f32.mxu0 0.0
    %953 = vmatmul.mubr.f32.gmra.mrb[0].mxu0 %v886
    %v954 = vpop.f32.mrb[0].mxu0
    %v955 = vadd.f32 0.0, %v954
    %v956 = vpop.f32.mrb[0].mxu0
    %957 = vdwg.mxu0
    %v958 = vadd.f32 %v884, %v955
    %v959 = vtanh.pop %v958
    %s960 = scalar_lea.vmem %s0, 14
    %v961 = vld [vmem:[%s960] sm:$0x3]
    %v963 = vsel %vm37, %v882, 0
    %965 = vmatprep.subr.mxu0 0.0
    %966 = vmatpush1.msra.mxu0 %v21
    %967 = vmatprep.subr.mxu0 0.0
    %968 = vmatpush1.msra.mxu0 %v22
    %969 = vmatprep.subr.mxu0 0.0
    %970 = vmatpush1.msra.mxu0 %v23
    %971 = vmatprep.subr.mxu0 0.0
    %972 = vmatpush1.msra.mxu0 %v24
    %973 = vmatprep.subr.mxu0 0.0
    %974 = vmatpush1.msra.mxu0 0.0
    %975 = vmatprep.subr.mxu0 0.0
    %976 = vmatpush1.msra.mxu0 0.0
    %977 = vmatprep.subr.mxu0 0.0
    %978 = vmatpush1.msra.mxu0 0.0
    %979 = vmatprep.subr.mxu0 0.0
    %980 = vmatpush1.msra.mxu0 0.0
    %981 = vmatprep.subr.mxu0 0.0
    %982 = vmatpush1.msra.mxu0 0.0
    %983 = vmatprep.subr.mxu0 0.0
    %984 = vmatpush1.msra.mxu0 0.0
    %985 = vmatprep.subr.mxu0 0.0
    %986 = vmatpush1.msra.mxu0 0.0
    %987 = vmatprep.subr.mxu0 0.0
    %988 = vmatpush1.msra.mxu0 0.0
    %989 = vmatprep.subr.mxu0 0.0
    %990 = vmatpush1.msra.mxu0 0.0
    %991 = vmatprep.subr.mxu0 0.0
    %992 = vmatpush1.msra.mxu0 0.0
    %993 = vmatprep.subr.mxu0 0.0
    %994 = vmatpush1.msra.mxu0 0.0
    %995 = vmatprep.subr.mxu0 0.0
    %996 = vmatpush1.msra.mxu0 0.0
    %997 = vmatprep.subr.mxu0 0.0
    %998 = vmatpush1.msra.mxu0 0.0
    %999 = vmatprep.subr.mxu0 0.0
    %1000 = vmatpush1.msra.mxu0 0.0
    %1001 = vmatprep.subr.mxu0 0.0
    %1002 = vmatpush1.msra.mxu0 0.0
    %1003 = vmatprep.subr.mxu0 0.0
    %1004 = vmatpush1.msra.mxu0 0.0
    %1005 = vmatprep.subr.mxu0 0.0
    %1006 = vmatpush1.msra.mxu0 0.0
    %1007 = vmatprep.subr.mxu0 0.0
    %1008 = vmatpush1.msra.mxu0 0.0
    %1009 = vmatprep.subr.mxu0 0.0
    %1010 = vmatpush1.msra.mxu0 0.0
    %1011 = vmatprep.subr.mxu0 0.0
    %1012 = vmatpush1.msra.mxu0 0.0
    %1013 = vmatprep.subr.mxu0 0.0
    %1014 = vmatpush1.msra.mxu0 0.0
    %1015 = vmatprep.subr.mxu0 0.0
    %1016 = vmatpush1.msra.mxu0 0.0
    %1017 = vmatprep.subr.mxu0 0.0
    %1018 = vmatpush1.msra.mxu0 0.0
    %1019 = vmatprep.subr.mxu0 0.0
    %1020 = vmatpush1.msra.mxu0 0.0
    %1021 = vmatprep.subr.mxu0 0.0
    %1022 = vmatpush1.msra.mxu0 0.0
    %1023 = vmatprep.subr.mxu0 0.0
    %1024 = vmatpush1.msra.mxu0 0.0
    %1025 = vmatprep.subr.mxu0 0.0
    %1026 = vmatpush1.msra.mxu0 0.0
    %1027 = vmatprep.subr.mxu0 0.0
    %1028 = vmatpush1.msra.mxu0 0.0
    %1029 = vmatprep.mubr.f32.mxu0 0.0
    %1030 = vmatmul.mubr.f32.gmra.mrb[0].mxu0 %v963
    %v1031 = vpop.f32.mrb[0].mxu0
    %v1032 = vadd.f32 0.0, %v1031
    %v1033 = vpop.f32.mrb[0].mxu0
    %1034 = vdwg.mxu0
    %v1035 = vadd.f32 %v961, %v1032
    %v1036 = vtanh.pop %v1035
    %v1037 = vld [vmem:[%s1] sm:$0x3]
    %v1039 = vsel %vm37, %v959, 0
    %1041 = vmatprep.subr.mxu0 0.0
    %1042 = vmatpush1.msra.mxu0 %v26
    %1043 = vmatprep.subr.mxu0 0.0
    %1044 = vmatpush1.msra.mxu0 %v27
    %1045 = vmatprep.subr.mxu0 0.0
    %1046 = vmatpush1.msra.mxu0 %v28
    %1047 = vmatprep.subr.mxu0 0.0
    %1048 = vmatpush1.msra.mxu0 %v29
    %1049 = vmatprep.subr.mxu0 0.0
    %1050 = vmatpush1.msra.mxu0 0.0
    %1051 = vmatprep.subr.mxu0 0.0
    %1052 = vmatpush1.msra.mxu0 0.0
    %1053 = vmatprep.subr.mxu0 0.0
    %1054 = vmatpush1.msra.mxu0 0.0
    %1055 = vmatprep.subr.mxu0 0.0
    %1056 = vmatpush1.msra.mxu0 0.0
    %1057 = vmatprep.subr.mxu0 0.0
    %1058 = vmatpush1.msra.mxu0 0.0
    %1059 = vmatprep.subr.mxu0 0.0
    %1060 = vmatpush1.msra.mxu0 0.0
    %1061 = vmatprep.subr.mxu0 0.0
    %1062 = vmatpush1.msra.mxu0 0.0
    %1063 = vmatprep.subr.mxu0 0.0
    %1064 = vmatpush1.msra.mxu0 0.0
    %1065 = vmatprep.subr.mxu0 0.0
    %1066 = vmatpush1.msra.mxu0 0.0
    %1067 = vmatprep.subr.mxu0 0.0
    %1068 = vmatpush1.msra.mxu0 0.0
    %1069 = vmatprep.subr.mxu0 0.0
    %1070 = vmatpush1.msra.mxu0 0.0
    %1071 = vmatprep.subr.mxu0 0.0
    %1072 = vmatpush1.msra.mxu0 0.0
    %1073 = vmatprep.subr.mxu0 0.0
    %1074 = vmatpush1.msra.mxu0 0.0
    %1075 = vmatprep.subr.mxu0 0.0
    %1076 = vmatpush1.msra.mxu0 0.0
    %1077 = vmatprep.subr.mxu0 0.0
    %1078 = vmatpush1.msra.mxu0 0.0
    %1079 = vmatprep.subr.mxu0 0.0
    %1080 = vmatpush1.msra.mxu0 0.0
    %1081 = vmatprep.subr.mxu0 0.0
    %1082 = vmatpush1.msra.mxu0 0.0
    %1083 = vmatprep.subr.mxu0 0.0
    %1084 = vmatpush1.msra.mxu0 0.0
    %1085 = vmatprep.subr.mxu0 0.0
    %1086 = vmatpush1.msra.mxu0 0.0
    %1087 = vmatprep.subr.mxu0 0.0
    %1088 = vmatpush1.msra.mxu0 0.0
    %1089 = vmatprep.subr.mxu0 0.0
    %1090 = vmatpush1.msra.mxu0 0.0
    %1091 = vmatprep.subr.mxu0 0.0
    %1092 = vmatpush1.msra.mxu0 0.0
    %1093 = vmatprep.subr.mxu0 0.0
    %1094 = vmatpush1.msra.mxu0 0.0
    %1095 = vmatprep.subr.mxu0 0.0
    %1096 = vmatpush1.msra.mxu0 0.0
    %1097 = vmatprep.subr.mxu0 0.0
    %1098 = vmatpush1.msra.mxu0 0.0
    %1099 = vmatprep.subr.mxu0 0.0
    %1100 = vmatpush1.msra.mxu0 0.0
    %1101 = vmatprep.subr.mxu0 0.0
    %1102 = vmatpush1.msra.mxu0 0.0
    %1103 = vmatprep.subr.mxu0 0.0
    %1104 = vmatpush1.msra.mxu0 0.0
    %1105 = vmatprep.mubr.f32.mxu0 0.0
    %1106 = vmatmul.mubr.f32.gmra.mrb[0].mxu0 %v1039
    %v1107 = vpop.f32.mrb[0].mxu0
    %v1108 = vadd.f32 0.0, %v1107
    %v1109 = vpop.f32.mrb[0].mxu0
    %1110 = vdwg.mxu0
    %v1111 = vadd.f32 %v1037, %v1108
    %v1112 = vtanh.pop %v1111
    %v1113 = vld [vmem:[%s3] sm:$0xff]
    %v1114 = vld [vmem:[%s3 + $0x8] sm:$0xff]
    %v1115 = vld [vmem:[%s3 + $0x10] sm:$0xff]
    %v1116 = vld [vmem:[%s3 + $0x18] sm:$0xff]
    %s1117 = scalar_lea.vmem %s3, 32
    %v1118 = vld [vmem:[%s1117] sm:$0xff]
    %v1119 = vld [vmem:[%s1117 + $0x8] sm:$0xff]
    %v1120 = vld [vmem:[%s1117 + $0x10] sm:$0xff]
    %v1121 = vld [vmem:[%s1117 + $0x18] sm:$0xff]
    %v1123 = vsel %vm37, %v1112, 0
    %1125 = vmatprep.subr.mxu0 0.0
    %1126 = vmatpush1.msra.mxu0 %v1118
    %1127 = vmatprep.subr.mxu0 0.0
    %1128 = vmatpush1.msra.mxu0 %v1119
    %1129 = vmatprep.subr.mxu0 0.0
    %1130 = vmatpush1.msra.mxu0 %v1120
    %1131 = vmatprep.subr.mxu0 0.0
    %1132 = vmatpush1.msra.mxu0 %v1121
    %1133 = vmatprep.subr.mxu0 0.0
    %1134 = vmatpush1.msra.mxu0 0.0
    %1135 = vmatprep.subr.mxu0 0.0
    %1136 = vmatpush1.msra.mxu0 0.0
    %1137 = vmatprep.subr.mxu0 0.0
    %1138 = vmatpush1.msra.mxu0 0.0
    %1139 = vmatprep.subr.mxu0 0.0
    %1140 = vmatpush1.msra.mxu0 0.0
    %1141 = vmatprep.subr.mxu0 0.0
    %1142 = vmatpush1.msra.mxu0 0.0
    %1143 = vmatprep.subr.mxu0 0.0
    %1144 = vmatpush1.msra.mxu0 0.0
    %1145 = vmatprep.subr.mxu0 0.0
    %1146 = vmatpush1.msra.mxu0 0.0
    %1147 = vmatprep.subr.mxu0 0.0
    %1148 = vmatpush1.msra.mxu0 0.0
    %1149 = vmatprep.subr.mxu0 0.0
    %1150 = vmatpush1.msra.mxu0 0.0
    %1151 = vmatprep.subr.mxu0 0.0
    %1152 = vmatpush1.msra.mxu0 0.0
    %1153 = vmatprep.subr.mxu0 0.0
    %1154 = vmatpush1.msra.mxu0 0.0
    %1155 = vmatprep.subr.mxu0 0.0
    %1156 = vmatpush1.msra.mxu0 0.0
    %1157 = vmatprep.subr.mxu0 0.0
    %1158 = vmatpush1.msra.mxu0 0.0
    %1159 = vmatprep.subr.mxu0 0.0
    %1160 = vmatpush1.msra.mxu0 0.0
    %1161 = vmatprep.subr.mxu0 0.0
    %1162 = vmatpush1.msra.mxu0 0.0
    %1163 = vmatprep.subr.mxu0 0.0
    %1164 = vmatpush1.msra.mxu0 0.0
    %1165 = vmatprep.subr.mxu0 0.0
    %1166 = vmatpush1.msra.mxu0 0.0
    %1167 = vmatprep.subr.mxu0 0.0
    %1168 = vmatpush1.msra.mxu0 0.0
    %1169 = vmatprep.subr.mxu0 0.0
    %1170 = vmatpush1.msra.mxu0 0.0
    %1171 = vmatprep.subr.mxu0 0.0
    %1172 = vmatpush1.msra.mxu0 0.0
    %1173 = vmatprep.subr.mxu0 0.0
    %1174 = vmatpush1.msra.mxu0 0.0
    %1175 = vmatprep.subr.mxu0 0.0
    %1176 = vmatpush1.msra.mxu0 0.0
    %1177 = vmatprep.subr.mxu0 0.0
    %1178 = vmatpush1.msra.mxu0 0.0
    %1179 = vmatprep.subr.mxu0 0.0
    %1180 = vmatpush1.msra.mxu0 0.0
    %1181 = vmatprep.subr.mxu0 0.0
    %1182 = vmatpush1.msra.mxu0 0.0
    %1183 = vmatprep.subr.mxu0 0.0
    %1184 = vmatpush1.msra.mxu0 0.0
    %1185 = vmatprep.subr.mxu0 0.0
    %1186 = vmatpush1.msra.mxu0 0.0
    %1187 = vmatprep.subr.mxu0 0.0
    %1188 = vmatpush1.msra.mxu0 0.0
    %1189 = vmatprep.mubr.f32.mxu0 0.0
    %1190 = vmatmul.mubr.f32.gmra.mrb[0].mxu0 %v1123
    %v1191 = vpop.f32.mrb[0].mxu0
    %v1192 = vadd.f32 0.0, %v1191
    %v1193 = vpop.f32.mrb[0].mxu0
    %1194 = vdwg.mxu0
    %v1196 = vsel %vm37, %v1036, 0
    %1198 = vmatprep.subr.mxu0 0.0
    %1199 = vmatpush1.msra.mxu0 %v1113
    %1200 = vmatprep.subr.mxu0 0.0
    %1201 = vmatpush1.msra.mxu0 %v1114
    %1202 = vmatprep.subr.mxu0 0.0
    %1203 = vmatpush1.msra.mxu0 %v1115
    %1204 = vmatprep.subr.mxu0 0.0
    %1205 = vmatpush1.msra.mxu0 %v1116
    %1206 = vmatprep.subr.mxu0 0.0
    %1207 = vmatpush1.msra.mxu0 0.0
    %1208 = vmatprep.subr.mxu0 0.0
    %1209 = vmatpush1.msra.mxu0 0.0
    %1210 = vmatprep.subr.mxu0 0.0
    %1211 = vmatpush1.msra.mxu0 0.0
    %1212 = vmatprep.subr.mxu0 0.0
    %1213 = vmatpush1.msra.mxu0 0.0
    %1214 = vmatprep.subr.mxu0 0.0
    %1215 = vmatpush1.msra.mxu0 0.0
    %1216 = vmatprep.subr.mxu0 0.0
    %1217 = vmatpush1.msra.mxu0 0.0
    %1218 = vmatprep.subr.mxu0 0.0
    %1219 = vmatpush1.msra.mxu0 0.0
    %1220 = vmatprep.subr.mxu0 0.0
    %1221 = vmatpush1.msra.mxu0 0.0
    %1222 = vmatprep.subr.mxu0 0.0
    %1223 = vmatpush1.msra.mxu0 0.0
    %1224 = vmatprep.subr.mxu0 0.0
    %1225 = vmatpush1.msra.mxu0 0.0
    %1226 = vmatprep.subr.mxu0 0.0
    %1227 = vmatpush1.msra.mxu0 0.0
    %1228 = vmatprep.subr.mxu0 0.0
    %1229 = vmatpush1.msra.mxu0 0.0
    %1230 = vmatprep.subr.mxu0 0.0
    %1231 = vmatpush1.msra.mxu0 0.0
    %1232 = vmatprep.subr.mxu0 0.0
    %1233 = vmatpush1.msra.mxu0 0.0
    %1234 = vmatprep.subr.mxu0 0.0
    %1235 = vmatpush1.msra.mxu0 0.0
    %1236 = vmatprep.subr.mxu0 0.0
    %1237 = vmatpush1.msra.mxu0 0.0
    %1238 = vmatprep.subr.mxu0 0.0
    %1239 = vmatpush1.msra.mxu0 0.0
    %1240 = vmatprep.subr.mxu0 0.0
    %1241 = vmatpush1.msra.mxu0 0.0
    %1242 = vmatprep.subr.mxu0 0.0
    %1243 = vmatpush1.msra.mxu0 0.0
    %1244 = vmatprep.subr.mxu0 0.0
    %1245 = vmatpush1.msra.mxu0 0.0
    %1246 = vmatprep.subr.mxu0 0.0
    %1247 = vmatpush1.msra.mxu0 0.0
    %1248 = vmatprep.subr.mxu0 0.0
    %1249 = vmatpush1.msra.mxu0 0.0
    %1250 = vmatprep.subr.mxu0 0.0
    %1251 = vmatpush1.msra.mxu0 0.0
    %1252 = vmatprep.subr.mxu0 0.0
    %1253 = vmatpush1.msra.mxu0 0.0
    %1254 = vmatprep.subr.mxu0 0.0
    %1255 = vmatpush1.msra.mxu0 0.0
    %1256 = vmatprep.subr.mxu0 0.0
    %1257 = vmatpush1.msra.mxu0 0.0
    %1258 = vmatprep.subr.mxu0 0.0
    %1259 = vmatpush1.msra.mxu0 0.0
    %1260 = vmatprep.subr.mxu0 0.0
    %1261 = vmatpush1.msra.mxu0 0.0
    %1262 = vmatprep.mubr.f32.mxu0 0.0
    %1263 = vmatmul.mubr.f32.gmra.mrb[0].mxu0 %v1196
    %v1264 = vpop.f32.mrb[0].mxu0
    %v1265 = vadd.f32 %v1192, %v1264
    %v1266 = vpop.f32.mrb[0].mxu0
    %1267 = vdwg.mxu0
    %v1268 = vld [vmem:[%s4] sm:$0x1]
    %v1270 = vlaneseq
    %v1271 = vshrl.u32 %v1270, 7
    %v1272 = vsub.s32 0, %v1271
    %v1273 = vrot.slane %v1268, %v1272
    %v1275 = vadd.f32 %v1265, %v1273
    %vm1276 = vcmask 25600
    %1277 = vst.msk [vmem:[#allocation2] sm:$0x3] %vm1276, %v1275
    // Predicated region
    $region22: #{rnn_forward.7} parent=1 // pred_check
      _
    $region23: #{rnn_forward.7} parent=1 // pred_check_branch
      %1279 = sbr.rel (0) target = $region25
    $region24: #{rnn_forward.7} parent=1 // pred_region
      %s1281 = ssub.s32 32, 32
      %1282 = vsyncadd [#allocation3], %s1281
      %s1284 = sshll.u32 [#allocation2], 4
      %s1285 = int_to_ptr.vmem [resolvable:$true] %s1284
      %1287 = dma.vmem_to_hbm [thread:$0]  %s1285, 32, %s5, [#allocation3]
    $region25: #{rnn_forward.7} parent=1 // pred_fallthru
      _
    // Predicated region
    $region26: #{rnn_forward.7} parent=1 // pred_check
      _
    $region27: #{rnn_forward.7} parent=1 // pred_check_branch
      %1289 = sbr.rel (0) target = $region29
    $region28: #{rnn_forward.7} parent=1 // pred_region
      %1290 = dma.done [#allocation3], 32
    $region29: #{rnn_forward.7} parent=1 // pred_fallthru
      _
    %1291 = vsyncpa [#allocation3], 1

</llo_original>
